<compile_context>
chip_gen: v6e
topology: v6e:2x2x1
jax: 0.10.0
libtpu: 0.0.40
codegen_flags: <defaults>
</compile_context>

<pallas_src>
import functools

import jax
import jax.numpy as jnp
from jax.experimental import pallas as pl
from jax.experimental.pallas import tpu as pltpu


def _fused_disc_kernel(x_ref, mask_ref, *refs, H, W, n_layers):
    # x_ref    : (1, C0, H, W)          one NCHW image
    # mask_ref : (1, L) f32             1.0 on interior pixels, 0.0 on halo
    # refs     : w1, b1, ..., wN, bN, o_ref, stage_ref
    #   wL        : (CoutL, 9*CinL) f32  repacked conv weight (kh,kw,cin order)
    #   bL        : (CoutL, 1) f32       bias (broadcasts over lanes)
    #   o_ref     : (1, 1, L)            padded-flat classifier output
    #   stage_ref : (C0, L) f32 VMEM     staging buffer for the padded input
    o_ref = refs[2 * n_layers]
    stage_ref = refs[2 * n_layers + 1]

    Hp, Wp = H + 2, W + 2
    L = Hp * Wp
    S = Wp + 1  # max |tap offset| in flat padded index space

    # ---- stage the input into zero-padded, flattened (C0, L) form ----------
    # (in-kernel halo handling; no HBM-side jnp.pad / extra input copy)
    stage_ref[...] = jnp.zeros_like(stage_ref)
    for i in range(H):  # one-time staging cost per image
        start = (i + 1) * Wp + 1
        stage_ref[:, start:start + W] = x_ref[0, :, i, :]
    act = stage_ref[...]  # (C0, L), halo columns/rows are exactly zero

    mask = mask_ref[...]  # (1, L)

    # Tap offsets (kh-major, kw-minor) matching the weight repack order.
    deltas = [(kh - 1) * Wp + (kw - 1) for kh in range(3) for kw in range(3)]

    for layer in range(n_layers):
        w = refs[2 * layer][...]        # (Cout, 9*Cin)
        b = refs[2 * layer + 1][...]    # (Cout, 1)
        cin = act.shape[0]

        # Zero-flanked copy so every tap is an in-bounds static lane slice
        # (shifted copy); out-of-image reads see zeros, as conv padding wants.
        flank = jnp.zeros((cin, S), jnp.float32)
        wide = jnp.concatenate([flank, act, flank], axis=1)  # (Cin, L + 2S)

        # im2col patch matrix: (9*Cin, L) -> single MXU matmul per layer.
        patches = jnp.concatenate(
            [wide[:, S + d:S + d + L] for d in deltas], axis=0)

        z = jnp.dot(w, patches, preferred_element_type=jnp.float32)  # (Cout, L)
        z = z + b
        if layer < n_layers - 1:
            z = jnp.where(z > 0, z, 0.2 * z)  # LeakyReLU(0.2)
        # Zero the halo / off-image columns so the padded-flat invariant
        # holds for the next layer.
        act = z * mask

    o_ref[0, :, :] = act  # (1, L) lane-dense store


def attention_discriminator_2d(x_nchw, params):
    """Forward pass matching the PyTorch module. x: (N, C, H, W) -> (N, 1, H, W)."""
    n, c0, h, w = x_nchw.shape
    hp, wp = h + 2, w + 2
    L = hp * wp
    n_layers = len(params)

    # Repack weights: HWIO (3,3,Cin,Cout) -> (Cout, 9*Cin) with column order
    # (kh, kw, cin) to match the kernel's tap ordering.  Bias -> (Cout, 1).
    flat_args = []
    in_specs = [
        pl.BlockSpec((1, c0, h, w), lambda i: (i, 0, 0, 0)),
        pl.BlockSpec((1, L), lambda i: (0, 0)),
    ]
    for (wt, bias) in params:
        cin, cout = wt.shape[2], wt.shape[3]
        wmat = wt.reshape(9 * cin, cout).T          # (Cout, 9*Cin)
        bcol = bias.reshape(cout, 1)                # (Cout, 1)
        flat_args += [wmat, bcol]
        in_specs += [
            pl.BlockSpec((cout, 9 * cin), lambda i: (0, 0)),
            pl.BlockSpec((cout, 1), lambda i: (0, 0)),
        ]

    # 0/1 interior mask in padded-flat layout (built once on the host).
    interior = jnp.zeros((hp, wp), jnp.float32).at[1:h + 1, 1:w + 1].set(1.0)
    mask = interior.reshape(1, L)

    kernel = functools.partial(_fused_disc_kernel, H=h, W=w, n_layers=n_layers)

    out_flat = pl.pallas_call(
        kernel,
        out_shape=jax.ShapeDtypeStruct((n, 1, L), x_nchw.dtype),
        grid=(n,),
        in_specs=in_specs,
        out_specs=pl.BlockSpec((1, 1, L), lambda i: (i, 0, 0)),
        scratch_shapes=[pltpu.VMEM((c0, L), jnp.float32)],
        compiler_params=pltpu.CompilerParams(
            dimension_semantics=("parallel",)),
    )(x_nchw, mask, *flat_args)

    # Crop the zero halo: padded-flat -> (N, 1, H, W) NCHW.
    return out_flat.reshape(n, 1, hp, wp)[:, :, 1:h + 1, 1:w + 1]


def init_params(key, num_classes, ndf):
    """Deterministic synthetic parameters (HWIO weights, per-layer biases)."""
    chans = [num_classes, ndf, ndf * 2, ndf * 4, ndf * 8, 1]
    params = []
    for li in range(5):
        cin, cout = chans[li], chans[li + 1]
        key, kw, kb = jax.random.split(key, 3)
        fan_in = cin * 3 * 3
        bound = 1.0 / jnp.sqrt(fan_in)
        w = jax.random.uniform(kw, (3, 3, cin, cout), jnp.float32, -bound, bound)
        b = jax.random.uniform(kb, (cout,), jnp.float32, -bound, bound)
        params.append((w, b))
    return params


def _reference(x_nchw, params):
    """Pure-JAX reference using lax.conv_general_dilated (for correctness check)."""
    x = jnp.transpose(x_nchw, (0, 2, 3, 1))
    for li, (w, b) in enumerate(params):
        x = jax.lax.conv_general_dilated(
            x, w, window_strides=(1, 1), padding="SAME",
            dimension_numbers=("NHWC", "HWIO", "NHWC"))
        x = x + b[None, None, None, :]
        if li != len(params) - 1:
            x = jnp.where(x > 0, x, 0.2 * x)
    return jnp.transpose(x, (0, 3, 1, 2))


if __name__ == "__main__":
    # Small, module-consistent shapes: batch=2, num_classes=4, ndf=8, spatial=16.
    N, NUM_CLASSES, NDF, H, W = 2, 4, 8, 16, 16

    key = jax.random.PRNGKey(0)
    key, kx = jax.random.split(key)
    x = jax.random.normal(kx, (N, NUM_CLASSES, H, W), jnp.float32)

    params = init_params(key, NUM_CLASSES, NDF)

    out = attention_discriminator_2d(x, params)
    out = jax.block_until_ready(out)
    assert out.shape == (N, 1, H, W), out.shape

    ref = _reference(x, params)
    assert jnp.allclose(out, ref, atol=1e-4, rtol=1e-4), "mismatch vs reference conv"

    print("KERNEL_OK")
</pallas_src>

<mosaic_0001>
module attributes {stable_mosaic.version = 11 : i64} {
  func.func @_fused_disc_kernel(%arg0: i32, %arg1: memref<1x4x16x16xf32, #tpu.memory_space<vmem>>, %arg2: memref<1x324xf32, #tpu.memory_space<vmem>>, %arg3: memref<8x36xf32, #tpu.memory_space<vmem>>, %arg4: memref<8x1xf32, #tpu.memory_space<vmem>>, %arg5: memref<16x72xf32, #tpu.memory_space<vmem>>, %arg6: memref<16x1xf32, #tpu.memory_space<vmem>>, %arg7: memref<32x144xf32, #tpu.memory_space<vmem>>, %arg8: memref<32x1xf32, #tpu.memory_space<vmem>>, %arg9: memref<64x288xf32, #tpu.memory_space<vmem>>, %arg10: memref<64x1xf32, #tpu.memory_space<vmem>>, %arg11: memref<1x576xf32, #tpu.memory_space<vmem>>, %arg12: memref<1x1xf32, #tpu.memory_space<vmem>>, %arg13: memref<1x1x324xf32, #tpu.memory_space<vmem>>, %arg14: memref<4x324xf32, #tpu.memory_space<vmem>>) attributes {dimension_semantics = [#tpu.dimension_semantics<parallel>], iteration_bounds = array<i64: 2>, scalar_prefetch = 0 : i64, scratch_operands = 1 : i64, tpu.core_type = #tpu.core_type<tc>, window_params = [{transform_indices = @transform_0, window_bounds = array<i64: 1, 4, 16, 16>}, {pipeline_mode = #tpu.pipeline_mode<synchronous>, transform_indices = @transform_1, window_bounds = array<i64: 1, 324>}, {pipeline_mode = #tpu.pipeline_mode<synchronous>, transform_indices = @transform_2, window_bounds = array<i64: 8, 36>}, {pipeline_mode = #tpu.pipeline_mode<synchronous>, transform_indices = @transform_3, window_bounds = array<i64: 8, 1>}, {pipeline_mode = #tpu.pipeline_mode<synchronous>, transform_indices = @transform_4, window_bounds = array<i64: 16, 72>}, {pipeline_mode = #tpu.pipeline_mode<synchronous>, transform_indices = @transform_5, window_bounds = array<i64: 16, 1>}, {pipeline_mode = #tpu.pipeline_mode<synchronous>, transform_indices = @transform_6, window_bounds = array<i64: 32, 144>}, {pipeline_mode = #tpu.pipeline_mode<synchronous>, transform_indices = @transform_7, window_bounds = array<i64: 32, 1>}, {pipeline_mode = #tpu.pipeline_mode<synchronous>, transform_indices = @transform_8, window_bounds = array<i64: 64, 288>}, {pipeline_mode = #tpu.pipeline_mode<synchronous>, transform_indices = @transform_9, window_bounds = array<i64: 64, 1>}, {pipeline_mode = #tpu.pipeline_mode<synchronous>, transform_indices = @transform_10, window_bounds = array<i64: 1, 576>}, {pipeline_mode = #tpu.pipeline_mode<synchronous>, transform_indices = @transform_11, window_bounds = array<i64: 1, 1>}, {transform_indices = @transform_12, window_bounds = array<i64: 1, 1, 324>}]} {
    %cst = arith.constant 0.000000e+00 : f32
    %0 = vector.broadcast %cst : f32 to vector<4x324xf32>
    %c0 = arith.constant 0 : index
    %c0_0 = arith.constant 0 : index
    %1 = vector.load %arg14[%c0, %c0_0] : memref<4x324xf32, #tpu.memory_space<vmem>>, vector<4x324xf32>
    tpu.vector_store %arg14[%c0, %c0_0], %0 {strides = array<i32>} : memref<4x324xf32, #tpu.memory_space<vmem>>, vector<4x324xf32>,
    %c0_1 = arith.constant 0 : index
    %c0_2 = arith.constant 0 : index
    %c0_3 = arith.constant 0 : index
    %c0_4 = arith.constant 0 : index
    %2 = vector.load %arg1[%c0_1, %c0_2, %c0_3, %c0_4] : memref<1x4x16x16xf32, #tpu.memory_space<vmem>>, vector<1x4x1x16xf32>
    %3 = vector.shape_cast %2 : vector<1x4x1x16xf32> to vector<4x16xf32>
    %c0_5 = arith.constant 0 : index
    %c19 = arith.constant 19 : index
    %4 = vector.load %arg14[%c0_5, %c19] : memref<4x324xf32, #tpu.memory_space<vmem>>, vector<4x16xf32>
    tpu.vector_store %arg14[%c0_5, %c19], %3 {strides = array<i32>} : memref<4x324xf32, #tpu.memory_space<vmem>>, vector<4x16xf32>,
    %c0_6 = arith.constant 0 : index
    %c0_7 = arith.constant 0 : index
    %c1 = arith.constant 1 : index
    %c0_8 = arith.constant 0 : index
    %5 = vector.load %arg1[%c0_6, %c0_7, %c1, %c0_8] : memref<1x4x16x16xf32, #tpu.memory_space<vmem>>, vector<1x4x1x16xf32>
    %6 = vector.shape_cast %5 : vector<1x4x1x16xf32> to vector<4x16xf32>
    %c0_9 = arith.constant 0 : index
    %c37 = arith.constant 37 : index
    %7 = vector.load %arg14[%c0_9, %c37] : memref<4x324xf32, #tpu.memory_space<vmem>>, vector<4x16xf32>
    tpu.vector_store %arg14[%c0_9, %c37], %6 {strides = array<i32>} : memref<4x324xf32, #tpu.memory_space<vmem>>, vector<4x16xf32>,
    %c0_10 = arith.constant 0 : index
    %c0_11 = arith.constant 0 : index
    %c2 = arith.constant 2 : index
    %c0_12 = arith.constant 0 : index
    %8 = vector.load %arg1[%c0_10, %c0_11, %c2, %c0_12] : memref<1x4x16x16xf32, #tpu.memory_space<vmem>>, vector<1x4x1x16xf32>
    %9 = vector.shape_cast %8 : vector<1x4x1x16xf32> to vector<4x16xf32>
    %c0_13 = arith.constant 0 : index
    %c55 = arith.constant 55 : index
    %10 = vector.load %arg14[%c0_13, %c55] : memref<4x324xf32, #tpu.memory_space<vmem>>, vector<4x16xf32>
    tpu.vector_store %arg14[%c0_13, %c55], %9 {strides = array<i32>} : memref<4x324xf32, #tpu.memory_space<vmem>>, vector<4x16xf32>,
    %c0_14 = arith.constant 0 : index
    %c0_15 = arith.constant 0 : index
    %c3 = arith.constant 3 : index
    %c0_16 = arith.constant 0 : index
    %11 = vector.load %arg1[%c0_14, %c0_15, %c3, %c0_16] : memref<1x4x16x16xf32, #tpu.memory_space<vmem>>, vector<1x4x1x16xf32>
    %12 = vector.shape_cast %11 : vector<1x4x1x16xf32> to vector<4x16xf32>
    %c0_17 = arith.constant 0 : index
    %c73 = arith.constant 73 : index
    %13 = vector.load %arg14[%c0_17, %c73] : memref<4x324xf32, #tpu.memory_space<vmem>>, vector<4x16xf32>
    tpu.vector_store %arg14[%c0_17, %c73], %12 {strides = array<i32>} : memref<4x324xf32, #tpu.memory_space<vmem>>, vector<4x16xf32>,
    %c0_18 = arith.constant 0 : index
    %c0_19 = arith.constant 0 : index
    %c4 = arith.constant 4 : index
    %c0_20 = arith.constant 0 : index
    %14 = vector.load %arg1[%c0_18, %c0_19, %c4, %c0_20] : memref<1x4x16x16xf32, #tpu.memory_space<vmem>>, vector<1x4x1x16xf32>
    %15 = vector.shape_cast %14 : vector<1x4x1x16xf32> to vector<4x16xf32>
    %c0_21 = arith.constant 0 : index
    %c91 = arith.constant 91 : index
    %16 = vector.load %arg14[%c0_21, %c91] : memref<4x324xf32, #tpu.memory_space<vmem>>, vector<4x16xf32>
    tpu.vector_store %arg14[%c0_21, %c91], %15 {strides = array<i32>} : memref<4x324xf32, #tpu.memory_space<vmem>>, vector<4x16xf32>,
    %c0_22 = arith.constant 0 : index
    %c0_23 = arith.constant 0 : index
    %c5 = arith.constant 5 : index
    %c0_24 = arith.constant 0 : index
    %17 = vector.load %arg1[%c0_22, %c0_23, %c5, %c0_24] : memref<1x4x16x16xf32, #tpu.memory_space<vmem>>, vector<1x4x1x16xf32>
    %18 = vector.shape_cast %17 : vector<1x4x1x16xf32> to vector<4x16xf32>
    %c0_25 = arith.constant 0 : index
    %c109 = arith.constant 109 : index
    %19 = vector.load %arg14[%c0_25, %c109] : memref<4x324xf32, #tpu.memory_space<vmem>>, vector<4x16xf32>
    tpu.vector_store %arg14[%c0_25, %c109], %18 {strides = array<i32>} : memref<4x324xf32, #tpu.memory_space<vmem>>, vector<4x16xf32>,
    %c0_26 = arith.constant 0 : index
    %c0_27 = arith.constant 0 : index
    %c6 = arith.constant 6 : index
    %c0_28 = arith.constant 0 : index
    %20 = vector.load %arg1[%c0_26, %c0_27, %c6, %c0_28] : memref<1x4x16x16xf32, #tpu.memory_space<vmem>>, vector<1x4x1x16xf32>
    %21 = vector.shape_cast %20 : vector<1x4x1x16xf32> to vector<4x16xf32>
    %c0_29 = arith.constant 0 : index
    %c127 = arith.constant 127 : index
    %22 = vector.load %arg14[%c0_29, %c127] : memref<4x324xf32, #tpu.memory_space<vmem>>, vector<4x16xf32>
    tpu.vector_store %arg14[%c0_29, %c127], %21 {strides = array<i32>} : memref<4x324xf32, #tpu.memory_space<vmem>>, vector<4x16xf32>,
    %c0_30 = arith.constant 0 : index
    %c0_31 = arith.constant 0 : index
    %c7 = arith.constant 7 : index
    %c0_32 = arith.constant 0 : index
    %23 = vector.load %arg1[%c0_30, %c0_31, %c7, %c0_32] : memref<1x4x16x16xf32, #tpu.memory_space<vmem>>, vector<1x4x1x16xf32>
    %24 = vector.shape_cast %23 : vector<1x4x1x16xf32> to vector<4x16xf32>
    %c0_33 = arith.constant 0 : index
    %c145 = arith.constant 145 : index
    %25 = vector.load %arg14[%c0_33, %c145] : memref<4x324xf32, #tpu.memory_space<vmem>>, vector<4x16xf32>
    tpu.vector_store %arg14[%c0_33, %c145], %24 {strides = array<i32>} : memref<4x324xf32, #tpu.memory_space<vmem>>, vector<4x16xf32>,
    %c0_34 = arith.constant 0 : index
    %c0_35 = arith.constant 0 : index
    %c8 = arith.constant 8 : index
    %c0_36 = arith.constant 0 : index
    %26 = vector.load %arg1[%c0_34, %c0_35, %c8, %c0_36] : memref<1x4x16x16xf32, #tpu.memory_space<vmem>>, vector<1x4x1x16xf32>
    %27 = vector.shape_cast %26 : vector<1x4x1x16xf32> to vector<4x16xf32>
    %c0_37 = arith.constant 0 : index
    %c163 = arith.constant 163 : index
    %28 = vector.load %arg14[%c0_37, %c163] : memref<4x324xf32, #tpu.memory_space<vmem>>, vector<4x16xf32>
    tpu.vector_store %arg14[%c0_37, %c163], %27 {strides = array<i32>} : memref<4x324xf32, #tpu.memory_space<vmem>>, vector<4x16xf32>,
    %c0_38 = arith.constant 0 : index
    %c0_39 = arith.constant 0 : index
    %c9 = arith.constant 9 : index
    %c0_40 = arith.constant 0 : index
    %29 = vector.load %arg1[%c0_38, %c0_39, %c9, %c0_40] : memref<1x4x16x16xf32, #tpu.memory_space<vmem>>, vector<1x4x1x16xf32>
    %30 = vector.shape_cast %29 : vector<1x4x1x16xf32> to vector<4x16xf32>
    %c0_41 = arith.constant 0 : index
    %c181 = arith.constant 181 : index
    %31 = vector.load %arg14[%c0_41, %c181] : memref<4x324xf32, #tpu.memory_space<vmem>>, vector<4x16xf32>
    tpu.vector_store %arg14[%c0_41, %c181], %30 {strides = array<i32>} : memref<4x324xf32, #tpu.memory_space<vmem>>, vector<4x16xf32>,
    %c0_42 = arith.constant 0 : index
    %c0_43 = arith.constant 0 : index
    %c10 = arith.constant 10 : index
    %c0_44 = arith.constant 0 : index
    %32 = vector.load %arg1[%c0_42, %c0_43, %c10, %c0_44] : memref<1x4x16x16xf32, #tpu.memory_space<vmem>>, vector<1x4x1x16xf32>
    %33 = vector.shape_cast %32 : vector<1x4x1x16xf32> to vector<4x16xf32>
    %c0_45 = arith.constant 0 : index
    %c199 = arith.constant 199 : index
    %34 = vector.load %arg14[%c0_45, %c199] : memref<4x324xf32, #tpu.memory_space<vmem>>, vector<4x16xf32>
    tpu.vector_store %arg14[%c0_45, %c199], %33 {strides = array<i32>} : memref<4x324xf32, #tpu.memory_space<vmem>>, vector<4x16xf32>,
    %c0_46 = arith.constant 0 : index
    %c0_47 = arith.constant 0 : index
    %c11 = arith.constant 11 : index
    %c0_48 = arith.constant 0 : index
    %35 = vector.load %arg1[%c0_46, %c0_47, %c11, %c0_48] : memref<1x4x16x16xf32, #tpu.memory_space<vmem>>, vector<1x4x1x16xf32>
    %36 = vector.shape_cast %35 : vector<1x4x1x16xf32> to vector<4x16xf32>
    %c0_49 = arith.constant 0 : index
    %c217 = arith.constant 217 : index
    %37 = vector.load %arg14[%c0_49, %c217] : memref<4x324xf32, #tpu.memory_space<vmem>>, vector<4x16xf32>
    tpu.vector_store %arg14[%c0_49, %c217], %36 {strides = array<i32>} : memref<4x324xf32, #tpu.memory_space<vmem>>, vector<4x16xf32>,
    %c0_50 = arith.constant 0 : index
    %c0_51 = arith.constant 0 : index
    %c12 = arith.constant 12 : index
    %c0_52 = arith.constant 0 : index
    %38 = vector.load %arg1[%c0_50, %c0_51, %c12, %c0_52] : memref<1x4x16x16xf32, #tpu.memory_space<vmem>>, vector<1x4x1x16xf32>
    %39 = vector.shape_cast %38 : vector<1x4x1x16xf32> to vector<4x16xf32>
    %c0_53 = arith.constant 0 : index
    %c235 = arith.constant 235 : index
    %40 = vector.load %arg14[%c0_53, %c235] : memref<4x324xf32, #tpu.memory_space<vmem>>, vector<4x16xf32>
    tpu.vector_store %arg14[%c0_53, %c235], %39 {strides = array<i32>} : memref<4x324xf32, #tpu.memory_space<vmem>>, vector<4x16xf32>,
    %c0_54 = arith.constant 0 : index
    %c0_55 = arith.constant 0 : index
    %c13 = arith.constant 13 : index
    %c0_56 = arith.constant 0 : index
    %41 = vector.load %arg1[%c0_54, %c0_55, %c13, %c0_56] : memref<1x4x16x16xf32, #tpu.memory_space<vmem>>, vector<1x4x1x16xf32>
    %42 = vector.shape_cast %41 : vector<1x4x1x16xf32> to vector<4x16xf32>
    %c0_57 = arith.constant 0 : index
    %c253 = arith.constant 253 : index
    %43 = vector.load %arg14[%c0_57, %c253] : memref<4x324xf32, #tpu.memory_space<vmem>>, vector<4x16xf32>
    tpu.vector_store %arg14[%c0_57, %c253], %42 {strides = array<i32>} : memref<4x324xf32, #tpu.memory_space<vmem>>, vector<4x16xf32>,
    %c0_58 = arith.constant 0 : index
    %c0_59 = arith.constant 0 : index
    %c14 = arith.constant 14 : index
    %c0_60 = arith.constant 0 : index
    %44 = vector.load %arg1[%c0_58, %c0_59, %c14, %c0_60] : memref<1x4x16x16xf32, #tpu.memory_space<vmem>>, vector<1x4x1x16xf32>
    %45 = vector.shape_cast %44 : vector<1x4x1x16xf32> to vector<4x16xf32>
    %c0_61 = arith.constant 0 : index
    %c271 = arith.constant 271 : index
    %46 = vector.load %arg14[%c0_61, %c271] : memref<4x324xf32, #tpu.memory_space<vmem>>, vector<4x16xf32>
    tpu.vector_store %arg14[%c0_61, %c271], %45 {strides = array<i32>} : memref<4x324xf32, #tpu.memory_space<vmem>>, vector<4x16xf32>,
    %c0_62 = arith.constant 0 : index
    %c0_63 = arith.constant 0 : index
    %c15 = arith.constant 15 : index
    %c0_64 = arith.constant 0 : index
    %47 = vector.load %arg1[%c0_62, %c0_63, %c15, %c0_64] : memref<1x4x16x16xf32, #tpu.memory_space<vmem>>, vector<1x4x1x16xf32>
    %48 = vector.shape_cast %47 : vector<1x4x1x16xf32> to vector<4x16xf32>
    %c0_65 = arith.constant 0 : index
    %c289 = arith.constant 289 : index
    %49 = vector.load %arg14[%c0_65, %c289] : memref<4x324xf32, #tpu.memory_space<vmem>>, vector<4x16xf32>
    tpu.vector_store %arg14[%c0_65, %c289], %48 {strides = array<i32>} : memref<4x324xf32, #tpu.memory_space<vmem>>, vector<4x16xf32>,
    %c0_66 = arith.constant 0 : index
    %c0_67 = arith.constant 0 : index
    %50 = vector.load %arg14[%c0_66, %c0_67] : memref<4x324xf32, #tpu.memory_space<vmem>>, vector<4x324xf32>
    %c0_68 = arith.constant 0 : index
    %c0_69 = arith.constant 0 : index
    %51 = vector.load %arg2[%c0_68, %c0_69] : memref<1x324xf32, #tpu.memory_space<vmem>>, vector<1x324xf32>
    %c0_70 = arith.constant 0 : index
    %c0_71 = arith.constant 0 : index
    %52 = vector.load %arg3[%c0_70, %c0_71] : memref<8x36xf32, #tpu.memory_space<vmem>>, vector<8x36xf32>
    %c0_72 = arith.constant 0 : index
    %c0_73 = arith.constant 0 : index
    %53 = vector.load %arg4[%c0_72, %c0_73] : memref<8x1xf32, #tpu.memory_space<vmem>>, vector<8x1xf32>
    %cst_74 = arith.constant 0.000000e+00 : f32
    %54 = vector.broadcast %cst_74 : f32 to vector<4x19xf32>
    %55 = tpu.concatenate %54, %50, %54 in 1 : vector<4x19xf32>, vector<4x324xf32>, vector<4x19xf32> -> vector<4x362xf32>
    %56 = vector.extract_strided_slice %55 {offsets = [0, 0], sizes = [4, 324], strides = [1, 1]} : vector<4x362xf32> to vector<4x324xf32>
    %57 = vector.extract_strided_slice %55 {offsets = [0, 1], sizes = [4, 324], strides = [1, 1]} : vector<4x362xf32> to vector<4x324xf32>
    %58 = vector.extract_strided_slice %55 {offsets = [0, 2], sizes = [4, 324], strides = [1, 1]} : vector<4x362xf32> to vector<4x324xf32>
    %59 = vector.extract_strided_slice %55 {offsets = [0, 18], sizes = [4, 324], strides = [1, 1]} : vector<4x362xf32> to vector<4x324xf32>
    %60 = vector.extract_strided_slice %55 {offsets = [0, 19], sizes = [4, 324], strides = [1, 1]} : vector<4x362xf32> to vector<4x324xf32>
    %61 = vector.extract_strided_slice %55 {offsets = [0, 20], sizes = [4, 324], strides = [1, 1]} : vector<4x362xf32> to vector<4x324xf32>
    %62 = vector.extract_strided_slice %55 {offsets = [0, 36], sizes = [4, 324], strides = [1, 1]} : vector<4x362xf32> to vector<4x324xf32>
    %63 = vector.extract_strided_slice %55 {offsets = [0, 37], sizes = [4, 324], strides = [1, 1]} : vector<4x362xf32> to vector<4x324xf32>
    %64 = vector.extract_strided_slice %55 {offsets = [0, 38], sizes = [4, 324], strides = [1, 1]} : vector<4x362xf32> to vector<4x324xf32>
    %65 = tpu.concatenate %56, %57, %58, %59, %60, %61, %62, %63, %64 in 0 : vector<4x324xf32>, vector<4x324xf32>, vector<4x324xf32>, vector<4x324xf32>, vector<4x324xf32>, vector<4x324xf32>, vector<4x324xf32>, vector<4x324xf32>, vector<4x324xf32> -> vector<36x324xf32>
    %cst_75 = arith.constant dense<0.000000e+00> : vector<8x324xf32>
    %66 = tpu.matmul %52, %65, %cst_75 {dimension_numbers = #tpu.dot_dimension_numbers<[1], [0], [0], [1], [0, 0, 1, 1], [], []>} : vector<8x36xf32>, vector<36x324xf32>, vector<8x324xf32> -> vector<8x324xf32>
    %67 = vector.broadcast %53 : vector<8x1xf32> to vector<8x324xf32>
    %68 = arith.addf %66, %67 : vector<8x324xf32>
    %cst_76 = arith.constant 0.000000e+00 : f32
    %69 = vector.broadcast %cst_76 : f32 to vector<8x324xf32>
    %70 = arith.cmpf ogt, %68, %69 : vector<8x324xf32>
    %cst_77 = arith.constant 2.000000e-01 : f32
    %71 = vector.broadcast %cst_77 : f32 to vector<8x324xf32>
    %72 = arith.mulf %71, %68 : vector<8x324xf32>
    %73 = arith.select %70, %68, %72 : vector<8x324xi1>, vector<8x324xf32>
    %74 = vector.broadcast %51 : vector<1x324xf32> to vector<8x324xf32>
    %75 = arith.mulf %73, %74 : vector<8x324xf32>
    %c0_78 = arith.constant 0 : index
    %c0_79 = arith.constant 0 : index
    %76 = vector.load %arg5[%c0_78, %c0_79] : memref<16x72xf32, #tpu.memory_space<vmem>>, vector<16x72xf32>
    %c0_80 = arith.constant 0 : index
    %c0_81 = arith.constant 0 : index
    %77 = vector.load %arg6[%c0_80, %c0_81] : memref<16x1xf32, #tpu.memory_space<vmem>>, vector<16x1xf32>
    %cst_82 = arith.constant 0.000000e+00 : f32
    %78 = vector.broadcast %cst_82 : f32 to vector<8x19xf32>
    %79 = tpu.concatenate %78, %75, %78 in 1 : vector<8x19xf32>, vector<8x324xf32>, vector<8x19xf32> -> vector<8x362xf32>
    %80 = vector.extract_strided_slice %79 {offsets = [0, 0], sizes = [8, 324], strides = [1, 1]} : vector<8x362xf32> to vector<8x324xf32>
    %81 = vector.extract_strided_slice %79 {offsets = [0, 1], sizes = [8, 324], strides = [1, 1]} : vector<8x362xf32> to vector<8x324xf32>
    %82 = vector.extract_strided_slice %79 {offsets = [0, 2], sizes = [8, 324], strides = [1, 1]} : vector<8x362xf32> to vector<8x324xf32>
    %83 = vector.extract_strided_slice %79 {offsets = [0, 18], sizes = [8, 324], strides = [1, 1]} : vector<8x362xf32> to vector<8x324xf32>
    %84 = vector.extract_strided_slice %79 {offsets = [0, 19], sizes = [8, 324], strides = [1, 1]} : vector<8x362xf32> to vector<8x324xf32>
    %85 = vector.extract_strided_slice %79 {offsets = [0, 20], sizes = [8, 324], strides = [1, 1]} : vector<8x362xf32> to vector<8x324xf32>
    %86 = vector.extract_strided_slice %79 {offsets = [0, 36], sizes = [8, 324], strides = [1, 1]} : vector<8x362xf32> to vector<8x324xf32>
    %87 = vector.extract_strided_slice %79 {offsets = [0, 37], sizes = [8, 324], strides = [1, 1]} : vector<8x362xf32> to vector<8x324xf32>
    %88 = vector.extract_strided_slice %79 {offsets = [0, 38], sizes = [8, 324], strides = [1, 1]} : vector<8x362xf32> to vector<8x324xf32>
    %89 = tpu.concatenate %80, %81, %82, %83, %84, %85, %86, %87, %88 in 0 : vector<8x324xf32>, vector<8x324xf32>, vector<8x324xf32>, vector<8x324xf32>, vector<8x324xf32>, vector<8x324xf32>, vector<8x324xf32>, vector<8x324xf32>, vector<8x324xf32> -> vector<72x324xf32>
    %cst_83 = arith.constant dense<0.000000e+00> : vector<16x324xf32>
    %90 = tpu.matmul %76, %89, %cst_83 {dimension_numbers = #tpu.dot_dimension_numbers<[1], [0], [0], [1], [0, 0, 1, 1], [], []>} : vector<16x72xf32>, vector<72x324xf32>, vector<16x324xf32> -> vector<16x324xf32>
    %91 = vector.broadcast %77 : vector<16x1xf32> to vector<16x324xf32>
    %92 = arith.addf %90, %91 : vector<16x324xf32>
    %cst_84 = arith.constant 0.000000e+00 : f32
    %93 = vector.broadcast %cst_84 : f32 to vector<16x324xf32>
    %94 = arith.cmpf ogt, %92, %93 : vector<16x324xf32>
    %cst_85 = arith.constant 2.000000e-01 : f32
    %95 = vector.broadcast %cst_85 : f32 to vector<16x324xf32>
    %96 = arith.mulf %95, %92 : vector<16x324xf32>
    %97 = arith.select %94, %92, %96 : vector<16x324xi1>, vector<16x324xf32>
    %98 = vector.broadcast %51 : vector<1x324xf32> to vector<16x324xf32>
    %99 = arith.mulf %97, %98 : vector<16x324xf32>
    %c0_86 = arith.constant 0 : index
    %c0_87 = arith.constant 0 : index
    %100 = vector.load %arg7[%c0_86, %c0_87] : memref<32x144xf32, #tpu.memory_space<vmem>>, vector<32x144xf32>
    %c0_88 = arith.constant 0 : index
    %c0_89 = arith.constant 0 : index
    %101 = vector.load %arg8[%c0_88, %c0_89] : memref<32x1xf32, #tpu.memory_space<vmem>>, vector<32x1xf32>
    %cst_90 = arith.constant 0.000000e+00 : f32
    %102 = vector.broadcast %cst_90 : f32 to vector<16x19xf32>
    %103 = tpu.concatenate %102, %99, %102 in 1 : vector<16x19xf32>, vector<16x324xf32>, vector<16x19xf32> -> vector<16x362xf32>
    %104 = vector.extract_strided_slice %103 {offsets = [0, 0], sizes = [16, 324], strides = [1, 1]} : vector<16x362xf32> to vector<16x324xf32>
    %105 = vector.extract_strided_slice %103 {offsets = [0, 1], sizes = [16, 324], strides = [1, 1]} : vector<16x362xf32> to vector<16x324xf32>
    %106 = vector.extract_strided_slice %103 {offsets = [0, 2], sizes = [16, 324], strides = [1, 1]} : vector<16x362xf32> to vector<16x324xf32>
    %107 = vector.extract_strided_slice %103 {offsets = [0, 18], sizes = [16, 324], strides = [1, 1]} : vector<16x362xf32> to vector<16x324xf32>
    %108 = vector.extract_strided_slice %103 {offsets = [0, 19], sizes = [16, 324], strides = [1, 1]} : vector<16x362xf32> to vector<16x324xf32>
    %109 = vector.extract_strided_slice %103 {offsets = [0, 20], sizes = [16, 324], strides = [1, 1]} : vector<16x362xf32> to vector<16x324xf32>
    %110 = vector.extract_strided_slice %103 {offsets = [0, 36], sizes = [16, 324], strides = [1, 1]} : vector<16x362xf32> to vector<16x324xf32>
    %111 = vector.extract_strided_slice %103 {offsets = [0, 37], sizes = [16, 324], strides = [1, 1]} : vector<16x362xf32> to vector<16x324xf32>
    %112 = vector.extract_strided_slice %103 {offsets = [0, 38], sizes = [16, 324], strides = [1, 1]} : vector<16x362xf32> to vector<16x324xf32>
    %113 = tpu.concatenate %104, %105, %106, %107, %108, %109, %110, %111, %112 in 0 : vector<16x324xf32>, vector<16x324xf32>, vector<16x324xf32>, vector<16x324xf32>, vector<16x324xf32>, vector<16x324xf32>, vector<16x324xf32>, vector<16x324xf32>, vector<16x324xf32> -> vector<144x324xf32>
    %cst_91 = arith.constant dense<0.000000e+00> : vector<32x324xf32>
    %114 = tpu.matmul %100, %113, %cst_91 {dimension_numbers = #tpu.dot_dimension_numbers<[1], [0], [0], [1], [0, 0, 1, 1], [], []>} : vector<32x144xf32>, vector<144x324xf32>, vector<32x324xf32> -> vector<32x324xf32>
    %115 = vector.broadcast %101 : vector<32x1xf32> to vector<32x324xf32>
    %116 = arith.addf %114, %115 : vector<32x324xf32>
    %cst_92 = arith.constant 0.000000e+00 : f32
    %117 = vector.broadcast %cst_92 : f32 to vector<32x324xf32>
    %118 = arith.cmpf ogt, %116, %117 : vector<32x324xf32>
    %cst_93 = arith.constant 2.000000e-01 : f32
    %119 = vector.broadcast %cst_93 : f32 to vector<32x324xf32>
    %120 = arith.mulf %119, %116 : vector<32x324xf32>
    %121 = arith.select %118, %116, %120 : vector<32x324xi1>, vector<32x324xf32>
    %122 = vector.broadcast %51 : vector<1x324xf32> to vector<32x324xf32>
    %123 = arith.mulf %121, %122 : vector<32x324xf32>
    %c0_94 = arith.constant 0 : index
    %c0_95 = arith.constant 0 : index
    %124 = vector.load %arg9[%c0_94, %c0_95] : memref<64x288xf32, #tpu.memory_space<vmem>>, vector<64x288xf32>
    %c0_96 = arith.constant 0 : index
    %c0_97 = arith.constant 0 : index
    %125 = vector.load %arg10[%c0_96, %c0_97] : memref<64x1xf32, #tpu.memory_space<vmem>>, vector<64x1xf32>
    %cst_98 = arith.constant 0.000000e+00 : f32
    %126 = vector.broadcast %cst_98 : f32 to vector<32x19xf32>
    %127 = tpu.concatenate %126, %123, %126 in 1 : vector<32x19xf32>, vector<32x324xf32>, vector<32x19xf32> -> vector<32x362xf32>
    %128 = vector.extract_strided_slice %127 {offsets = [0, 0], sizes = [32, 324], strides = [1, 1]} : vector<32x362xf32> to vector<32x324xf32>
    %129 = vector.extract_strided_slice %127 {offsets = [0, 1], sizes = [32, 324], strides = [1, 1]} : vector<32x362xf32> to vector<32x324xf32>
    %130 = vector.extract_strided_slice %127 {offsets = [0, 2], sizes = [32, 324], strides = [1, 1]} : vector<32x362xf32> to vector<32x324xf32>
    %131 = vector.extract_strided_slice %127 {offsets = [0, 18], sizes = [32, 324], strides = [1, 1]} : vector<32x362xf32> to vector<32x324xf32>
    %132 = vector.extract_strided_slice %127 {offsets = [0, 19], sizes = [32, 324], strides = [1, 1]} : vector<32x362xf32> to vector<32x324xf32>
    %133 = vector.extract_strided_slice %127 {offsets = [0, 20], sizes = [32, 324], strides = [1, 1]} : vector<32x362xf32> to vector<32x324xf32>
    %134 = vector.extract_strided_slice %127 {offsets = [0, 36], sizes = [32, 324], strides = [1, 1]} : vector<32x362xf32> to vector<32x324xf32>
    %135 = vector.extract_strided_slice %127 {offsets = [0, 37], sizes = [32, 324], strides = [1, 1]} : vector<32x362xf32> to vector<32x324xf32>
    %136 = vector.extract_strided_slice %127 {offsets = [0, 38], sizes = [32, 324], strides = [1, 1]} : vector<32x362xf32> to vector<32x324xf32>
    %137 = tpu.concatenate %128, %129, %130, %131, %132, %133, %134, %135, %136 in 0 : vector<32x324xf32>, vector<32x324xf32>, vector<32x324xf32>, vector<32x324xf32>, vector<32x324xf32>, vector<32x324xf32>, vector<32x324xf32>, vector<32x324xf32>, vector<32x324xf32> -> vector<288x324xf32>
    %cst_99 = arith.constant dense<0.000000e+00> : vector<64x324xf32>
    %138 = tpu.matmul %124, %137, %cst_99 {dimension_numbers = #tpu.dot_dimension_numbers<[1], [0], [0], [1], [0, 0, 1, 1], [], []>} : vector<64x288xf32>, vector<288x324xf32>, vector<64x324xf32> -> vector<64x324xf32>
    %139 = vector.broadcast %125 : vector<64x1xf32> to vector<64x324xf32>
    %140 = arith.addf %138, %139 : vector<64x324xf32>
    %cst_100 = arith.constant 0.000000e+00 : f32
    %141 = vector.broadcast %cst_100 : f32 to vector<64x324xf32>
    %142 = arith.cmpf ogt, %140, %141 : vector<64x324xf32>
    %cst_101 = arith.constant 2.000000e-01 : f32
    %143 = vector.broadcast %cst_101 : f32 to vector<64x324xf32>
    %144 = arith.mulf %143, %140 : vector<64x324xf32>
    %145 = arith.select %142, %140, %144 : vector<64x324xi1>, vector<64x324xf32>
    %146 = vector.broadcast %51 : vector<1x324xf32> to vector<64x324xf32>
    %147 = arith.mulf %145, %146 : vector<64x324xf32>
    %c0_102 = arith.constant 0 : index
    %c0_103 = arith.constant 0 : index
    %148 = vector.load %arg11[%c0_102, %c0_103] : memref<1x576xf32, #tpu.memory_space<vmem>>, vector<1x576xf32>
    %c0_104 = arith.constant 0 : index
    %c0_105 = arith.constant 0 : index
    %149 = vector.load %arg12[%c0_104, %c0_105] : memref<1x1xf32, #tpu.memory_space<vmem>>, vector<1x1xf32>
    %cst_106 = arith.constant 0.000000e+00 : f32
    %150 = vector.broadcast %cst_106 : f32 to vector<64x19xf32>
    %151 = tpu.concatenate %150, %147, %150 in 1 : vector<64x19xf32>, vector<64x324xf32>, vector<64x19xf32> -> vector<64x362xf32>
    %152 = vector.extract_strided_slice %151 {offsets = [0, 0], sizes = [64, 324], strides = [1, 1]} : vector<64x362xf32> to vector<64x324xf32>
    %153 = vector.extract_strided_slice %151 {offsets = [0, 1], sizes = [64, 324], strides = [1, 1]} : vector<64x362xf32> to vector<64x324xf32>
    %154 = vector.extract_strided_slice %151 {offsets = [0, 2], sizes = [64, 324], strides = [1, 1]} : vector<64x362xf32> to vector<64x324xf32>
    %155 = vector.extract_strided_slice %151 {offsets = [0, 18], sizes = [64, 324], strides = [1, 1]} : vector<64x362xf32> to vector<64x324xf32>
    %156 = vector.extract_strided_slice %151 {offsets = [0, 19], sizes = [64, 324], strides = [1, 1]} : vector<64x362xf32> to vector<64x324xf32>
    %157 = vector.extract_strided_slice %151 {offsets = [0, 20], sizes = [64, 324], strides = [1, 1]} : vector<64x362xf32> to vector<64x324xf32>
    %158 = vector.extract_strided_slice %151 {offsets = [0, 36], sizes = [64, 324], strides = [1, 1]} : vector<64x362xf32> to vector<64x324xf32>
    %159 = vector.extract_strided_slice %151 {offsets = [0, 37], sizes = [64, 324], strides = [1, 1]} : vector<64x362xf32> to vector<64x324xf32>
    %160 = vector.extract_strided_slice %151 {offsets = [0, 38], sizes = [64, 324], strides = [1, 1]} : vector<64x362xf32> to vector<64x324xf32>
    %161 = tpu.concatenate %152, %153, %154, %155, %156, %157, %158, %159, %160 in 0 : vector<64x324xf32>, vector<64x324xf32>, vector<64x324xf32>, vector<64x324xf32>, vector<64x324xf32>, vector<64x324xf32>, vector<64x324xf32>, vector<64x324xf32>, vector<64x324xf32> -> vector<576x324xf32>
    %cst_107 = arith.constant dense<0.000000e+00> : vector<1x324xf32>
    %162 = tpu.matmul %148, %161, %cst_107 {dimension_numbers = #tpu.dot_dimension_numbers<[1], [0], [0], [1], [0, 0, 1, 1], [], []>} : vector<1x576xf32>, vector<576x324xf32>, vector<1x324xf32> -> vector<1x324xf32>
    %163 = vector.broadcast %149 : vector<1x1xf32> to vector<1x324xf32>
    %164 = arith.addf %162, %163 : vector<1x324xf32>
    %165 = arith.mulf %164, %51 : vector<1x324xf32>
    %c0_108 = arith.constant 0 : index
    %c0_109 = arith.constant 0 : index
    %c0_110 = arith.constant 0 : index
    %166 = vector.load %arg13[%c0_108, %c0_109, %c0_110] : memref<1x1x324xf32, #tpu.memory_space<vmem>>, vector<1x1x324xf32>
    %167 = vector.shape_cast %166 : vector<1x1x324xf32> to vector<1x324xf32>
    %168 = vector.shape_cast %165 : vector<1x324xf32> to vector<1x1x324xf32>
    tpu.vector_store %arg13[%c0_108, %c0_109, %c0_110], %168 {strides = array<i32>} : memref<1x1x324xf32, #tpu.memory_space<vmem>>, vector<1x1x324xf32>,
    return
  }
  func.func @transform_0(%arg0: i32) -> (i32, i32, i32, i32) {
    %c0_i32 = arith.constant 0 : i32
    %c0_i32_0 = arith.constant 0 : i32
    %c0_i32_1 = arith.constant 0 : i32
    %c0_i32_2 = arith.constant 0 : i32
    return %arg0, %c0_i32, %c0_i32_0, %c0_i32_1 : i32, i32, i32, i32
  }
  func.func @transform_1(%arg0: i32) -> (i32, i32) {
    %c0_i32 = arith.constant 0 : i32
    %c0_i32_0 = arith.constant 0 : i32
    %c0_i32_1 = arith.constant 0 : i32
    return %c0_i32, %c0_i32_0 : i32, i32
  }
  func.func @transform_2(%arg0: i32) -> (i32, i32) {
    %c0_i32 = arith.constant 0 : i32
    %c0_i32_0 = arith.constant 0 : i32
    %c0_i32_1 = arith.constant 0 : i32
    return %c0_i32, %c0_i32_0 : i32, i32
  }
  func.func @transform_3(%arg0: i32) -> (i32, i32) {
    %c0_i32 = arith.constant 0 : i32
    %c0_i32_0 = arith.constant 0 : i32
    %c0_i32_1 = arith.constant 0 : i32
    return %c0_i32, %c0_i32_0 : i32, i32
  }
  func.func @transform_4(%arg0: i32) -> (i32, i32) {
    %c0_i32 = arith.constant 0 : i32
    %c0_i32_0 = arith.constant 0 : i32
    %c0_i32_1 = arith.constant 0 : i32
    return %c0_i32, %c0_i32_0 : i32, i32
  }
  func.func @transform_5(%arg0: i32) -> (i32, i32) {
    %c0_i32 = arith.constant 0 : i32
    %c0_i32_0 = arith.constant 0 : i32
    %c0_i32_1 = arith.constant 0 : i32
    return %c0_i32, %c0_i32_0 : i32, i32
  }
  func.func @transform_6(%arg0: i32) -> (i32, i32) {
    %c0_i32 = arith.constant 0 : i32
    %c0_i32_0 = arith.constant 0 : i32
    %c0_i32_1 = arith.constant 0 : i32
    return %c0_i32, %c0_i32_0 : i32, i32
  }
  func.func @transform_7(%arg0: i32) -> (i32, i32) {
    %c0_i32 = arith.constant 0 : i32
    %c0_i32_0 = arith.constant 0 : i32
    %c0_i32_1 = arith.constant 0 : i32
    return %c0_i32, %c0_i32_0 : i32, i32
  }
  func.func @transform_8(%arg0: i32) -> (i32, i32) {
    %c0_i32 = arith.constant 0 : i32
    %c0_i32_0 = arith.constant 0 : i32
    %c0_i32_1 = arith.constant 0 : i32
    return %c0_i32, %c0_i32_0 : i32, i32
  }
  func.func @transform_9(%arg0: i32) -> (i32, i32) {
    %c0_i32 = arith.constant 0 : i32
    %c0_i32_0 = arith.constant 0 : i32
    %c0_i32_1 = arith.constant 0 : i32
    return %c0_i32, %c0_i32_0 : i32, i32
  }
  func.func @transform_10(%arg0: i32) -> (i32, i32) {
    %c0_i32 = arith.constant 0 : i32
    %c0_i32_0 = arith.constant 0 : i32
    %c0_i32_1 = arith.constant 0 : i32
    return %c0_i32, %c0_i32_0 : i32, i32
  }
  func.func @transform_11(%arg0: i32) -> (i32, i32) {
    %c0_i32 = arith.constant 0 : i32
    %c0_i32_0 = arith.constant 0 : i32
    %c0_i32_1 = arith.constant 0 : i32
    return %c0_i32, %c0_i32_0 : i32, i32
  }
  func.func @transform_12(%arg0: i32) -> (i32, i32, i32) {
    %c0_i32 = arith.constant 0 : i32
    %c0_i32_0 = arith.constant 0 : i32
    %c0_i32_1 = arith.constant 0 : i32
    return %arg0, %c0_i32, %c0_i32_0 : i32, i32, i32
  }
}

</mosaic_0001>

<llo_original>
// kernel: tpu_custom_call.1
$region0: #{tpu_custom_call.1}
  #allocation0 [shape = 'u32[]', space=smem, size = 0x4, offset = 0x4, fixed_abs, tag = 'smem constant byte address 0x4 - core index']
  #allocation1 [shape = 'u32[144,128]{1,0:T(1,128)}', space=vmem, size = 0x12000, scoped, tag = 'internal scratch']
  #allocation2 [shape = 'f32[4,324]{1,0:T(4,128)}', space=vmem, size = 0x1800, scoped, tag = 'scratch operand']
  #allocation3 [shape = 'f32[1,1]{1,0:T(1,128)S(1)}', space=vmem, size = 0x200, scoped, tag = 'scoped memory for tpu_custom_call.1']
  %s0 = inlined_call_operand.hbm [shape: f32[2,4,16,16], index: 0, kind: input, shape index: {}]
  %s1 = inlined_call_operand.vmem [shape: f32[1,324], index: 1, kind: input, shape index: {}]
  %s2 = inlined_call_operand.vmem [shape: f32[8,36], index: 2, kind: input, shape index: {}]
  %s3 = inlined_call_operand.vmem [shape: f32[8,1], index: 3, kind: input, shape index: {}]
  %s4 = inlined_call_operand.vmem [shape: f32[16,72], index: 4, kind: input, shape index: {}]
  %s5 = inlined_call_operand.vmem [shape: f32[16,1], index: 5, kind: input, shape index: {}]
  %s6 = inlined_call_operand.vmem [shape: f32[32,144], index: 6, kind: input, shape index: {}]
  %s7 = inlined_call_operand.vmem [shape: f32[32,1], index: 7, kind: input, shape index: {}]
  %s8 = inlined_call_operand.hbm [shape: f32[64,288], index: 8, kind: input, shape index: {}]
  %s9 = inlined_call_operand.vmem [shape: f32[64,1], index: 9, kind: input, shape index: {}]
  %s10 = inlined_call_operand.vmem [shape: f32[1,576], index: 10, kind: input, shape index: {}]
  %s11 = inlined_call_operand.<no memory space> [shape: f32[1,1], index: 11, kind: input, shape index: {}]
  %s12 = inlined_call_operand.hbm [shape: f32[2,1,324], index: 12, kind: output, shape index: {}]
  %s13 = sld [smem:[#allocation0]]
  $region89: #{tpu_custom_call.1} parent=0
    _
  %s15 = ssub.s32 1, %s13
  %s16 = scalar_select 0, %s15, %s13
  %v17 = vstv %s11
  %18 = vst [vmem:[#allocation3] sm:$0x1] %v17
  $region1: #{tpu_custom_call.1} parent=0
    #allocation4 [shape = 'u8[65536]{0}', space=vmem, size = 0x10000, scoped, tag = 'input window, operand 0']
    #allocation5 [shape = 's32[2]{0}', space=sflag, size = 0x8, scoped, tag = 'scoped memory for tpu_custom_call.1']
    #allocation6 [shape = 's32[2]{0}', space=sflag, size = 0x8, scoped, tag = 'scoped memory for tpu_custom_call.1']
    #allocation7 [shape = 'u8[98304]{0}', space=vmem, size = 0x18000, scoped, tag = 'input window, operand 8, single buffered']
    #allocation8 [shape = 's32[1]{0}', space=sflag, size = 0x4, scoped, tag = 'scoped memory for tpu_custom_call.1']
    #allocation9 [shape = 'u8[3072]{0}', space=vmem, size = 0xc00, scoped, tag = 'output window, operand 0']
    %19 = vsyncpa [#allocation5], 0
    %s20 = scalar_lea.sflag [#allocation5], 1
    %21 = vsyncpa %s20, 0
    %22 = vsyncpa [#allocation8], 0
    %23 = vsyncpa [#allocation6], 0
    %s24 = scalar_lea.sflag [#allocation6], 1
    %25 = vsyncpa %s24, 0
    loop: start=0, step=1, limit=4
    $region2: #{tpu_custom_call.1} parent=1 // loop_pre_header
      _
    $region3: #{tpu_custom_call.1} parent=1 // loop_header
      %s27 = sphi 0, %s31
      %p28 = scmp.ge.s32.totalorder %s27, 4
      %s37 = sphi 0, %s39
      %s40 = sphi 0, %s37
      %s41 = sphi 0, %s40
      %s57 = sphi 0, %s41
      %s61 = sphi 0, %s61
      %s63 = sphi 0, %s61
      %s64 = sphi 0, %s63
      %s78 = sphi 0, %s64
      %s82 = sphi 0, %s82
      %s84 = sphi 0, %s82
      %s85 = sphi 0, %s84
      %s99 = sphi 0, %s85
      %s103 = sphi 0, %s103
      %s105 = sphi 0, %s103
      %s106 = sphi 0, %s105
      %s120 = sphi 0, %s106
      %s124 = sphi 0, %s124
      %s126 = sphi 0, %s124
      %s127 = sphi 0, %s126
      %s141 = sphi 0, %s127
      %s145 = sphi 0, %s145
      %s147 = sphi 0, %s145
      %s148 = sphi 0, %s147
      %s162 = sphi 0, %s148
      %s166 = sphi 0, %s166
      %s168 = sphi 0, %s166
      %s169 = sphi 0, %s168
      %s183 = sphi 0, %s169
      %s187 = sphi 0, %s187
      %s189 = sphi 0, %s187
      %s190 = sphi 0, %s189
      %s204 = sphi 0, %s190
      %s208 = sphi 0, %s208
      %s210 = sphi 0, %s208
      %s211 = sphi 0, %s210
      %s225 = sphi 0, %s211
      %s229 = sphi 0, %s229
      %s231 = sphi 0, %s229
      %s232 = sphi 0, %s231
      %s246 = sphi 0, %s232
      %s250 = sphi 0, %s250
      %s252 = sphi 0, %s250
      %s253 = sphi 0, %s252
      %s267 = sphi 0, %s253
      %s271 = sphi 0, %s271
      %s273 = sphi 0, %s271
      %s274 = sphi 0, %s273
      %s288 = sphi 0, %s274
      %s294 = sphi 0, %s296
      %s297 = sphi 0, %s294
      %s298 = sphi 0, %s297
      %s314 = sphi 0, %s298
    $region4: #{tpu_custom_call.1} parent=1 // loop_header_branch
      %30 = sbr.rel (%p28) target = $region8
    $region5: #{tpu_custom_call.1} parent=1 // loop_body
      %s32 = ssub.s32 %s27, 1
      %s33 = ssub.s32 %s27, 2
      %s34 = sadd.s32 %s27, 1
      %s35 = ssub.s32 %s27, %s34
      %p36 = scmp.eq.s32.totalorder %s35, 0
      %s38 = sadd.s32 %s37, 1
      %s39 = scalar_select %p36, %s37, %s38
      %p42 = pneg %p36
      %p43 = scmp.eq.s32.totalorder %s27, 1
      %p44 = por %p42, %p43
      %p45 = scmp.ne.s32.totalorder %s37, %s40
      %p46 = scmp.eq.s32.totalorder %s27, 0
      %p47 = por %p45, %p46
      %p48 = scmp.ne.s32.totalorder %s37, %s40
      %p49 = scmp.eq.s32.totalorder %s32, 1
      %p50 = por %p48, %p49
      %p51 = scmp.ne.s32.totalorder %s40, %s41
      %p52 = scmp.eq.s32.totalorder %s32, 0
      %p53 = por %p51, %p52
      %p54 = scmp.ne.s32.totalorder %s40, %s41
      %p55 = scmp.eq.s32.totalorder %s33, 1
      %p56 = por %p54, %p55
      %p58 = scmp.ne.s32.totalorder %s41, %s57
      %p59 = scmp.eq.s32.totalorder %s33, 0
      %p60 = por %p58, %p59
      %s62 = sadd.s32 %s61, 1
      %p65 = scmp.eq.s32.totalorder %s27, 1
      %p66 = scmp.ne.s32.totalorder %s61, %s63
      %p67 = scmp.eq.s32.totalorder %s27, 0
      %p68 = por %p66, %p67
      %p69 = scmp.ne.s32.totalorder %s61, %s63
      %p70 = scmp.eq.s32.totalorder %s32, 1
      %p71 = por %p69, %p70
      %p72 = scmp.ne.s32.totalorder %s63, %s64
      %p73 = scmp.eq.s32.totalorder %s32, 0
      %p74 = por %p72, %p73
      %p75 = scmp.ne.s32.totalorder %s63, %s64
      %p76 = scmp.eq.s32.totalorder %s33, 1
      %p77 = por %p75, %p76
      %p79 = scmp.ne.s32.totalorder %s64, %s78
      %p80 = scmp.eq.s32.totalorder %s33, 0
      %p81 = por %p79, %p80
      %s83 = sadd.s32 %s82, 1
      %p86 = scmp.eq.s32.totalorder %s27, 1
      %p87 = scmp.ne.s32.totalorder %s82, %s84
      %p88 = scmp.eq.s32.totalorder %s27, 0
      %p89 = por %p87, %p88
      %p90 = scmp.ne.s32.totalorder %s82, %s84
      %p91 = scmp.eq.s32.totalorder %s32, 1
      %p92 = por %p90, %p91
      %p93 = scmp.ne.s32.totalorder %s84, %s85
      %p94 = scmp.eq.s32.totalorder %s32, 0
      %p95 = por %p93, %p94
      %p96 = scmp.ne.s32.totalorder %s84, %s85
      %p97 = scmp.eq.s32.totalorder %s33, 1
      %p98 = por %p96, %p97
      %p100 = scmp.ne.s32.totalorder %s85, %s99
      %p101 = scmp.eq.s32.totalorder %s33, 0
      %p102 = por %p100, %p101
      %s104 = sadd.s32 %s103, 1
      %p107 = scmp.eq.s32.totalorder %s27, 1
      %p108 = scmp.ne.s32.totalorder %s103, %s105
      %p109 = scmp.eq.s32.totalorder %s27, 0
      %p110 = por %p108, %p109
      %p111 = scmp.ne.s32.totalorder %s103, %s105
      %p112 = scmp.eq.s32.totalorder %s32, 1
      %p113 = por %p111, %p112
      %p114 = scmp.ne.s32.totalorder %s105, %s106
      %p115 = scmp.eq.s32.totalorder %s32, 0
      %p116 = por %p114, %p115
      %p117 = scmp.ne.s32.totalorder %s105, %s106
      %p118 = scmp.eq.s32.totalorder %s33, 1
      %p119 = por %p117, %p118
      %p121 = scmp.ne.s32.totalorder %s106, %s120
      %p122 = scmp.eq.s32.totalorder %s33, 0
      %p123 = por %p121, %p122
      %s125 = sadd.s32 %s124, 1
      %p128 = scmp.eq.s32.totalorder %s27, 1
      %p129 = scmp.ne.s32.totalorder %s124, %s126
      %p130 = scmp.eq.s32.totalorder %s27, 0
      %p131 = por %p129, %p130
      %p132 = scmp.ne.s32.totalorder %s124, %s126
      %p133 = scmp.eq.s32.totalorder %s32, 1
      %p134 = por %p132, %p133
      %p135 = scmp.ne.s32.totalorder %s126, %s127
      %p136 = scmp.eq.s32.totalorder %s32, 0
      %p137 = por %p135, %p136
      %p138 = scmp.ne.s32.totalorder %s126, %s127
      %p139 = scmp.eq.s32.totalorder %s33, 1
      %p140 = por %p138, %p139
      %p142 = scmp.ne.s32.totalorder %s127, %s141
      %p143 = scmp.eq.s32.totalorder %s33, 0
      %p144 = por %p142, %p143
      %s146 = sadd.s32 %s145, 1
      %p149 = scmp.eq.s32.totalorder %s27, 1
      %p150 = scmp.ne.s32.totalorder %s145, %s147
      %p151 = scmp.eq.s32.totalorder %s27, 0
      %p152 = por %p150, %p151
      %p153 = scmp.ne.s32.totalorder %s145, %s147
      %p154 = scmp.eq.s32.totalorder %s32, 1
      %p155 = por %p153, %p154
      %p156 = scmp.ne.s32.totalorder %s147, %s148
      %p157 = scmp.eq.s32.totalorder %s32, 0
      %p158 = por %p156, %p157
      %p159 = scmp.ne.s32.totalorder %s147, %s148
      %p160 = scmp.eq.s32.totalorder %s33, 1
      %p161 = por %p159, %p160
      %p163 = scmp.ne.s32.totalorder %s148, %s162
      %p164 = scmp.eq.s32.totalorder %s33, 0
      %p165 = por %p163, %p164
      %s167 = sadd.s32 %s166, 1
      %p170 = scmp.eq.s32.totalorder %s27, 1
      %p171 = scmp.ne.s32.totalorder %s166, %s168
      %p172 = scmp.eq.s32.totalorder %s27, 0
      %p173 = por %p171, %p172
      %p174 = scmp.ne.s32.totalorder %s166, %s168
      %p175 = scmp.eq.s32.totalorder %s32, 1
      %p176 = por %p174, %p175
      %p177 = scmp.ne.s32.totalorder %s168, %s169
      %p178 = scmp.eq.s32.totalorder %s32, 0
      %p179 = por %p177, %p178
      %p180 = scmp.ne.s32.totalorder %s168, %s169
      %p181 = scmp.eq.s32.totalorder %s33, 1
      %p182 = por %p180, %p181
      %p184 = scmp.ne.s32.totalorder %s169, %s183
      %p185 = scmp.eq.s32.totalorder %s33, 0
      %p186 = por %p184, %p185
      %s188 = sadd.s32 %s187, 1
      %p191 = scmp.eq.s32.totalorder %s27, 1
      %p192 = scmp.ne.s32.totalorder %s187, %s189
      %p193 = scmp.eq.s32.totalorder %s27, 0
      %p194 = por %p192, %p193
      %p195 = scmp.ne.s32.totalorder %s187, %s189
      %p196 = scmp.eq.s32.totalorder %s32, 1
      %p197 = por %p195, %p196
      %p198 = scmp.ne.s32.totalorder %s189, %s190
      %p199 = scmp.eq.s32.totalorder %s32, 0
      %p200 = por %p198, %p199
      %p201 = scmp.ne.s32.totalorder %s189, %s190
      %p202 = scmp.eq.s32.totalorder %s33, 1
      %p203 = por %p201, %p202
      %p205 = scmp.ne.s32.totalorder %s190, %s204
      %p206 = scmp.eq.s32.totalorder %s33, 0
      %p207 = por %p205, %p206
      %s209 = sadd.s32 %s208, 1
      %p212 = scmp.eq.s32.totalorder %s27, 1
      %p213 = scmp.ne.s32.totalorder %s208, %s210
      %p214 = scmp.eq.s32.totalorder %s27, 0
      %p215 = por %p213, %p214
      %p216 = scmp.ne.s32.totalorder %s208, %s210
      %p217 = scmp.eq.s32.totalorder %s32, 1
      %p218 = por %p216, %p217
      %p219 = scmp.ne.s32.totalorder %s210, %s211
      %p220 = scmp.eq.s32.totalorder %s32, 0
      %p221 = por %p219, %p220
      %p222 = scmp.ne.s32.totalorder %s210, %s211
      %p223 = scmp.eq.s32.totalorder %s33, 1
      %p224 = por %p222, %p223
      %p226 = scmp.ne.s32.totalorder %s211, %s225
      %p227 = scmp.eq.s32.totalorder %s33, 0
      %p228 = por %p226, %p227
      %s230 = sadd.s32 %s229, 1
      %p233 = scmp.eq.s32.totalorder %s27, 1
      %p234 = scmp.ne.s32.totalorder %s229, %s231
      %p235 = scmp.eq.s32.totalorder %s27, 0
      %p236 = por %p234, %p235
      %p237 = scmp.ne.s32.totalorder %s229, %s231
      %p238 = scmp.eq.s32.totalorder %s32, 1
      %p239 = por %p237, %p238
      %p240 = scmp.ne.s32.totalorder %s231, %s232
      %p241 = scmp.eq.s32.totalorder %s32, 0
      %p242 = por %p240, %p241
      %p243 = scmp.ne.s32.totalorder %s231, %s232
      %p244 = scmp.eq.s32.totalorder %s33, 1
      %p245 = por %p243, %p244
      %p247 = scmp.ne.s32.totalorder %s232, %s246
      %p248 = scmp.eq.s32.totalorder %s33, 0
      %p249 = por %p247, %p248
      %s251 = sadd.s32 %s250, 1
      %p254 = scmp.eq.s32.totalorder %s27, 1
      %p255 = scmp.ne.s32.totalorder %s250, %s252
      %p256 = scmp.eq.s32.totalorder %s27, 0
      %p257 = por %p255, %p256
      %p258 = scmp.ne.s32.totalorder %s250, %s252
      %p259 = scmp.eq.s32.totalorder %s32, 1
      %p260 = por %p258, %p259
      %p261 = scmp.ne.s32.totalorder %s252, %s253
      %p262 = scmp.eq.s32.totalorder %s32, 0
      %p263 = por %p261, %p262
      %p264 = scmp.ne.s32.totalorder %s252, %s253
      %p265 = scmp.eq.s32.totalorder %s33, 1
      %p266 = por %p264, %p265
      %p268 = scmp.ne.s32.totalorder %s253, %s267
      %p269 = scmp.eq.s32.totalorder %s33, 0
      %p270 = por %p268, %p269
      %s272 = sadd.s32 %s271, 1
      %p275 = scmp.eq.s32.totalorder %s27, 1
      %p276 = scmp.ne.s32.totalorder %s271, %s273
      %p277 = scmp.eq.s32.totalorder %s27, 0
      %p278 = por %p276, %p277
      %p279 = scmp.ne.s32.totalorder %s271, %s273
      %p280 = scmp.eq.s32.totalorder %s32, 1
      %p281 = por %p279, %p280
      %p282 = scmp.ne.s32.totalorder %s273, %s274
      %p283 = scmp.eq.s32.totalorder %s32, 0
      %p284 = por %p282, %p283
      %p285 = scmp.ne.s32.totalorder %s273, %s274
      %p286 = scmp.eq.s32.totalorder %s33, 1
      %p287 = por %p285, %p286
      %p289 = scmp.ne.s32.totalorder %s274, %s288
      %p290 = scmp.eq.s32.totalorder %s33, 0
      %p291 = por %p289, %p290
      %s292 = ssub.s32 %s27, %s34
      %p293 = scmp.eq.s32.totalorder %s292, 0
      %s295 = sadd.s32 %s294, 1
      %s296 = scalar_select %p293, %s294, %s295
      %p299 = pneg %p293
      %p300 = scmp.eq.s32.totalorder %s27, 1
      %p301 = por %p299, %p300
      %p302 = scmp.ne.s32.totalorder %s294, %s297
      %p303 = scmp.eq.s32.totalorder %s27, 0
      %p304 = por %p302, %p303
      %p305 = scmp.ne.s32.totalorder %s294, %s297
      %p306 = scmp.eq.s32.totalorder %s32, 1
      %p307 = por %p305, %p306
      %p308 = scmp.ne.s32.totalorder %s297, %s298
      %p309 = scmp.eq.s32.totalorder %s32, 0
      %p310 = por %p308, %p309
      %p311 = scmp.ne.s32.totalorder %s297, %s298
      %p312 = scmp.eq.s32.totalorder %s33, 1
      %p313 = por %p311, %p312
      %p315 = scmp.ne.s32.totalorder %s298, %s314
      %p316 = scmp.eq.s32.totalorder %s33, 0
      %p317 = por %p315, %p316
      %p318 = scmp.le.s32.totalorder 1, %s27
      %p319 = scmp.lt.s32.totalorder %s27, 3
      %p320 = pnand %p318, %p319
      %p321 = pneg %p320
      // Predicated region
      $region9: #{tpu_custom_call.1} parent=5 // pred_check
        _
      $region10: #{tpu_custom_call.1} parent=5 // pred_check_branch
        %323 = sbr.rel (%p320) target = $region12
      $region11: #{tpu_custom_call.1} parent=5 // pred_region
        %s324 = ssub.s32 %s27, 1
        // Predicated region
        $region13: #{tpu_custom_call.1} parent=11 // pred_check
          %p325 = pneg %p74
        $region14: #{tpu_custom_call.1} parent=11 // pred_check_branch
          %327 = sbr.rel (%p325) target = $region16
        $region15: #{tpu_custom_call.1} parent=11 // pred_region
          _
        $region16: #{tpu_custom_call.1} parent=11 // pred_fallthru
          _
        // Predicated region
        $region17: #{tpu_custom_call.1} parent=11 // pred_check
          %p328 = pneg %p95
        $region18: #{tpu_custom_call.1} parent=11 // pred_check_branch
          %330 = sbr.rel (%p328) target = $region20
        $region19: #{tpu_custom_call.1} parent=11 // pred_region
          _
        $region20: #{tpu_custom_call.1} parent=11 // pred_fallthru
          _
        // Predicated region
        $region21: #{tpu_custom_call.1} parent=11 // pred_check
          %p331 = pneg %p116
        $region22: #{tpu_custom_call.1} parent=11 // pred_check_branch
          %333 = sbr.rel (%p331) target = $region24
        $region23: #{tpu_custom_call.1} parent=11 // pred_region
          _
        $region24: #{tpu_custom_call.1} parent=11 // pred_fallthru
          _
        // Predicated region
        $region25: #{tpu_custom_call.1} parent=11 // pred_check
          %p334 = pneg %p137
        $region26: #{tpu_custom_call.1} parent=11 // pred_check_branch
          %336 = sbr.rel (%p334) target = $region28
        $region27: #{tpu_custom_call.1} parent=11 // pred_region
          _
        $region28: #{tpu_custom_call.1} parent=11 // pred_fallthru
          _
        // Predicated region
        $region29: #{tpu_custom_call.1} parent=11 // pred_check
          %p337 = pneg %p158
        $region30: #{tpu_custom_call.1} parent=11 // pred_check_branch
          %339 = sbr.rel (%p337) target = $region32
        $region31: #{tpu_custom_call.1} parent=11 // pred_region
          _
        $region32: #{tpu_custom_call.1} parent=11 // pred_fallthru
          _
        // Predicated region
        $region33: #{tpu_custom_call.1} parent=11 // pred_check
          %p340 = pneg %p179
        $region34: #{tpu_custom_call.1} parent=11 // pred_check_branch
          %342 = sbr.rel (%p340) target = $region36
        $region35: #{tpu_custom_call.1} parent=11 // pred_region
          _
        $region36: #{tpu_custom_call.1} parent=11 // pred_fallthru
          _
        // Predicated region
        $region37: #{tpu_custom_call.1} parent=11 // pred_check
          %p343 = pneg %p200
        $region38: #{tpu_custom_call.1} parent=11 // pred_check_branch
          %345 = sbr.rel (%p343) target = $region40
        $region39: #{tpu_custom_call.1} parent=11 // pred_region
          _
        $region40: #{tpu_custom_call.1} parent=11 // pred_fallthru
          _
        // Predicated region
        $region41: #{tpu_custom_call.1} parent=11 // pred_check
          %p346 = pneg %p221
        $region42: #{tpu_custom_call.1} parent=11 // pred_check_branch
          %348 = sbr.rel (%p346) target = $region44
        $region43: #{tpu_custom_call.1} parent=11 // pred_region
          %s350 = ssub.s32 3072, 3072
          %351 = vsyncadd [#allocation8], %s350
          %s352 = sshll.u32 [#allocation7], 4
          %s353 = int_to_ptr.vmem [resolvable:$true] %s352
          %358 = dma.hbm_to_vmem [thread:$0]  %s8, 3072, %s353, [#allocation8], 384, 384, 24
        $region44: #{tpu_custom_call.1} parent=11 // pred_fallthru
          _
        // Predicated region
        $region45: #{tpu_custom_call.1} parent=11 // pred_check
          %p359 = pneg %p242
        $region46: #{tpu_custom_call.1} parent=11 // pred_check_branch
          %361 = sbr.rel (%p359) target = $region48
        $region47: #{tpu_custom_call.1} parent=11 // pred_region
          _
        $region48: #{tpu_custom_call.1} parent=11 // pred_fallthru
          _
        // Predicated region
        $region49: #{tpu_custom_call.1} parent=11 // pred_check
          %p362 = pneg %p263
        $region50: #{tpu_custom_call.1} parent=11 // pred_check_branch
          %364 = sbr.rel (%p362) target = $region52
        $region51: #{tpu_custom_call.1} parent=11 // pred_region
          _
        $region52: #{tpu_custom_call.1} parent=11 // pred_fallthru
          _
        // Predicated region
        $region53: #{tpu_custom_call.1} parent=11 // pred_check
          %p365 = pneg %p284
        $region54: #{tpu_custom_call.1} parent=11 // pred_check_branch
          %367 = sbr.rel (%p365) target = $region56
        $region55: #{tpu_custom_call.1} parent=11 // pred_region
          _
        $region56: #{tpu_custom_call.1} parent=11 // pred_fallthru
          _
      $region12: #{tpu_custom_call.1} parent=5 // pred_fallthru
        _
      %p368 = scmp.lt.s32.totalorder %s27, 2
      // Predicated region
      $region57: #{tpu_custom_call.1} parent=5 // pred_check
        %p369 = pneg %p368
      $region58: #{tpu_custom_call.1} parent=5 // pred_check_branch
        %371 = sbr.rel (%p369) target = $region60
      $region59: #{tpu_custom_call.1} parent=5 // pred_region
        // Predicated region
        $region61: #{tpu_custom_call.1} parent=59 // pred_check
          %p372 = pneg %p47
        $region62: #{tpu_custom_call.1} parent=59 // pred_check_branch
          %374 = sbr.rel (%p372) target = $region64
        $region63: #{tpu_custom_call.1} parent=59 // pred_region
          %s375 = sand.u32 %s37, 1
          %s376 = scalar_lea.sflag [#allocation5], %s375
          %s377 = sand.u32 %s37, 1
          %s378 = smul.addr %s377, 64
          %s379 = scalar_lea.vmem [#allocation4], %s378
          %s381 = ssub.s32 1024, 1024
          %382 = vsyncadd %s376, %s381
          %s383 = smul.addr %s27, 8
          %s384 = smul.addr %s383, 128
          %s385 = scalar_lea.hbm %s0, %s384
          %s386 = sshll.u32 %s379, 4
          %s387 = int_to_ptr.vmem [resolvable:$true] %s386
          %392 = dma.hbm_to_vmem [thread:$0]  %s385, 1024, %s387, %s376, 128, 128, 8
        $region64: #{tpu_custom_call.1} parent=59 // pred_fallthru
          _
      $region60: #{tpu_custom_call.1} parent=5 // pred_fallthru
        _
      %p393 = scmp.le.s32.totalorder 1, %s27
      %p394 = scmp.lt.s32.totalorder %s27, 3
      %p395 = pnand %p393, %p394
      %p396 = pneg %p395
      // Predicated region
      $region65: #{tpu_custom_call.1} parent=5 // pred_check
        _
      $region66: #{tpu_custom_call.1} parent=5 // pred_check_branch
        %398 = sbr.rel (%p395) target = $region68
      $region67: #{tpu_custom_call.1} parent=5 // pred_region
        %s399 = ssub.s32 %s27, 1
        %s400 = sand.u32 %s40, 1
        %s401 = scalar_lea.sflag [#allocation5], %s400
        %s402 = sand.u32 %s40, 1
        %s403 = smul.addr %s402, 64
        %s404 = scalar_lea.vmem [#allocation4], %s403
        // Predicated region
        $region69: #{tpu_custom_call.1} parent=67 // pred_check
          %p405 = pneg %p53
        $region70: #{tpu_custom_call.1} parent=67 // pred_check_branch
          %407 = sbr.rel (%p405) target = $region72
        $region71: #{tpu_custom_call.1} parent=67 // pred_region
          %408 = dma.done %s401, 1024
        $region72: #{tpu_custom_call.1} parent=67 // pred_fallthru
          _
        // Predicated region
        $region73: #{tpu_custom_call.1} parent=67 // pred_check
          %p409 = pneg %p221
        $region74: #{tpu_custom_call.1} parent=67 // pred_check_branch
          %411 = sbr.rel (%p409) target = $region76
        $region75: #{tpu_custom_call.1} parent=67 // pred_region
          %412 = dma.done [#allocation8], 3072
        $region76: #{tpu_custom_call.1} parent=67 // pred_fallthru
          _
        %s413 = sand.u32 %s40, 1
        %s414 = scalar_lea.sflag [#allocation5], %s413
        %s415 = sand.u32 %s40, 1
        %s416 = smul.addr %s415, 64
        %s417 = scalar_lea.vmem [#allocation4], %s416
        %p418 = pneg %p53
        %p419 = pneg %p50
        %p420 = pneg %p74
        %p421 = pneg %p71
        %p422 = pneg %p95
        %p423 = pneg %p92
        %p424 = pneg %p116
        %p425 = pneg %p113
        %p426 = pneg %p137
        %p427 = pneg %p134
        %p428 = pneg %p158
        %p429 = pneg %p155
        %p430 = pneg %p179
        %p431 = pneg %p176
        %p432 = pneg %p200
        %p433 = pneg %p197
        %p434 = pneg %p221
        %p435 = pneg %p218
        %p436 = pneg %p242
        %p437 = pneg %p239
        %p438 = pneg %p263
        %p439 = pneg %p260
        %p440 = pneg %p284
        %p441 = pneg %p281
        %p442 = pneg %p310
        %p443 = pneg %p307
        %s444 = sand.u32 %s297, 1
        %s445 = scalar_lea.sflag [#allocation6], %s444
        %s446 = sand.u32 %s297, 1
        %s447 = smul.addr %s446, 3
        %s448 = scalar_lea.vmem [#allocation9], %s447
        %449 = vst [vmem:[#allocation2] sm:$0xff] 0.0
        %vm450 = vcmask 551936
        %451 = vst.msk [vmem:[#allocation2 + $0x8] sm:$0xf] %vm450, 0.0
        %v452 = vld [vmem:[%s404] sm:$0x1]
        %v453 = vld [vmem:[%s404 + $0x10] sm:$0x1]
        %v454 = vld [vmem:[%s404 + $0x20] sm:$0x1]
        %v455 = vld [vmem:[%s404 + $0x30] sm:$0x1]
        %v460 = vrot.slane %v453, 7
        %vm461 = vcmask 1041409
        %v462 = vsel %vm461, %v460, %v452
        %vm463 = vcmask 1045509
        %v464 = vsel %vm463, %v460, %v462
        %v465 = vrot.slane %v454, 6
        %vm466 = vcmask 1042434
        %v467 = vsel %vm466, %v465, %v464
        %vm468 = vcmask 1046534
        %v469 = vsel %vm468, %v465, %v467
        %v470 = vrot.slane %v455, 5
        %vm471 = vcmask 1043459
        %v472 = vsel %vm471, %v470, %v469
        %vm473 = vcmask 1047559
        %v474 = vsel %vm473, %v470, %v472
        %475 = vrot.lane.b32.xlu0 %v474, 19
        %v476 = vpop.permute.xlu0 %475
        %vm478 = vcmask 281752
        %479 = vst.msk [vmem:[#allocation2] sm:$0xf] %vm478, %v476
        %v480 = vld [vmem:[%s404 + $0x1] sm:$0x1]
        %v481 = vld [vmem:[%s404 + $0x11] sm:$0x1]
        %v482 = vld [vmem:[%s404 + $0x21] sm:$0x1]
        %v483 = vld [vmem:[%s404 + $0x31] sm:$0x1]
        %v488 = vrot.slane %v481, 7
        %v489 = vsel %vm461, %v488, %v480
        %v490 = vsel %vm463, %v488, %v489
        %v491 = vrot.slane %v482, 6
        %v492 = vsel %vm466, %v491, %v490
        %v493 = vsel %vm468, %v491, %v492
        %v494 = vrot.slane %v483, 5
        %v495 = vsel %vm471, %v494, %v493
        %v496 = vsel %vm473, %v494, %v495
        %497 = vrot.lane.b32.xlu0 %v496, 37
        %v498 = vpop.permute.xlu0 %497
        %vm500 = vcmask 429352
        %501 = vst.msk [vmem:[#allocation2] sm:$0xf] %vm500, %v498
        %v502 = vld [vmem:[%s404 + $0x2] sm:$0x1]
        %v503 = vld [vmem:[%s404 + $0x12] sm:$0x1]
        %v504 = vld [vmem:[%s404 + $0x22] sm:$0x1]
        %v505 = vld [vmem:[%s404 + $0x32] sm:$0x1]
        %v510 = vrot.slane %v503, 7
        %v511 = vsel %vm461, %v510, %v502
        %v512 = vsel %vm463, %v510, %v511
        %v513 = vrot.slane %v504, 6
        %v514 = vsel %vm466, %v513, %v512
        %v515 = vsel %vm468, %v513, %v514
        %v516 = vrot.slane %v505, 5
        %v517 = vsel %vm471, %v516, %v515
        %v518 = vsel %vm473, %v516, %v517
        %519 = vrot.lane.b32.xlu0 %v518, 55
        %v520 = vpop.permute.xlu0 %519
        %vm522 = vcmask 576952
        %523 = vst.msk [vmem:[#allocation2] sm:$0xf] %vm522, %v520
        %v524 = vld [vmem:[%s404 + $0x3] sm:$0x1]
        %v525 = vld [vmem:[%s404 + $0x13] sm:$0x1]
        %v526 = vld [vmem:[%s404 + $0x23] sm:$0x1]
        %v527 = vld [vmem:[%s404 + $0x33] sm:$0x1]
        %v532 = vrot.slane %v525, 7
        %v533 = vsel %vm461, %v532, %v524
        %v534 = vsel %vm463, %v532, %v533
        %v535 = vrot.slane %v526, 6
        %v536 = vsel %vm466, %v535, %v534
        %v537 = vsel %vm468, %v535, %v536
        %v538 = vrot.slane %v527, 5
        %v539 = vsel %vm471, %v538, %v537
        %v540 = vsel %vm473, %v538, %v539
        %541 = vrot.lane.b32.xlu0 %v540, 73
        %v542 = vpop.permute.xlu0 %541
        %vm544 = vcmask 724552
        %545 = vst.msk [vmem:[#allocation2] sm:$0xf] %vm544, %v542
        %v546 = vld [vmem:[%s404 + $0x4] sm:$0x1]
        %v547 = vld [vmem:[%s404 + $0x14] sm:$0x1]
        %v548 = vld [vmem:[%s404 + $0x24] sm:$0x1]
        %v549 = vld [vmem:[%s404 + $0x34] sm:$0x1]
        %v554 = vrot.slane %v547, 7
        %v555 = vsel %vm461, %v554, %v546
        %v556 = vsel %vm463, %v554, %v555
        %v557 = vrot.slane %v548, 6
        %v558 = vsel %vm466, %v557, %v556
        %v559 = vsel %vm468, %v557, %v558
        %v560 = vrot.slane %v549, 5
        %v561 = vsel %vm471, %v560, %v559
        %v562 = vsel %vm473, %v560, %v561
        %563 = vrot.lane.b32.xlu0 %v562, 91
        %v564 = vpop.permute.xlu0 %563
        %vm566 = vcmask 872152
        %567 = vst.msk [vmem:[#allocation2] sm:$0xf] %vm566, %v564
        %v568 = vld [vmem:[%s404 + $0x5] sm:$0x1]
        %v569 = vld [vmem:[%s404 + $0x15] sm:$0x1]
        %v570 = vld [vmem:[%s404 + $0x25] sm:$0x1]
        %v571 = vld [vmem:[%s404 + $0x35] sm:$0x1]
        %v576 = vrot.slane %v569, 7
        %v577 = vsel %vm461, %v576, %v568
        %v578 = vsel %vm463, %v576, %v577
        %v579 = vrot.slane %v570, 6
        %v580 = vsel %vm466, %v579, %v578
        %v581 = vsel %vm468, %v579, %v580
        %v582 = vrot.slane %v571, 5
        %v583 = vsel %vm471, %v582, %v581
        %v584 = vsel %vm473, %v582, %v583
        %585 = vrot.lane.b32.xlu0 %v584, 109
        %v586 = vpop.permute.xlu0 %585
        %vm588 = vcmask 1019752
        %589 = vst.msk [vmem:[#allocation2] sm:$0xf] %vm588, %v586
        %v590 = vld [vmem:[%s404 + $0x6] sm:$0x1]
        %v591 = vld [vmem:[%s404 + $0x16] sm:$0x1]
        %v592 = vld [vmem:[%s404 + $0x26] sm:$0x1]
        %v593 = vld [vmem:[%s404 + $0x36] sm:$0x1]
        %v598 = vrot.slane %v591, 7
        %v599 = vsel %vm461, %v598, %v590
        %v600 = vsel %vm463, %v598, %v599
        %v601 = vrot.slane %v592, 6
        %v602 = vsel %vm466, %v601, %v600
        %v603 = vsel %vm468, %v601, %v602
        %v604 = vrot.slane %v593, 5
        %v605 = vsel %vm471, %v604, %v603
        %v606 = vsel %vm473, %v604, %v605
        %607 = vrot.lane.b32.xlu0 %v606, 127
        %v608 = vpop.permute.xlu0 %607
        %v609 = vrot.slane %v608, 4
        %vm610 = vcmask 1039360
        %v611 = vsel %vm610, %v609, %v608
        %vm613 = vcmask 1044472
        %vm614 = vcmask 121860
        %vm615 = vmor %vm614, %vm613
        %616 = vst.msk [vmem:[#allocation2] sm:$0xff] %vm615, %v611
        %v617 = vld [vmem:[%s404 + $0x7] sm:$0x1]
        %v618 = vld [vmem:[%s404 + $0x17] sm:$0x1]
        %v619 = vld [vmem:[%s404 + $0x27] sm:$0x1]
        %v620 = vld [vmem:[%s404 + $0x37] sm:$0x1]
        %v625 = vrot.slane %v618, 7
        %v626 = vsel %vm461, %v625, %v617
        %v627 = vsel %vm463, %v625, %v626
        %v628 = vrot.slane %v619, 6
        %v629 = vsel %vm466, %v628, %v627
        %v630 = vsel %vm468, %v628, %v629
        %v631 = vrot.slane %v620, 5
        %v632 = vsel %vm471, %v631, %v630
        %v633 = vsel %vm473, %v631, %v632
        %634 = vrot.lane.b32.xlu0 %v633, 17
        %v635 = vpop.permute.xlu0 %634
        %vm637 = vcmask 265352
        %638 = vst.msk [vmem:[#allocation2 + $0x4] sm:$0xf] %vm637, %v635
        %v639 = vld [vmem:[%s404 + $0x8] sm:$0x1]
        %v640 = vld [vmem:[%s404 + $0x18] sm:$0x1]
        %v641 = vld [vmem:[%s404 + $0x28] sm:$0x1]
        %v642 = vld [vmem:[%s404 + $0x38] sm:$0x1]
        %v647 = vrot.slane %v640, 7
        %v648 = vsel %vm461, %v647, %v639
        %v649 = vsel %vm463, %v647, %v648
        %v650 = vrot.slane %v641, 6
        %v651 = vsel %vm466, %v650, %v649
        %v652 = vsel %vm468, %v650, %v651
        %v653 = vrot.slane %v642, 5
        %v654 = vsel %vm471, %v653, %v652
        %v655 = vsel %vm473, %v653, %v654
        %656 = vrot.lane.b32.xlu0 %v655, 35
        %v657 = vpop.permute.xlu0 %656
        %vm659 = vcmask 412952
        %660 = vst.msk [vmem:[#allocation2 + $0x4] sm:$0xf] %vm659, %v657
        %v661 = vld [vmem:[%s404 + $0x9] sm:$0x1]
        %v662 = vld [vmem:[%s404 + $0x19] sm:$0x1]
        %v663 = vld [vmem:[%s404 + $0x29] sm:$0x1]
        %v664 = vld [vmem:[%s404 + $0x39] sm:$0x1]
        %v669 = vrot.slane %v662, 7
        %v670 = vsel %vm461, %v669, %v661
        %v671 = vsel %vm463, %v669, %v670
        %v672 = vrot.slane %v663, 6
        %v673 = vsel %vm466, %v672, %v671
        %v674 = vsel %vm468, %v672, %v673
        %v675 = vrot.slane %v664, 5
        %v676 = vsel %vm471, %v675, %v674
        %v677 = vsel %vm473, %v675, %v676
        %678 = vrot.lane.b32.xlu0 %v677, 53
        %v679 = vpop.permute.xlu0 %678
        %vm681 = vcmask 560552
        %682 = vst.msk [vmem:[#allocation2 + $0x4] sm:$0xf] %vm681, %v679
        %v683 = vld [vmem:[%s404 + $0xa] sm:$0x1]
        %v684 = vld [vmem:[%s404 + $0x1a] sm:$0x1]
        %v685 = vld [vmem:[%s404 + $0x2a] sm:$0x1]
        %v686 = vld [vmem:[%s404 + $0x3a] sm:$0x1]
        %v691 = vrot.slane %v684, 7
        %v692 = vsel %vm461, %v691, %v683
        %v693 = vsel %vm463, %v691, %v692
        %v694 = vrot.slane %v685, 6
        %v695 = vsel %vm466, %v694, %v693
        %v696 = vsel %vm468, %v694, %v695
        %v697 = vrot.slane %v686, 5
        %v698 = vsel %vm471, %v697, %v696
        %v699 = vsel %vm473, %v697, %v698
        %700 = vrot.lane.b32.xlu0 %v699, 71
        %v701 = vpop.permute.xlu0 %700
        %vm703 = vcmask 708152
        %704 = vst.msk [vmem:[#allocation2 + $0x4] sm:$0xf] %vm703, %v701
        %v705 = vld [vmem:[%s404 + $0xb] sm:$0x1]
        %v706 = vld [vmem:[%s404 + $0x1b] sm:$0x1]
        %v707 = vld [vmem:[%s404 + $0x2b] sm:$0x1]
        %v708 = vld [vmem:[%s404 + $0x3b] sm:$0x1]
        %v713 = vrot.slane %v706, 7
        %v714 = vsel %vm461, %v713, %v705
        %v715 = vsel %vm463, %v713, %v714
        %v716 = vrot.slane %v707, 6
        %v717 = vsel %vm466, %v716, %v715
        %v718 = vsel %vm468, %v716, %v717
        %v719 = vrot.slane %v708, 5
        %v720 = vsel %vm471, %v719, %v718
        %v721 = vsel %vm473, %v719, %v720
        %722 = vrot.lane.b32.xlu0 %v721, 89
        %v723 = vpop.permute.xlu0 %722
        %vm725 = vcmask 855752
        %726 = vst.msk [vmem:[#allocation2 + $0x4] sm:$0xf] %vm725, %v723
        %v727 = vld [vmem:[%s404 + $0xc] sm:$0x1]
        %v728 = vld [vmem:[%s404 + $0x1c] sm:$0x1]
        %v729 = vld [vmem:[%s404 + $0x2c] sm:$0x1]
        %v730 = vld [vmem:[%s404 + $0x3c] sm:$0x1]
        %v735 = vrot.slane %v728, 7
        %v736 = vsel %vm461, %v735, %v727
        %v737 = vsel %vm463, %v735, %v736
        %v738 = vrot.slane %v729, 6
        %v739 = vsel %vm466, %v738, %v737
        %v740 = vsel %vm468, %v738, %v739
        %v741 = vrot.slane %v730, 5
        %v742 = vsel %vm471, %v741, %v740
        %v743 = vsel %vm473, %v741, %v742
        %744 = vrot.lane.b32.xlu0 %v743, 107
        %v745 = vpop.permute.xlu0 %744
        %vm747 = vcmask 1003352
        %748 = vst.msk [vmem:[#allocation2 + $0x4] sm:$0xf] %vm747, %v745
        %v749 = vld [vmem:[%s404 + $0xd] sm:$0x1]
        %v750 = vld [vmem:[%s404 + $0x1d] sm:$0x1]
        %v751 = vld [vmem:[%s404 + $0x2d] sm:$0x1]
        %v752 = vld [vmem:[%s404 + $0x3d] sm:$0x1]
        %v757 = vrot.slane %v750, 7
        %v758 = vsel %vm461, %v757, %v749
        %v759 = vsel %vm463, %v757, %v758
        %v760 = vrot.slane %v751, 6
        %v761 = vsel %vm466, %v760, %v759
        %v762 = vsel %vm468, %v760, %v761
        %v763 = vrot.slane %v752, 5
        %v764 = vsel %vm471, %v763, %v762
        %v765 = vsel %vm473, %v763, %v764
        %766 = vrot.lane.b32.xlu0 %v765, 125
        %v767 = vpop.permute.xlu0 %766
        %v768 = vrot.slane %v767, 4
        %vm769 = vcmask 1022976
        %v770 = vsel %vm769, %v768, %v767
        %vm772 = vcmask 1044456
        %vm773 = vcmask 105476
        %vm774 = vmor %vm773, %vm772
        %775 = vst.msk [vmem:[#allocation2 + $0x4] sm:$0xff] %vm774, %v770
        %v776 = vld [vmem:[%s404 + $0xe] sm:$0x1]
        %v777 = vld [vmem:[%s404 + $0x1e] sm:$0x1]
        %v778 = vld [vmem:[%s404 + $0x2e] sm:$0x1]
        %v779 = vld [vmem:[%s404 + $0x3e] sm:$0x1]
        %v784 = vrot.slane %v777, 7
        %v785 = vsel %vm461, %v784, %v776
        %v786 = vsel %vm463, %v784, %v785
        %v787 = vrot.slane %v778, 6
        %v788 = vsel %vm466, %v787, %v786
        %v789 = vsel %vm468, %v787, %v788
        %v790 = vrot.slane %v779, 5
        %v791 = vsel %vm471, %v790, %v789
        %v792 = vsel %vm473, %v790, %v791
        %793 = vrot.lane.b32.xlu0 %v792, 15
        %v794 = vpop.permute.xlu0 %793
        %vm796 = vcmask 248952
        %797 = vst.msk [vmem:[#allocation2 + $0x8] sm:$0xf] %vm796, %v794
        %v798 = vld [vmem:[%s404 + $0xf] sm:$0x1]
        %v799 = vld [vmem:[%s404 + $0x1f] sm:$0x1]
        %v800 = vld [vmem:[%s404 + $0x2f] sm:$0x1]
        %v801 = vld [vmem:[%s404 + $0x3f] sm:$0x1]
        %v806 = vrot.slane %v799, 7
        %v807 = vsel %vm461, %v806, %v798
        %v808 = vsel %vm463, %v806, %v807
        %v809 = vrot.slane %v800, 6
        %v810 = vsel %vm466, %v809, %v808
        %v811 = vsel %vm468, %v809, %v810
        %v812 = vrot.slane %v801, 5
        %v813 = vsel %vm471, %v812, %v811
        %v814 = vsel %vm473, %v812, %v813
        %815 = vrot.lane.b32.xlu0 %v814, 33
        %v816 = vpop.permute.xlu0 %815
        %vm818 = vcmask 396552
        %819 = vst.msk [vmem:[#allocation2 + $0x8] sm:$0xf] %vm818, %v816
        %v820 = vld [vmem:[#allocation2] sm:$0xff]
        %v821 = vld [vmem:[#allocation2 + $0x8] sm:$0xf]
        %v822 = vld [vmem:[%s1] sm:$0x7]
        %v823 = vld [vmem:[%s2] sm:$0xff]
        %v824 = vld [vmem:[%s3] sm:$0xff]
        %v827 = vcombine.high %v820, %v820
        %828 = vrot.lane.b32.xlu0 %v820, 19
        %v829 = vpop.permute.xlu0 %828
        %830 = vrot.lane.b32.xlu0 %v827, 19
        %v831 = vpop.permute.xlu0 %830
        %832 = vrot.lane.b32.xlu0 %v821, 19
        %v833 = vpop.permute.xlu0 %832
        %vm834 = vcmask 154624
        %v835 = vsel %vm834, %v829, %v831
        %v836 = vsel %vm834, %v831, %v833
        %v840 = vsel %vm834, 0.0, %v829
        %vm841 = vcmask 711680
        %v842 = vsel %vm841, %v836, 0.0
        %v845 = vrot.slane %v840, 4
        %v846 = vrot.slane %v835, 4
        %v847 = vrot.slane %v842, 4
        %848 = vrot.lane.b32.xlu0 %v845, 127
        %v849 = vpop.permute.xlu0 %848
        %850 = vrot.lane.b32.xlu0 %v846, 127
        %v851 = vpop.permute.xlu0 %850
        %852 = vrot.lane.b32.xlu0 %v847, 127
        %v853 = vpop.permute.xlu0 %852
        %v854 = vsel %vm610, %v849, %v851
        %v855 = vsel %vm610, %v851, %v853
        %859 = vrot.lane.b32.xlu0 %v840, 126
        %v860 = vpop.permute.xlu0 %859
        %861 = vrot.lane.b32.xlu0 %v835, 126
        %v862 = vpop.permute.xlu0 %861
        %863 = vrot.lane.b32.xlu0 %v842, 126
        %v864 = vpop.permute.xlu0 %863
        %vm865 = vcmask 1031168
        %v866 = vsel %vm865, %v860, %v862
        %v867 = vsel %vm865, %v862, %v864
        %871 = vrot.lane.b32.xlu0 %v845, 110
        %v872 = vpop.permute.xlu0 %871
        %873 = vrot.lane.b32.xlu0 %v846, 110
        %v874 = vpop.permute.xlu0 %873
        %875 = vrot.lane.b32.xlu0 %v847, 110
        %v876 = vpop.permute.xlu0 %875
        %vm877 = vcmask 900096
        %v878 = vsel %vm877, %v872, %v874
        %v879 = vsel %vm877, %v874, %v876
        %883 = vrot.lane.b32.xlu0 %v840, 109
        %v884 = vpop.permute.xlu0 %883
        %885 = vrot.lane.b32.xlu0 %v835, 109
        %v886 = vpop.permute.xlu0 %885
        %887 = vrot.lane.b32.xlu0 %v842, 109
        %v888 = vpop.permute.xlu0 %887
        %vm889 = vcmask 891904
        %v890 = vsel %vm889, %v884, %v886
        %v891 = vsel %vm889, %v886, %v888
        %895 = vrot.lane.b32.xlu0 %v845, 108
        %v896 = vpop.permute.xlu0 %895
        %897 = vrot.lane.b32.xlu0 %v846, 108
        %v898 = vpop.permute.xlu0 %897
        %899 = vrot.lane.b32.xlu0 %v847, 108
        %v900 = vpop.permute.xlu0 %899
        %vm901 = vcmask 883712
        %v902 = vsel %vm901, %v896, %v898
        %v903 = vsel %vm901, %v898, %v900
        %907 = vrot.lane.b32.xlu0 %v840, 92
        %v908 = vpop.permute.xlu0 %907
        %909 = vrot.lane.b32.xlu0 %v835, 92
        %v910 = vpop.permute.xlu0 %909
        %911 = vrot.lane.b32.xlu0 %v842, 92
        %v912 = vpop.permute.xlu0 %911
        %vm913 = vcmask 752640
        %v914 = vsel %vm913, %v908, %v910
        %v915 = vsel %vm913, %v910, %v912
        %919 = vrot.lane.b32.xlu0 %v845, 91
        %v920 = vpop.permute.xlu0 %919
        %921 = vrot.lane.b32.xlu0 %v846, 91
        %v922 = vpop.permute.xlu0 %921
        %923 = vrot.lane.b32.xlu0 %v847, 91
        %v924 = vpop.permute.xlu0 %923
        %vm925 = vcmask 744448
        %v926 = vsel %vm925, %v920, %v922
        %v927 = vsel %vm925, %v922, %v924
        %931 = vrot.lane.b32.xlu0 %v840, 90
        %v932 = vpop.permute.xlu0 %931
        %933 = vrot.lane.b32.xlu0 %v835, 90
        %v934 = vpop.permute.xlu0 %933
        %935 = vrot.lane.b32.xlu0 %v842, 90
        %v936 = vpop.permute.xlu0 %935
        %vm937 = vcmask 736256
        %v938 = vsel %vm937, %v932, %v934
        %v939 = vsel %vm937, %v934, %v936
        %vm940 = vcmask 1043456
        %v941 = vsel %vm940, %v840, %v854
        %v942 = vsel %vm940, %v835, %v855
        %v943 = vsel %vm940, %v842, %v853
        %v944 = vsel %vm940, %v866, %v878
        %v945 = vsel %vm940, %v867, %v879
        %v946 = vsel %vm940, %v864, %v876
        %v947 = vsel %vm940, %v890, %v902
        %v948 = vsel %vm940, %v891, %v903
        %v949 = vsel %vm940, %v888, %v900
        %v950 = vsel %vm940, %v914, %v926
        %v951 = vsel %vm940, %v915, %v927
        %v952 = vsel %vm940, %v912, %v924
        %954 = vset.pattern.permute.xlu0 0
        %955 = vperm.xlu0 %954, %v824
        %v956 = vpop.permute.xlu0 %955
        %vm958 = vcmask 293888
        %v960 = vsel %vm958, %v823, 0
        %v962 = vsel %vm940, %v938, 0
        %v964 = vsel %vm940, %v939, 0
        %v966 = vsel %vm940, %v936, 0
        %968 = vmatprep.subr.mxu0 0.0
        %969 = vmatpush1.msra.mxu0 0.0
        %970 = vmatprep.subr.mxu0 0.0
        %971 = vmatpush1.msra.mxu0 0.0
        %972 = vmatprep.subr.mxu0 0.0
        %973 = vmatpush1.msra.mxu0 0.0
        %974 = vmatprep.subr.mxu0 0.0
        %975 = vmatpush1.msra.mxu0 0.0
        %976 = vmatprep.subr.mxu0 0.0
        %977 = vmatpush1.msra.mxu0 0.0
        %978 = vmatprep.subr.mxu0 0.0
        %979 = vmatpush1.msra.mxu0 0.0
        %980 = vmatprep.subr.mxu0 0.0
        %981 = vmatpush1.msra.mxu0 0.0
        %982 = vmatprep.subr.mxu0 0.0
        %983 = vmatpush1.msra.mxu0 0.0
        %984 = vmatprep.subr.mxu0 0.0
        %985 = vmatpush1.msra.mxu0 0.0
        %986 = vmatprep.subr.mxu0 0.0
        %987 = vmatpush1.msra.mxu0 0.0
        %988 = vmatprep.subr.mxu0 0.0
        %989 = vmatpush1.msra.mxu0 0.0
        %990 = vmatprep.subr.mxu0 %v964
        %991 = vmatpush1.msra.mxu0 %v962
        %992 = vmatprep.subr.mxu0 %v951
        %993 = vmatpush1.msra.mxu0 %v950
        %994 = vmatprep.subr.mxu0 %v948
        %995 = vmatpush1.msra.mxu0 %v947
        %996 = vmatprep.subr.mxu0 %v945
        %997 = vmatpush1.msra.mxu0 %v944
        %998 = vmatprep.subr.mxu0 %v942
        %999 = vmatpush1.msra.mxu0 %v941
        %1000 = vmatprep.subr.mxu0 0.0
        %1001 = vmatpush2.msra.mxu0 0.0
        %1002 = vmatprep.subr.mxu0 0.0
        %1003 = vmatpush2.msra.mxu0 0.0
        %1004 = vmatprep.subr.mxu0 0.0
        %1005 = vmatpush2.msra.mxu0 0.0
        %1006 = vmatprep.subr.mxu0 0.0
        %1007 = vmatpush2.msra.mxu0 0.0
        %1008 = vmatprep.subr.mxu0 0.0
        %1009 = vmatpush2.msra.mxu0 0.0
        %1010 = vmatprep.subr.mxu0 0.0
        %1011 = vmatpush2.msra.mxu0 0.0
        %1012 = vmatprep.subr.mxu0 0.0
        %1013 = vmatpush2.msra.mxu0 0.0
        %1014 = vmatprep.subr.mxu0 0.0
        %1015 = vmatpush2.msra.mxu0 0.0
        %1016 = vmatprep.subr.mxu0 0.0
        %1017 = vmatpush2.msra.mxu0 0.0
        %1018 = vmatprep.subr.mxu0 0.0
        %1019 = vmatpush2.msra.mxu0 0.0
        %1020 = vmatprep.subr.mxu0 0.0
        %1021 = vmatpush2.msra.mxu0 0.0
        %1022 = vmatprep.subr.mxu0 0.0
        %1023 = vmatpush2.msra.mxu0 0.0
        %1024 = vmatprep.subr.mxu0 0.0
        %1025 = vmatpush2.msra.mxu0 0.0
        %1026 = vmatprep.subr.mxu0 0.0
        %1027 = vmatpush2.msra.mxu0 0.0
        %1028 = vmatprep.subr.mxu0 0.0
        %1029 = vmatpush2.msra.mxu0 0.0
        %1030 = vmatprep.subr.mxu0 0.0
        %1031 = vmatpush2.msra.mxu0 0.0
        %1032 = vmatprep.mubr.f32.mxu0 0.0
        %1033 = vmatmul.mubr.f32.gmra.mxu0 %v960
        %v1034 = vpop.f32.mrf.mxu0
        %v1035 = vadd.f32 %v956, %v1034
        %v1036 = vpop.f32.mrf.mxu0
        %v1037 = vadd.f32 %v956, %v1036
        %1038 = vdwg.mxu0
        %1039 = vmatprep.subr.mxu0 0.0
        %1040 = vmatpush1.msra.mxu0 0.0
        %1041 = vmatprep.subr.mxu0 0.0
        %1042 = vmatpush1.msra.mxu0 0.0
        %1043 = vmatprep.subr.mxu0 0.0
        %1044 = vmatpush1.msra.mxu0 0.0
        %1045 = vmatprep.subr.mxu0 0.0
        %1046 = vmatpush1.msra.mxu0 0.0
        %1047 = vmatprep.subr.mxu0 0.0
        %1048 = vmatpush1.msra.mxu0 0.0
        %1049 = vmatprep.subr.mxu0 0.0
        %1050 = vmatpush1.msra.mxu0 0.0
        %1051 = vmatprep.subr.mxu0 0.0
        %1052 = vmatpush1.msra.mxu0 0.0
        %1053 = vmatprep.subr.mxu0 0.0
        %1054 = vmatpush1.msra.mxu0 0.0
        %1055 = vmatprep.subr.mxu0 0.0
        %1056 = vmatpush1.msra.mxu0 0.0
        %1057 = vmatprep.subr.mxu0 0.0
        %1058 = vmatpush1.msra.mxu0 0.0
        %1059 = vmatprep.subr.mxu0 0.0
        %1060 = vmatpush1.msra.mxu0 0.0
        %1061 = vmatprep.subr.mxu0 0.0
        %1062 = vmatpush1.msra.mxu0 %v966
        %1063 = vmatprep.subr.mxu0 0.0
        %1064 = vmatpush1.msra.mxu0 %v952
        %1065 = vmatprep.subr.mxu0 0.0
        %1066 = vmatpush1.msra.mxu0 %v949
        %1067 = vmatprep.subr.mxu0 0.0
        %1068 = vmatpush1.msra.mxu0 %v946
        %1069 = vmatprep.subr.mxu0 0.0
        %1070 = vmatpush1.msra.mxu0 %v943
        %1071 = vmatprep.subr.mxu0 0.0
        %1072 = vmatpush2.msra.mxu0 0.0
        %1073 = vmatprep.subr.mxu0 0.0
        %1074 = vmatpush2.msra.mxu0 0.0
        %1075 = vmatprep.subr.mxu0 0.0
        %1076 = vmatpush2.msra.mxu0 0.0
        %1077 = vmatprep.subr.mxu0 0.0
        %1078 = vmatpush2.msra.mxu0 0.0
        %1079 = vmatprep.subr.mxu0 0.0
        %1080 = vmatpush2.msra.mxu0 0.0
        %1081 = vmatprep.subr.mxu0 0.0
        %1082 = vmatpush2.msra.mxu0 0.0
        %1083 = vmatprep.subr.mxu0 0.0
        %1084 = vmatpush2.msra.mxu0 0.0
        %1085 = vmatprep.subr.mxu0 0.0
        %1086 = vmatpush2.msra.mxu0 0.0
        %1087 = vmatprep.subr.mxu0 0.0
        %1088 = vmatpush2.msra.mxu0 0.0
        %1089 = vmatprep.subr.mxu0 0.0
        %1090 = vmatpush2.msra.mxu0 0.0
        %1091 = vmatprep.subr.mxu0 0.0
        %1092 = vmatpush2.msra.mxu0 0.0
        %1093 = vmatprep.subr.mxu0 0.0
        %1094 = vmatpush2.msra.mxu0 0.0
        %1095 = vmatprep.subr.mxu0 0.0
        %1096 = vmatpush2.msra.mxu0 0.0
        %1097 = vmatprep.subr.mxu0 0.0
        %1098 = vmatpush2.msra.mxu0 0.0
        %1099 = vmatprep.subr.mxu0 0.0
        %1100 = vmatpush2.msra.mxu0 0.0
        %1101 = vmatprep.subr.mxu0 0.0
        %1102 = vmatpush2.msra.mxu0 0.0
        %1103 = vmatprep.mubr.f32.mxu0 0.0
        %1104 = vmatmul.mubr.f32.gmra.mxu0 %v960
        %v1105 = vpop.f32.mrf.mxu0
        %v1106 = vadd.f32 %v956, %v1105
        %v1107 = vpop.f32.mrf.mxu0
        %1108 = vdwg.mxu0
        %vm1109 = vcmp.gt.f32.partialorder %v1035, 0.0
        %vm1110 = vcmp.gt.f32.partialorder %v1037, 0.0
        %vm1111 = vcmp.gt.f32.partialorder %v1106, 0.0
        %v1112 = vmul.f32 %v1035, 0.2
        %v1113 = vmul.f32 %v1037, 0.2
        %v1114 = vmul.f32 %v1106, 0.2
        %v1115 = vsel %vm1109, %v1035, %v1112
        %v1116 = vsel %vm1110, %v1037, %v1113
        %v1117 = vsel %vm1111, %v1106, %v1114
        %v1119 = vlaneseq
        %v1120 = vshrl.u32 %v1119, 7
        %v1121 = vsub.s32 0, %v1120
        %v1122 = vrot.slane %v822, %v1121
        %v1123 = vlaneseq
        %v1124 = vshrl.u32 %v1123, 7
        %v1125 = vsub.s32 1, %v1124
        %v1126 = vrot.slane %v822, %v1125
        %v1127 = vlaneseq
        %v1128 = vshrl.u32 %v1127, 7
        %v1129 = vsub.s32 2, %v1128
        %v1130 = vrot.slane %v822, %v1129
        %v1134 = vmul.f32 %v1115, %v1122
        %v1135 = vmul.f32 %v1116, %v1126
        %v1136 = vmul.f32 %v1117, %v1130
        %v1137 = vld [vmem:[%s4] sm:$0xff]
        %v1138 = vld [vmem:[%s4 + $0x8] sm:$0xff]
        %v1139 = vld [vmem:[%s5] sm:$0xff]
        %v1140 = vld [vmem:[%s5 + $0x8] sm:$0xff]
        %1144 = vrot.lane.b32.xlu0 %v1134, 19
        %v1145 = vpop.permute.xlu0 %1144
        %1146 = vrot.lane.b32.xlu0 %v1135, 19
        %v1147 = vpop.permute.xlu0 %1146
        %1148 = vrot.lane.b32.xlu0 %v1136, 19
        %v1149 = vpop.permute.xlu0 %1148
        %v1150 = vsel %vm834, %v1145, %v1147
        %v1151 = vsel %vm834, %v1147, %v1149
        %v1155 = vsel %vm834, 0.0, %v1145
        %v1156 = vsel %vm841, %v1151, 0.0
        %1159 = vrot.lane.b32.xlu0 %v1155, 127
        %v1160 = vpop.permute.xlu0 %1159
        %1161 = vrot.lane.b32.xlu0 %v1150, 127
        %v1162 = vpop.permute.xlu0 %1161
        %1163 = vrot.lane.b32.xlu0 %v1156, 127
        %v1164 = vpop.permute.xlu0 %1163
        %v1165 = vsel %vm610, %v1160, %v1162
        %v1166 = vsel %vm610, %v1162, %v1164
        %1170 = vrot.lane.b32.xlu0 %v1155, 126
        %v1171 = vpop.permute.xlu0 %1170
        %1172 = vrot.lane.b32.xlu0 %v1150, 126
        %v1173 = vpop.permute.xlu0 %1172
        %1174 = vrot.lane.b32.xlu0 %v1156, 126
        %v1175 = vpop.permute.xlu0 %1174
        %v1176 = vsel %vm865, %v1171, %v1173
        %v1177 = vsel %vm865, %v1173, %v1175
        %1181 = vrot.lane.b32.xlu0 %v1155, 110
        %v1182 = vpop.permute.xlu0 %1181
        %1183 = vrot.lane.b32.xlu0 %v1150, 110
        %v1184 = vpop.permute.xlu0 %1183
        %1185 = vrot.lane.b32.xlu0 %v1156, 110
        %v1186 = vpop.permute.xlu0 %1185
        %v1187 = vsel %vm877, %v1182, %v1184
        %v1188 = vsel %vm877, %v1184, %v1186
        %1192 = vrot.lane.b32.xlu0 %v1155, 109
        %v1193 = vpop.permute.xlu0 %1192
        %1194 = vrot.lane.b32.xlu0 %v1150, 109
        %v1195 = vpop.permute.xlu0 %1194
        %1196 = vrot.lane.b32.xlu0 %v1156, 109
        %v1197 = vpop.permute.xlu0 %1196
        %v1198 = vsel %vm889, %v1193, %v1195
        %v1199 = vsel %vm889, %v1195, %v1197
        %1203 = vrot.lane.b32.xlu0 %v1155, 108
        %v1204 = vpop.permute.xlu0 %1203
        %1205 = vrot.lane.b32.xlu0 %v1150, 108
        %v1206 = vpop.permute.xlu0 %1205
        %1207 = vrot.lane.b32.xlu0 %v1156, 108
        %v1208 = vpop.permute.xlu0 %1207
        %v1209 = vsel %vm901, %v1204, %v1206
        %v1210 = vsel %vm901, %v1206, %v1208
        %1214 = vrot.lane.b32.xlu0 %v1155, 92
        %v1215 = vpop.permute.xlu0 %1214
        %1216 = vrot.lane.b32.xlu0 %v1150, 92
        %v1217 = vpop.permute.xlu0 %1216
        %1218 = vrot.lane.b32.xlu0 %v1156, 92
        %v1219 = vpop.permute.xlu0 %1218
        %v1220 = vsel %vm913, %v1215, %v1217
        %v1221 = vsel %vm913, %v1217, %v1219
        %1225 = vrot.lane.b32.xlu0 %v1155, 91
        %v1226 = vpop.permute.xlu0 %1225
        %1227 = vrot.lane.b32.xlu0 %v1150, 91
        %v1228 = vpop.permute.xlu0 %1227
        %1229 = vrot.lane.b32.xlu0 %v1156, 91
        %v1230 = vpop.permute.xlu0 %1229
        %v1231 = vsel %vm925, %v1226, %v1228
        %v1232 = vsel %vm925, %v1228, %v1230
        %1236 = vrot.lane.b32.xlu0 %v1155, 90
        %v1237 = vpop.permute.xlu0 %1236
        %1238 = vrot.lane.b32.xlu0 %v1150, 90
        %v1239 = vpop.permute.xlu0 %1238
        %1240 = vrot.lane.b32.xlu0 %v1156, 90
        %v1241 = vpop.permute.xlu0 %1240
        %v1242 = vsel %vm937, %v1237, %v1239
        %v1243 = vsel %vm937, %v1239, %v1241
        %1248 = vset.pattern.permute.xlu0 0
        %1249 = vperm.xlu0 %1248, %v1139
        %v1250 = vpop.permute.xlu0 %1249
        %1253 = vset.pattern.permute.xlu0 0
        %1254 = vperm.xlu0 %1253, %v1140
        %v1255 = vpop.permute.xlu0 %1254
        %vm1257 = vcmask 588800
        %v1259 = vsel %vm1257, %v1137, 0
        %v1262 = vsel %vm1257, %v1138, 0
        %1264 = vmatprep.subr.mxu0 0.0
        %1265 = vmatpush1.msra.mxu0 0.0
        %1266 = vmatprep.subr.mxu0 0.0
        %1267 = vmatpush1.msra.mxu0 0.0
        %1268 = vmatprep.subr.mxu0 0.0
        %1269 = vmatpush1.msra.mxu0 0.0
        %1270 = vmatprep.subr.mxu0 0.0
        %1271 = vmatpush1.msra.mxu0 0.0
        %1272 = vmatprep.subr.mxu0 0.0
        %1273 = vmatpush1.msra.mxu0 0.0
        %1274 = vmatprep.subr.mxu0 0.0
        %1275 = vmatpush1.msra.mxu0 0.0
        %1276 = vmatprep.subr.mxu0 0.0
        %1277 = vmatpush1.msra.mxu0 0.0
        %1278 = vmatprep.subr.mxu0 %v1243
        %1279 = vmatpush1.msra.mxu0 %v1242
        %1280 = vmatprep.subr.mxu0 %v1232
        %1281 = vmatpush1.msra.mxu0 %v1231
        %1282 = vmatprep.subr.mxu0 %v1221
        %1283 = vmatpush1.msra.mxu0 %v1220
        %1284 = vmatprep.subr.mxu0 %v1210
        %1285 = vmatpush1.msra.mxu0 %v1209
        %1286 = vmatprep.subr.mxu0 %v1199
        %1287 = vmatpush1.msra.mxu0 %v1198
        %1288 = vmatprep.subr.mxu0 %v1188
        %1289 = vmatpush1.msra.mxu0 %v1187
        %1290 = vmatprep.subr.mxu0 %v1177
        %1291 = vmatpush1.msra.mxu0 %v1176
        %1292 = vmatprep.subr.mxu0 %v1166
        %1293 = vmatpush1.msra.mxu0 %v1165
        %1294 = vmatprep.subr.mxu0 %v1150
        %1295 = vmatpush1.msra.mxu0 %v1155
        %1296 = vmatprep.subr.mxu0 0.0
        %1297 = vmatpush2.msra.mxu0 0.0
        %1298 = vmatprep.subr.mxu0 0.0
        %1299 = vmatpush2.msra.mxu0 0.0
        %1300 = vmatprep.subr.mxu0 0.0
        %1301 = vmatpush2.msra.mxu0 0.0
        %1302 = vmatprep.subr.mxu0 0.0
        %1303 = vmatpush2.msra.mxu0 0.0
        %1304 = vmatprep.subr.mxu0 0.0
        %1305 = vmatpush2.msra.mxu0 0.0
        %1306 = vmatprep.subr.mxu0 0.0
        %1307 = vmatpush2.msra.mxu0 0.0
        %1308 = vmatprep.subr.mxu0 0.0
        %1309 = vmatpush2.msra.mxu0 0.0
        %1310 = vmatprep.subr.mxu0 0.0
        %1311 = vmatpush2.msra.mxu0 0.0
        %1312 = vmatprep.subr.mxu0 0.0
        %1313 = vmatpush2.msra.mxu0 0.0
        %1314 = vmatprep.subr.mxu0 0.0
        %1315 = vmatpush2.msra.mxu0 0.0
        %1316 = vmatprep.subr.mxu0 0.0
        %1317 = vmatpush2.msra.mxu0 0.0
        %1318 = vmatprep.subr.mxu0 0.0
        %1319 = vmatpush2.msra.mxu0 0.0
        %1320 = vmatprep.subr.mxu0 0.0
        %1321 = vmatpush2.msra.mxu0 0.0
        %1322 = vmatprep.subr.mxu0 0.0
        %1323 = vmatpush2.msra.mxu0 0.0
        %1324 = vmatprep.subr.mxu0 0.0
        %1325 = vmatpush2.msra.mxu0 0.0
        %1326 = vmatprep.subr.mxu0 0.0
        %1327 = vmatpush2.msra.mxu0 0.0
        %1328 = vmatprep.mubr.f32.mxu0 0.0
        %1329 = vmatmul.mubr.f32.gmra.mxu0 %v1259
        %v1330 = vpop.f32.mrf.mxu0
        %v1331 = vadd.f32 %v1250, %v1330
        %v1332 = vpop.f32.mrf.mxu0
        %v1333 = vadd.f32 %v1250, %v1332
        %1334 = vmatprep.mubr.f32.mxu0 0.0
        %1335 = vmatmul.mubr.f32.gmra.mxu0 %v1262
        %v1336 = vpop.f32.mrf.mxu0
        %v1337 = vadd.f32 %v1255, %v1336
        %v1338 = vpop.f32.mrf.mxu0
        %v1339 = vadd.f32 %v1255, %v1338
        %1340 = vdwg.mxu0
        %1341 = vmatprep.subr.mxu0 0.0
        %1342 = vmatpush1.msra.mxu0 0.0
        %1343 = vmatprep.subr.mxu0 0.0
        %1344 = vmatpush1.msra.mxu0 0.0
        %1345 = vmatprep.subr.mxu0 0.0
        %1346 = vmatpush1.msra.mxu0 0.0
        %1347 = vmatprep.subr.mxu0 0.0
        %1348 = vmatpush1.msra.mxu0 0.0
        %1349 = vmatprep.subr.mxu0 0.0
        %1350 = vmatpush1.msra.mxu0 0.0
        %1351 = vmatprep.subr.mxu0 0.0
        %1352 = vmatpush1.msra.mxu0 0.0
        %1353 = vmatprep.subr.mxu0 0.0
        %1354 = vmatpush1.msra.mxu0 0.0
        %1355 = vmatprep.subr.mxu0 0.0
        %1356 = vmatpush1.msra.mxu0 %v1241
        %1357 = vmatprep.subr.mxu0 0.0
        %1358 = vmatpush1.msra.mxu0 %v1230
        %1359 = vmatprep.subr.mxu0 0.0
        %1360 = vmatpush1.msra.mxu0 %v1219
        %1361 = vmatprep.subr.mxu0 0.0
        %1362 = vmatpush1.msra.mxu0 %v1208
        %1363 = vmatprep.subr.mxu0 0.0
        %1364 = vmatpush1.msra.mxu0 %v1197
        %1365 = vmatprep.subr.mxu0 0.0
        %1366 = vmatpush1.msra.mxu0 %v1186
        %1367 = vmatprep.subr.mxu0 0.0
        %1368 = vmatpush1.msra.mxu0 %v1175
        %1369 = vmatprep.subr.mxu0 0.0
        %1370 = vmatpush1.msra.mxu0 %v1164
        %1371 = vmatprep.subr.mxu0 0.0
        %1372 = vmatpush1.msra.mxu0 %v1156
        %1373 = vmatprep.subr.mxu0 0.0
        %1374 = vmatpush2.msra.mxu0 0.0
        %1375 = vmatprep.subr.mxu0 0.0
        %1376 = vmatpush2.msra.mxu0 0.0
        %1377 = vmatprep.subr.mxu0 0.0
        %1378 = vmatpush2.msra.mxu0 0.0
        %1379 = vmatprep.subr.mxu0 0.0
        %1380 = vmatpush2.msra.mxu0 0.0
        %1381 = vmatprep.subr.mxu0 0.0
        %1382 = vmatpush2.msra.mxu0 0.0
        %1383 = vmatprep.subr.mxu0 0.0
        %1384 = vmatpush2.msra.mxu0 0.0
        %1385 = vmatprep.subr.mxu0 0.0
        %1386 = vmatpush2.msra.mxu0 0.0
        %1387 = vmatprep.subr.mxu0 0.0
        %1388 = vmatpush2.msra.mxu0 0.0
        %1389 = vmatprep.subr.mxu0 0.0
        %1390 = vmatpush2.msra.mxu0 0.0
        %1391 = vmatprep.subr.mxu0 0.0
        %1392 = vmatpush2.msra.mxu0 0.0
        %1393 = vmatprep.subr.mxu0 0.0
        %1394 = vmatpush2.msra.mxu0 0.0
        %1395 = vmatprep.subr.mxu0 0.0
        %1396 = vmatpush2.msra.mxu0 0.0
        %1397 = vmatprep.subr.mxu0 0.0
        %1398 = vmatpush2.msra.mxu0 0.0
        %1399 = vmatprep.subr.mxu0 0.0
        %1400 = vmatpush2.msra.mxu0 0.0
        %1401 = vmatprep.subr.mxu0 0.0
        %1402 = vmatpush2.msra.mxu0 0.0
        %1403 = vmatprep.subr.mxu0 0.0
        %1404 = vmatpush2.msra.mxu0 0.0
        %1405 = vmatprep.mubr.f32.mxu0 0.0
        %1406 = vmatmul.mubr.f32.gmra.mxu0 %v1259
        %v1407 = vpop.f32.mrf.mxu0
        %v1408 = vadd.f32 %v1250, %v1407
        %v1409 = vpop.f32.mrf.mxu0
        %1410 = vmatprep.mubr.f32.mxu0 0.0
        %1411 = vmatmul.mubr.f32.gmra.mxu0 %v1262
        %v1412 = vpop.f32.mrf.mxu0
        %v1413 = vadd.f32 %v1255, %v1412
        %v1414 = vpop.f32.mrf.mxu0
        %1415 = vdwg.mxu0
        %vm1416 = vcmp.gt.f32.partialorder %v1331, 0.0
        %vm1417 = vcmp.gt.f32.partialorder %v1333, 0.0
        %vm1418 = vcmp.gt.f32.partialorder %v1408, 0.0
        %vm1419 = vcmp.gt.f32.partialorder %v1337, 0.0
        %vm1420 = vcmp.gt.f32.partialorder %v1339, 0.0
        %vm1421 = vcmp.gt.f32.partialorder %v1413, 0.0
        %v1422 = vmul.f32 %v1331, 0.2
        %v1423 = vmul.f32 %v1333, 0.2
        %v1424 = vmul.f32 %v1408, 0.2
        %v1425 = vmul.f32 %v1337, 0.2
        %v1426 = vmul.f32 %v1339, 0.2
        %v1427 = vmul.f32 %v1413, 0.2
        %v1428 = vsel %vm1416, %v1331, %v1422
        %v1429 = vsel %vm1417, %v1333, %v1423
        %v1430 = vsel %vm1418, %v1408, %v1424
        %v1431 = vsel %vm1419, %v1337, %v1425
        %v1432 = vsel %vm1420, %v1339, %v1426
        %v1433 = vsel %vm1421, %v1413, %v1427
        %v1434 = vmul.f32 %v1428, %v1122
        %v1435 = vmul.f32 %v1429, %v1126
        %v1436 = vmul.f32 %v1430, %v1130
        %v1437 = vmul.f32 %v1431, %v1122
        %v1438 = vmul.f32 %v1432, %v1126
        %v1439 = vmul.f32 %v1433, %v1130
        %v1440 = vld [vmem:[%s6] sm:$0xff]
        %v1441 = vld [vmem:[%s6 + $0x8] sm:$0xff]
        %v1442 = vld [vmem:[%s6 + $0x10] sm:$0xff]
        %v1443 = vld [vmem:[%s6 + $0x18] sm:$0xff]
        %v1444 = vld [vmem:[%s6 + $0x20] sm:$0xff]
        %v1445 = vld [vmem:[%s6 + $0x28] sm:$0xff]
        %v1446 = vld [vmem:[%s6 + $0x30] sm:$0xff]
        %v1447 = vld [vmem:[%s6 + $0x38] sm:$0xff]
        %v1448 = vld [vmem:[%s7] sm:$0xff]
        %v1449 = vld [vmem:[%s7 + $0x8] sm:$0xff]
        %v1450 = vld [vmem:[%s7 + $0x10] sm:$0xff]
        %v1451 = vld [vmem:[%s7 + $0x18] sm:$0xff]
        %1458 = vrot.lane.b32.xlu0 %v1434, 19
        %v1459 = vpop.permute.xlu0 %1458
        %1460 = vrot.lane.b32.xlu0 %v1435, 19
        %v1461 = vpop.permute.xlu0 %1460
        %1462 = vrot.lane.b32.xlu0 %v1436, 19
        %v1463 = vpop.permute.xlu0 %1462
        %1464 = vrot.lane.b32.xlu0 %v1437, 19
        %v1465 = vpop.permute.xlu0 %1464
        %1466 = vrot.lane.b32.xlu0 %v1438, 19
        %v1467 = vpop.permute.xlu0 %1466
        %1468 = vrot.lane.b32.xlu0 %v1439, 19
        %v1469 = vpop.permute.xlu0 %1468
        %v1470 = vsel %vm834, %v1459, %v1461
        %v1471 = vsel %vm834, %v1461, %v1463
        %v1472 = vsel %vm834, %v1465, %v1467
        %v1473 = vsel %vm834, %v1467, %v1469
        %v1480 = vsel %vm834, 0.0, %v1459
        %v1481 = vsel %vm834, 0.0, %v1465
        %v1482 = vsel %vm841, %v1471, 0.0
        %v1483 = vsel %vm841, %v1473, 0.0
        %1488 = vrot.lane.b32.xlu0 %v1480, 127
        %v1489 = vpop.permute.xlu0 %1488
        %1490 = vrot.lane.b32.xlu0 %v1470, 127
        %v1491 = vpop.permute.xlu0 %1490
        %1492 = vrot.lane.b32.xlu0 %v1482, 127
        %v1493 = vpop.permute.xlu0 %1492
        %1494 = vrot.lane.b32.xlu0 %v1481, 127
        %v1495 = vpop.permute.xlu0 %1494
        %1496 = vrot.lane.b32.xlu0 %v1472, 127
        %v1497 = vpop.permute.xlu0 %1496
        %1498 = vrot.lane.b32.xlu0 %v1483, 127
        %v1499 = vpop.permute.xlu0 %1498
        %v1500 = vsel %vm610, %v1489, %v1491
        %v1501 = vsel %vm610, %v1491, %v1493
        %v1502 = vsel %vm610, %v1495, %v1497
        %v1503 = vsel %vm610, %v1497, %v1499
        %1510 = vrot.lane.b32.xlu0 %v1480, 126
        %v1511 = vpop.permute.xlu0 %1510
        %1512 = vrot.lane.b32.xlu0 %v1470, 126
        %v1513 = vpop.permute.xlu0 %1512
        %1514 = vrot.lane.b32.xlu0 %v1482, 126
        %v1515 = vpop.permute.xlu0 %1514
        %1516 = vrot.lane.b32.xlu0 %v1481, 126
        %v1517 = vpop.permute.xlu0 %1516
        %1518 = vrot.lane.b32.xlu0 %v1472, 126
        %v1519 = vpop.permute.xlu0 %1518
        %1520 = vrot.lane.b32.xlu0 %v1483, 126
        %v1521 = vpop.permute.xlu0 %1520
        %v1522 = vsel %vm865, %v1511, %v1513
        %v1523 = vsel %vm865, %v1513, %v1515
        %v1524 = vsel %vm865, %v1517, %v1519
        %v1525 = vsel %vm865, %v1519, %v1521
        %1532 = vrot.lane.b32.xlu0 %v1480, 110
        %v1533 = vpop.permute.xlu0 %1532
        %1534 = vrot.lane.b32.xlu0 %v1470, 110
        %v1535 = vpop.permute.xlu0 %1534
        %1536 = vrot.lane.b32.xlu0 %v1482, 110
        %v1537 = vpop.permute.xlu0 %1536
        %1538 = vrot.lane.b32.xlu0 %v1481, 110
        %v1539 = vpop.permute.xlu0 %1538
        %1540 = vrot.lane.b32.xlu0 %v1472, 110
        %v1541 = vpop.permute.xlu0 %1540
        %1542 = vrot.lane.b32.xlu0 %v1483, 110
        %v1543 = vpop.permute.xlu0 %1542
        %v1544 = vsel %vm877, %v1533, %v1535
        %v1545 = vsel %vm877, %v1535, %v1537
        %v1546 = vsel %vm877, %v1539, %v1541
        %v1547 = vsel %vm877, %v1541, %v1543
        %1554 = vrot.lane.b32.xlu0 %v1480, 109
        %v1555 = vpop.permute.xlu0 %1554
        %1556 = vrot.lane.b32.xlu0 %v1470, 109
        %v1557 = vpop.permute.xlu0 %1556
        %1558 = vrot.lane.b32.xlu0 %v1482, 109
        %v1559 = vpop.permute.xlu0 %1558
        %1560 = vrot.lane.b32.xlu0 %v1481, 109
        %v1561 = vpop.permute.xlu0 %1560
        %1562 = vrot.lane.b32.xlu0 %v1472, 109
        %v1563 = vpop.permute.xlu0 %1562
        %1564 = vrot.lane.b32.xlu0 %v1483, 109
        %v1565 = vpop.permute.xlu0 %1564
        %v1566 = vsel %vm889, %v1555, %v1557
        %v1567 = vsel %vm889, %v1557, %v1559
        %v1568 = vsel %vm889, %v1561, %v1563
        %v1569 = vsel %vm889, %v1563, %v1565
        %1576 = vrot.lane.b32.xlu0 %v1480, 108
        %v1577 = vpop.permute.xlu0 %1576
        %1578 = vrot.lane.b32.xlu0 %v1470, 108
        %v1579 = vpop.permute.xlu0 %1578
        %1580 = vrot.lane.b32.xlu0 %v1482, 108
        %v1581 = vpop.permute.xlu0 %1580
        %1582 = vrot.lane.b32.xlu0 %v1481, 108
        %v1583 = vpop.permute.xlu0 %1582
        %1584 = vrot.lane.b32.xlu0 %v1472, 108
        %v1585 = vpop.permute.xlu0 %1584
        %1586 = vrot.lane.b32.xlu0 %v1483, 108
        %v1587 = vpop.permute.xlu0 %1586
        %v1588 = vsel %vm901, %v1577, %v1579
        %v1589 = vsel %vm901, %v1579, %v1581
        %v1590 = vsel %vm901, %v1583, %v1585
        %v1591 = vsel %vm901, %v1585, %v1587
        %1598 = vrot.lane.b32.xlu0 %v1480, 92
        %v1599 = vpop.permute.xlu0 %1598
        %1600 = vrot.lane.b32.xlu0 %v1470, 92
        %v1601 = vpop.permute.xlu0 %1600
        %1602 = vrot.lane.b32.xlu0 %v1482, 92
        %v1603 = vpop.permute.xlu0 %1602
        %1604 = vrot.lane.b32.xlu0 %v1481, 92
        %v1605 = vpop.permute.xlu0 %1604
        %1606 = vrot.lane.b32.xlu0 %v1472, 92
        %v1607 = vpop.permute.xlu0 %1606
        %1608 = vrot.lane.b32.xlu0 %v1483, 92
        %v1609 = vpop.permute.xlu0 %1608
        %v1610 = vsel %vm913, %v1599, %v1601
        %v1611 = vsel %vm913, %v1601, %v1603
        %v1612 = vsel %vm913, %v1605, %v1607
        %v1613 = vsel %vm913, %v1607, %v1609
        %1620 = vrot.lane.b32.xlu0 %v1480, 91
        %v1621 = vpop.permute.xlu0 %1620
        %1622 = vrot.lane.b32.xlu0 %v1470, 91
        %v1623 = vpop.permute.xlu0 %1622
        %1624 = vrot.lane.b32.xlu0 %v1482, 91
        %v1625 = vpop.permute.xlu0 %1624
        %1626 = vrot.lane.b32.xlu0 %v1481, 91
        %v1627 = vpop.permute.xlu0 %1626
        %1628 = vrot.lane.b32.xlu0 %v1472, 91
        %v1629 = vpop.permute.xlu0 %1628
        %1630 = vrot.lane.b32.xlu0 %v1483, 91
        %v1631 = vpop.permute.xlu0 %1630
        %v1632 = vsel %vm925, %v1621, %v1623
        %v1633 = vsel %vm925, %v1623, %v1625
        %v1634 = vsel %vm925, %v1627, %v1629
        %v1635 = vsel %vm925, %v1629, %v1631
        %1642 = vrot.lane.b32.xlu0 %v1480, 90
        %v1643 = vpop.permute.xlu0 %1642
        %1644 = vrot.lane.b32.xlu0 %v1470, 90
        %v1645 = vpop.permute.xlu0 %1644
        %1646 = vrot.lane.b32.xlu0 %v1482, 90
        %v1647 = vpop.permute.xlu0 %1646
        %1648 = vrot.lane.b32.xlu0 %v1481, 90
        %v1649 = vpop.permute.xlu0 %1648
        %1650 = vrot.lane.b32.xlu0 %v1472, 90
        %v1651 = vpop.permute.xlu0 %1650
        %1652 = vrot.lane.b32.xlu0 %v1483, 90
        %v1653 = vpop.permute.xlu0 %1652
        %v1654 = vsel %vm937, %v1643, %v1645
        %v1655 = vsel %vm937, %v1645, %v1647
        %v1656 = vsel %vm937, %v1649, %v1651
        %v1657 = vsel %vm937, %v1651, %v1653
        %1665 = vset.pattern.permute.xlu0 0
        %1666 = vperm.xlu0 %1665, %v1448
        %v1667 = vpop.permute.xlu0 %1666
        %1670 = vset.pattern.permute.xlu0 0
        %1671 = vperm.xlu0 %1670, %v1449
        %v1672 = vpop.permute.xlu0 %1671
        %1675 = vset.pattern.permute.xlu0 0
        %1676 = vperm.xlu0 %1675, %v1450
        %v1677 = vpop.permute.xlu0 %1676
        %1680 = vset.pattern.permute.xlu0 0
        %1681 = vperm.xlu0 %1680, %v1451
        %v1682 = vpop.permute.xlu0 %1681
        %vm1684 = vcmask 130048
        %v1686 = vsel %vm1684, %v1441, 0
        %v1689 = vsel %vm1684, %v1443, 0
        %v1692 = vsel %vm1684, %v1445, 0
        %v1695 = vsel %vm1684, %v1447, 0
        %1697 = vmatprep.subr.mxu0 %v1635
        %1698 = vmatpush1.msra.mxu0 %v1634
        %1699 = vmatprep.subr.mxu0 %v1633
        %1700 = vmatpush1.msra.mxu0 %v1632
        %1701 = vmatprep.subr.mxu0 %v1613
        %1702 = vmatpush1.msra.mxu0 %v1612
        %1703 = vmatprep.subr.mxu0 %v1611
        %1704 = vmatpush1.msra.mxu0 %v1610
        %1705 = vmatprep.subr.mxu0 %v1591
        %1706 = vmatpush1.msra.mxu0 %v1590
        %1707 = vmatprep.subr.mxu0 %v1589
        %1708 = vmatpush1.msra.mxu0 %v1588
        %1709 = vmatprep.subr.mxu0 %v1569
        %1710 = vmatpush1.msra.mxu0 %v1568
        %1711 = vmatprep.subr.mxu0 %v1567
        %1712 = vmatpush1.msra.mxu0 %v1566
        %1713 = vmatprep.subr.mxu0 %v1547
        %1714 = vmatpush1.msra.mxu0 %v1546
        %1715 = vmatprep.subr.mxu0 %v1545
        %1716 = vmatpush1.msra.mxu0 %v1544
        %1717 = vmatprep.subr.mxu0 %v1525
        %1718 = vmatpush1.msra.mxu0 %v1524
        %1719 = vmatprep.subr.mxu0 %v1523
        %1720 = vmatpush1.msra.mxu0 %v1522
        %1721 = vmatprep.subr.mxu0 %v1503
        %1722 = vmatpush1.msra.mxu0 %v1502
        %1723 = vmatprep.subr.mxu0 %v1501
        %1724 = vmatpush1.msra.mxu0 %v1500
        %1725 = vmatprep.subr.mxu0 %v1472
        %1726 = vmatpush1.msra.mxu0 %v1481
        %1727 = vmatprep.subr.mxu0 %v1470
        %1728 = vmatpush1.msra.mxu0 %v1480
        %1729 = vmatprep.subr.mxu0 0.0
        %1730 = vmatpush2.msra.mxu0 0.0
        %1731 = vmatprep.subr.mxu0 0.0
        %1732 = vmatpush2.msra.mxu0 0.0
        %1733 = vmatprep.subr.mxu0 0.0
        %1734 = vmatpush2.msra.mxu0 0.0
        %1735 = vmatprep.subr.mxu0 0.0
        %1736 = vmatpush2.msra.mxu0 0.0
        %1737 = vmatprep.subr.mxu0 0.0
        %1738 = vmatpush2.msra.mxu0 0.0
        %1739 = vmatprep.subr.mxu0 0.0
        %1740 = vmatpush2.msra.mxu0 0.0
        %1741 = vmatprep.subr.mxu0 0.0
        %1742 = vmatpush2.msra.mxu0 0.0
        %1743 = vmatprep.subr.mxu0 0.0
        %1744 = vmatpush2.msra.mxu0 0.0
        %1745 = vmatprep.subr.mxu0 0.0
        %1746 = vmatpush2.msra.mxu0 0.0
        %1747 = vmatprep.subr.mxu0 0.0
        %1748 = vmatpush2.msra.mxu0 0.0
        %1749 = vmatprep.subr.mxu0 0.0
        %1750 = vmatpush2.msra.mxu0 0.0
        %1751 = vmatprep.subr.mxu0 0.0
        %1752 = vmatpush2.msra.mxu0 0.0
        %1753 = vmatprep.subr.mxu0 0.0
        %1754 = vmatpush2.msra.mxu0 0.0
        %1755 = vmatprep.subr.mxu0 0.0
        %1756 = vmatpush2.msra.mxu0 0.0
        %1757 = vmatprep.subr.mxu0 %v1657
        %1758 = vmatpush2.msra.mxu0 %v1656
        %1759 = vmatprep.subr.mxu0 %v1655
        %1760 = vmatpush2.msra.mxu0 %v1654
        %1761 = vmatprep.mubr.f32.mxu0 %v1686
        %1762 = vmatmul.mubr.f32.gmra.mxu0 %v1440
        %v1763 = vpop.f32.mrf.mxu0
        %v1764 = vadd.f32 %v1667, %v1763
        %v1765 = vpop.f32.mrf.mxu0
        %v1766 = vadd.f32 %v1667, %v1765
        %1767 = vmatprep.mubr.f32.mxu0 %v1689
        %1768 = vmatmul.mubr.f32.gmra.mxu0 %v1442
        %v1769 = vpop.f32.mrf.mxu0
        %v1770 = vadd.f32 %v1672, %v1769
        %v1771 = vpop.f32.mrf.mxu0
        %v1772 = vadd.f32 %v1672, %v1771
        %1773 = vmatprep.mubr.f32.mxu0 %v1692
        %1774 = vmatmul.mubr.f32.gmra.mxu0 %v1444
        %v1775 = vpop.f32.mrf.mxu0
        %v1776 = vadd.f32 %v1677, %v1775
        %v1777 = vpop.f32.mrf.mxu0
        %v1778 = vadd.f32 %v1677, %v1777
        %1779 = vmatprep.mubr.f32.mxu0 %v1695
        %1780 = vmatmul.mubr.f32.gmra.mxu0 %v1446
        %v1781 = vpop.f32.mrf.mxu0
        %v1782 = vadd.f32 %v1682, %v1781
        %v1783 = vpop.f32.mrf.mxu0
        %v1784 = vadd.f32 %v1682, %v1783
        %1785 = vdwg.mxu0
        %1786 = vmatprep.subr.mxu0 0.0
        %1787 = vmatpush1.msra.mxu0 %v1631
        %1788 = vmatprep.subr.mxu0 0.0
        %1789 = vmatpush1.msra.mxu0 %v1625
        %1790 = vmatprep.subr.mxu0 0.0
        %1791 = vmatpush1.msra.mxu0 %v1609
        %1792 = vmatprep.subr.mxu0 0.0
        %1793 = vmatpush1.msra.mxu0 %v1603
        %1794 = vmatprep.subr.mxu0 0.0
        %1795 = vmatpush1.msra.mxu0 %v1587
        %1796 = vmatprep.subr.mxu0 0.0
        %1797 = vmatpush1.msra.mxu0 %v1581
        %1798 = vmatprep.subr.mxu0 0.0
        %1799 = vmatpush1.msra.mxu0 %v1565
        %1800 = vmatprep.subr.mxu0 0.0
        %1801 = vmatpush1.msra.mxu0 %v1559
        %1802 = vmatprep.subr.mxu0 0.0
        %1803 = vmatpush1.msra.mxu0 %v1543
        %1804 = vmatprep.subr.mxu0 0.0
        %1805 = vmatpush1.msra.mxu0 %v1537
        %1806 = vmatprep.subr.mxu0 0.0
        %1807 = vmatpush1.msra.mxu0 %v1521
        %1808 = vmatprep.subr.mxu0 0.0
        %1809 = vmatpush1.msra.mxu0 %v1515
        %1810 = vmatprep.subr.mxu0 0.0
        %1811 = vmatpush1.msra.mxu0 %v1499
        %1812 = vmatprep.subr.mxu0 0.0
        %1813 = vmatpush1.msra.mxu0 %v1493
        %1814 = vmatprep.subr.mxu0 0.0
        %1815 = vmatpush1.msra.mxu0 %v1483
        %1816 = vmatprep.subr.mxu0 0.0
        %1817 = vmatpush1.msra.mxu0 %v1482
        %1818 = vmatprep.subr.mxu0 0.0
        %1819 = vmatpush2.msra.mxu0 0.0
        %1820 = vmatprep.subr.mxu0 0.0
        %1821 = vmatpush2.msra.mxu0 0.0
        %1822 = vmatprep.subr.mxu0 0.0
        %1823 = vmatpush2.msra.mxu0 0.0
        %1824 = vmatprep.subr.mxu0 0.0
        %1825 = vmatpush2.msra.mxu0 0.0
        %1826 = vmatprep.subr.mxu0 0.0
        %1827 = vmatpush2.msra.mxu0 0.0
        %1828 = vmatprep.subr.mxu0 0.0
        %1829 = vmatpush2.msra.mxu0 0.0
        %1830 = vmatprep.subr.mxu0 0.0
        %1831 = vmatpush2.msra.mxu0 0.0
        %1832 = vmatprep.subr.mxu0 0.0
        %1833 = vmatpush2.msra.mxu0 0.0
        %1834 = vmatprep.subr.mxu0 0.0
        %1835 = vmatpush2.msra.mxu0 0.0
        %1836 = vmatprep.subr.mxu0 0.0
        %1837 = vmatpush2.msra.mxu0 0.0
        %1838 = vmatprep.subr.mxu0 0.0
        %1839 = vmatpush2.msra.mxu0 0.0
        %1840 = vmatprep.subr.mxu0 0.0
        %1841 = vmatpush2.msra.mxu0 0.0
        %1842 = vmatprep.subr.mxu0 0.0
        %1843 = vmatpush2.msra.mxu0 0.0
        %1844 = vmatprep.subr.mxu0 0.0
        %1845 = vmatpush2.msra.mxu0 0.0
        %1846 = vmatprep.subr.mxu0 0.0
        %1847 = vmatpush2.msra.mxu0 %v1653
        %1848 = vmatprep.subr.mxu0 0.0
        %1849 = vmatpush2.msra.mxu0 %v1647
        %1850 = vmatprep.mubr.f32.mxu0 %v1686
        %1851 = vmatmul.mubr.f32.gmra.mxu0 %v1440
        %v1852 = vpop.f32.mrf.mxu0
        %v1853 = vadd.f32 %v1667, %v1852
        %v1854 = vpop.f32.mrf.mxu0
        %1855 = vmatprep.mubr.f32.mxu0 %v1689
        %1856 = vmatmul.mubr.f32.gmra.mxu0 %v1442
        %v1857 = vpop.f32.mrf.mxu0
        %v1858 = vadd.f32 %v1672, %v1857
        %v1859 = vpop.f32.mrf.mxu0
        %1860 = vmatprep.mubr.f32.mxu0 %v1692
        %1861 = vmatmul.mubr.f32.gmra.mxu0 %v1444
        %v1862 = vpop.f32.mrf.mxu0
        %v1863 = vadd.f32 %v1677, %v1862
        %v1864 = vpop.f32.mrf.mxu0
        %1865 = vmatprep.mubr.f32.mxu0 %v1695
        %1866 = vmatmul.mubr.f32.gmra.mxu0 %v1446
        %v1867 = vpop.f32.mrf.mxu0
        %v1868 = vadd.f32 %v1682, %v1867
        %v1869 = vpop.f32.mrf.mxu0
        %1870 = vdwg.mxu0
        %vm1871 = vcmp.gt.f32.partialorder %v1764, 0.0
        %vm1872 = vcmp.gt.f32.partialorder %v1766, 0.0
        %vm1873 = vcmp.gt.f32.partialorder %v1853, 0.0
        %vm1874 = vcmp.gt.f32.partialorder %v1770, 0.0
        %vm1875 = vcmp.gt.f32.partialorder %v1772, 0.0
        %vm1876 = vcmp.gt.f32.partialorder %v1858, 0.0
        %vm1877 = vcmp.gt.f32.partialorder %v1776, 0.0
        %vm1878 = vcmp.gt.f32.partialorder %v1778, 0.0
        %vm1879 = vcmp.gt.f32.partialorder %v1863, 0.0
        %vm1880 = vcmp.gt.f32.partialorder %v1782, 0.0
        %vm1881 = vcmp.gt.f32.partialorder %v1784, 0.0
        %vm1882 = vcmp.gt.f32.partialorder %v1868, 0.0
        %v1883 = vmul.f32 %v1764, 0.2
        %v1884 = vmul.f32 %v1766, 0.2
        %v1885 = vmul.f32 %v1853, 0.2
        %v1886 = vmul.f32 %v1770, 0.2
        %v1887 = vmul.f32 %v1772, 0.2
        %v1888 = vmul.f32 %v1858, 0.2
        %v1889 = vmul.f32 %v1776, 0.2
        %v1890 = vmul.f32 %v1778, 0.2
        %v1891 = vmul.f32 %v1863, 0.2
        %v1892 = vmul.f32 %v1782, 0.2
        %v1893 = vmul.f32 %v1784, 0.2
        %v1894 = vmul.f32 %v1868, 0.2
        %v1895 = vsel %vm1871, %v1764, %v1883
        %v1896 = vsel %vm1872, %v1766, %v1884
        %v1897 = vsel %vm1873, %v1853, %v1885
        %v1898 = vsel %vm1874, %v1770, %v1886
        %v1899 = vsel %vm1875, %v1772, %v1887
        %v1900 = vsel %vm1876, %v1858, %v1888
        %v1901 = vsel %vm1877, %v1776, %v1889
        %v1902 = vsel %vm1878, %v1778, %v1890
        %v1903 = vsel %vm1879, %v1863, %v1891
        %v1904 = vsel %vm1880, %v1782, %v1892
        %v1905 = vsel %vm1881, %v1784, %v1893
        %v1906 = vsel %vm1882, %v1868, %v1894
        %v1907 = vmul.f32 %v1895, %v1122
        %v1908 = vmul.f32 %v1896, %v1126
        %v1909 = vmul.f32 %v1897, %v1130
        %v1910 = vmul.f32 %v1898, %v1122
        %v1911 = vmul.f32 %v1899, %v1126
        %v1912 = vmul.f32 %v1900, %v1130
        %v1913 = vmul.f32 %v1901, %v1122
        %v1914 = vmul.f32 %v1902, %v1126
        %v1915 = vmul.f32 %v1903, %v1130
        %v1916 = vmul.f32 %v1904, %v1122
        %v1917 = vmul.f32 %v1905, %v1126
        %v1918 = vmul.f32 %v1906, %v1130
        %v1919 = vld [vmem:[#allocation7] sm:$0xff]
        %v1920 = vld [vmem:[#allocation7 + $0x8] sm:$0xff]
        %v1921 = vld [vmem:[#allocation7 + $0x10] sm:$0xff]
        %v1922 = vld [vmem:[#allocation7 + $0x18] sm:$0xff]
        %v1923 = vld [vmem:[#allocation7 + $0x20] sm:$0xff]
        %v1924 = vld [vmem:[#allocation7 + $0x28] sm:$0xff]
        %v1925 = vld [vmem:[#allocation7 + $0x30] sm:$0xff]
        %v1926 = vld [vmem:[#allocation7 + $0x38] sm:$0xff]
        %v1927 = vld [vmem:[#allocation7 + $0x40] sm:$0xff]
        %v1928 = vld [vmem:[#allocation7 + $0x48] sm:$0xff]
        %v1929 = vld [vmem:[#allocation7 + $0x50] sm:$0xff]
        %v1930 = vld [vmem:[#allocation7 + $0x58] sm:$0xff]
        %v1931 = vld [vmem:[#allocation7 + $0x60] sm:$0xff]
        %v1932 = vld [vmem:[#allocation7 + $0x68] sm:$0xff]
        %v1933 = vld [vmem:[#allocation7 + $0x70] sm:$0xff]
        %v1934 = vld [vmem:[#allocation7 + $0x78] sm:$0xff]
        %v1935 = vld [vmem:[#allocation7 + $0x80] sm:$0xff]
        %v1936 = vld [vmem:[#allocation7 + $0x88] sm:$0xff]
        %v1937 = vld [vmem:[#allocation7 + $0x90] sm:$0xff]
        %v1938 = vld [vmem:[#allocation7 + $0x98] sm:$0xff]
        %v1939 = vld [vmem:[#allocation7 + $0xa0] sm:$0xff]
        %v1940 = vld [vmem:[#allocation7 + $0xa8] sm:$0xff]
        %v1941 = vld [vmem:[#allocation7 + $0xb0] sm:$0xff]
        %v1942 = vld [vmem:[#allocation7 + $0xb8] sm:$0xff]
        %v1943 = vld [vmem:[%s9] sm:$0xff]
        %v1944 = vld [vmem:[%s9 + $0x8] sm:$0xff]
        %v1945 = vld [vmem:[%s9 + $0x10] sm:$0xff]
        %v1946 = vld [vmem:[%s9 + $0x18] sm:$0xff]
        %v1947 = vld [vmem:[%s9 + $0x20] sm:$0xff]
        %v1948 = vld [vmem:[%s9 + $0x28] sm:$0xff]
        %v1949 = vld [vmem:[%s9 + $0x30] sm:$0xff]
        %v1950 = vld [vmem:[%s9 + $0x38] sm:$0xff]
        %1963 = vrot.lane.b32.xlu0 %v1907, 19
        %v1964 = vpop.permute.xlu0 %1963
        %1965 = vrot.lane.b32.xlu0 %v1908, 19
        %v1966 = vpop.permute.xlu0 %1965
        %1967 = vrot.lane.b32.xlu0 %v1909, 19
        %v1968 = vpop.permute.xlu0 %1967
        %1969 = vrot.lane.b32.xlu0 %v1910, 19
        %v1970 = vpop.permute.xlu0 %1969
        %1971 = vrot.lane.b32.xlu0 %v1911, 19
        %v1972 = vpop.permute.xlu0 %1971
        %1973 = vrot.lane.b32.xlu0 %v1912, 19
        %v1974 = vpop.permute.xlu0 %1973
        %1975 = vrot.lane.b32.xlu0 %v1913, 19
        %v1976 = vpop.permute.xlu0 %1975
        %1977 = vrot.lane.b32.xlu0 %v1914, 19
        %v1978 = vpop.permute.xlu0 %1977
        %1979 = vrot.lane.b32.xlu0 %v1915, 19
        %v1980 = vpop.permute.xlu0 %1979
        %1981 = vrot.lane.b32.xlu0 %v1916, 19
        %v1982 = vpop.permute.xlu0 %1981
        %1983 = vrot.lane.b32.xlu0 %v1917, 19
        %v1984 = vpop.permute.xlu0 %1983
        %1985 = vrot.lane.b32.xlu0 %v1918, 19
        %v1986 = vpop.permute.xlu0 %1985
        %v1987 = vsel %vm834, %v1964, %v1966
        %v1988 = vsel %vm834, %v1966, %v1968
        %v1989 = vsel %vm834, %v1970, %v1972
        %v1990 = vsel %vm834, %v1972, %v1974
        %v1991 = vsel %vm834, %v1976, %v1978
        %v1992 = vsel %vm834, %v1978, %v1980
        %v1993 = vsel %vm834, %v1982, %v1984
        %v1994 = vsel %vm834, %v1984, %v1986
        %v2007 = vsel %vm834, 0.0, %v1964
        %v2008 = vsel %vm834, 0.0, %v1970
        %v2009 = vsel %vm834, 0.0, %v1976
        %v2010 = vsel %vm834, 0.0, %v1982
        %v2011 = vsel %vm841, %v1988, 0.0
        %v2012 = vsel %vm841, %v1990, 0.0
        %v2013 = vsel %vm841, %v1992, 0.0
        %v2014 = vsel %vm841, %v1994, 0.0
        %2023 = vrot.lane.b32.xlu0 %v2007, 127
        %v2024 = vpop.permute.xlu0 %2023
        %2025 = vrot.lane.b32.xlu0 %v1987, 127
        %v2026 = vpop.permute.xlu0 %2025
        %2027 = vrot.lane.b32.xlu0 %v2011, 127
        %v2028 = vpop.permute.xlu0 %2027
        %2029 = vrot.lane.b32.xlu0 %v2008, 127
        %v2030 = vpop.permute.xlu0 %2029
        %2031 = vrot.lane.b32.xlu0 %v1989, 127
        %v2032 = vpop.permute.xlu0 %2031
        %2033 = vrot.lane.b32.xlu0 %v2012, 127
        %v2034 = vpop.permute.xlu0 %2033
        %2035 = vrot.lane.b32.xlu0 %v2009, 127
        %v2036 = vpop.permute.xlu0 %2035
        %2037 = vrot.lane.b32.xlu0 %v1991, 127
        %v2038 = vpop.permute.xlu0 %2037
        %2039 = vrot.lane.b32.xlu0 %v2013, 127
        %v2040 = vpop.permute.xlu0 %2039
        %2041 = vrot.lane.b32.xlu0 %v2010, 127
        %v2042 = vpop.permute.xlu0 %2041
        %2043 = vrot.lane.b32.xlu0 %v1993, 127
        %v2044 = vpop.permute.xlu0 %2043
        %2045 = vrot.lane.b32.xlu0 %v2014, 127
        %v2046 = vpop.permute.xlu0 %2045
        %v2047 = vsel %vm610, %v2024, %v2026
        %v2048 = vsel %vm610, %v2026, %v2028
        %v2049 = vsel %vm610, %v2030, %v2032
        %v2050 = vsel %vm610, %v2032, %v2034
        %v2051 = vsel %vm610, %v2036, %v2038
        %v2052 = vsel %vm610, %v2038, %v2040
        %v2053 = vsel %vm610, %v2042, %v2044
        %v2054 = vsel %vm610, %v2044, %v2046
        %2067 = vrot.lane.b32.xlu0 %v2007, 126
        %v2068 = vpop.permute.xlu0 %2067
        %2069 = vrot.lane.b32.xlu0 %v1987, 126
        %v2070 = vpop.permute.xlu0 %2069
        %2071 = vrot.lane.b32.xlu0 %v2011, 126
        %v2072 = vpop.permute.xlu0 %2071
        %2073 = vrot.lane.b32.xlu0 %v2008, 126
        %v2074 = vpop.permute.xlu0 %2073
        %2075 = vrot.lane.b32.xlu0 %v1989, 126
        %v2076 = vpop.permute.xlu0 %2075
        %2077 = vrot.lane.b32.xlu0 %v2012, 126
        %v2078 = vpop.permute.xlu0 %2077
        %2079 = vrot.lane.b32.xlu0 %v2009, 126
        %v2080 = vpop.permute.xlu0 %2079
        %2081 = vrot.lane.b32.xlu0 %v1991, 126
        %v2082 = vpop.permute.xlu0 %2081
        %2083 = vrot.lane.b32.xlu0 %v2013, 126
        %v2084 = vpop.permute.xlu0 %2083
        %2085 = vrot.lane.b32.xlu0 %v2010, 126
        %v2086 = vpop.permute.xlu0 %2085
        %2087 = vrot.lane.b32.xlu0 %v1993, 126
        %v2088 = vpop.permute.xlu0 %2087
        %2089 = vrot.lane.b32.xlu0 %v2014, 126
        %v2090 = vpop.permute.xlu0 %2089
        %v2091 = vsel %vm865, %v2068, %v2070
        %v2092 = vsel %vm865, %v2070, %v2072
        %v2093 = vsel %vm865, %v2074, %v2076
        %v2094 = vsel %vm865, %v2076, %v2078
        %v2095 = vsel %vm865, %v2080, %v2082
        %v2096 = vsel %vm865, %v2082, %v2084
        %v2097 = vsel %vm865, %v2086, %v2088
        %v2098 = vsel %vm865, %v2088, %v2090
        %2111 = vrot.lane.b32.xlu0 %v2007, 110
        %v2112 = vpop.permute.xlu0 %2111
        %2113 = vrot.lane.b32.xlu0 %v1987, 110
        %v2114 = vpop.permute.xlu0 %2113
        %2115 = vrot.lane.b32.xlu0 %v2011, 110
        %v2116 = vpop.permute.xlu0 %2115
        %2117 = vrot.lane.b32.xlu0 %v2008, 110
        %v2118 = vpop.permute.xlu0 %2117
        %2119 = vrot.lane.b32.xlu0 %v1989, 110
        %v2120 = vpop.permute.xlu0 %2119
        %2121 = vrot.lane.b32.xlu0 %v2012, 110
        %v2122 = vpop.permute.xlu0 %2121
        %2123 = vrot.lane.b32.xlu0 %v2009, 110
        %v2124 = vpop.permute.xlu0 %2123
        %2125 = vrot.lane.b32.xlu0 %v1991, 110
        %v2126 = vpop.permute.xlu0 %2125
        %2127 = vrot.lane.b32.xlu0 %v2013, 110
        %v2128 = vpop.permute.xlu0 %2127
        %2129 = vrot.lane.b32.xlu0 %v2010, 110
        %v2130 = vpop.permute.xlu0 %2129
        %2131 = vrot.lane.b32.xlu0 %v1993, 110
        %v2132 = vpop.permute.xlu0 %2131
        %2133 = vrot.lane.b32.xlu0 %v2014, 110
        %v2134 = vpop.permute.xlu0 %2133
        %v2135 = vsel %vm877, %v2112, %v2114
        %v2136 = vsel %vm877, %v2114, %v2116
        %v2137 = vsel %vm877, %v2118, %v2120
        %v2138 = vsel %vm877, %v2120, %v2122
        %v2139 = vsel %vm877, %v2124, %v2126
        %v2140 = vsel %vm877, %v2126, %v2128
        %v2141 = vsel %vm877, %v2130, %v2132
        %v2142 = vsel %vm877, %v2132, %v2134
        %2155 = vrot.lane.b32.xlu0 %v2007, 109
        %v2156 = vpop.permute.xlu0 %2155
        %2157 = vrot.lane.b32.xlu0 %v1987, 109
        %v2158 = vpop.permute.xlu0 %2157
        %2159 = vrot.lane.b32.xlu0 %v2011, 109
        %v2160 = vpop.permute.xlu0 %2159
        %2161 = vrot.lane.b32.xlu0 %v2008, 109
        %v2162 = vpop.permute.xlu0 %2161
        %2163 = vrot.lane.b32.xlu0 %v1989, 109
        %v2164 = vpop.permute.xlu0 %2163
        %2165 = vrot.lane.b32.xlu0 %v2012, 109
        %v2166 = vpop.permute.xlu0 %2165
        %2167 = vrot.lane.b32.xlu0 %v2009, 109
        %v2168 = vpop.permute.xlu0 %2167
        %2169 = vrot.lane.b32.xlu0 %v1991, 109
        %v2170 = vpop.permute.xlu0 %2169
        %2171 = vrot.lane.b32.xlu0 %v2013, 109
        %v2172 = vpop.permute.xlu0 %2171
        %2173 = vrot.lane.b32.xlu0 %v2010, 109
        %v2174 = vpop.permute.xlu0 %2173
        %2175 = vrot.lane.b32.xlu0 %v1993, 109
        %v2176 = vpop.permute.xlu0 %2175
        %2177 = vrot.lane.b32.xlu0 %v2014, 109
        %v2178 = vpop.permute.xlu0 %2177
        %v2179 = vsel %vm889, %v2156, %v2158
        %v2180 = vsel %vm889, %v2158, %v2160
        %v2181 = vsel %vm889, %v2162, %v2164
        %v2182 = vsel %vm889, %v2164, %v2166
        %v2183 = vsel %vm889, %v2168, %v2170
        %v2184 = vsel %vm889, %v2170, %v2172
        %v2185 = vsel %vm889, %v2174, %v2176
        %v2186 = vsel %vm889, %v2176, %v2178
        %2199 = vrot.lane.b32.xlu0 %v2007, 108
        %v2200 = vpop.permute.xlu0 %2199
        %2201 = vrot.lane.b32.xlu0 %v1987, 108
        %v2202 = vpop.permute.xlu0 %2201
        %2203 = vrot.lane.b32.xlu0 %v2011, 108
        %v2204 = vpop.permute.xlu0 %2203
        %2205 = vrot.lane.b32.xlu0 %v2008, 108
        %v2206 = vpop.permute.xlu0 %2205
        %2207 = vrot.lane.b32.xlu0 %v1989, 108
        %v2208 = vpop.permute.xlu0 %2207
        %2209 = vrot.lane.b32.xlu0 %v2012, 108
        %v2210 = vpop.permute.xlu0 %2209
        %2211 = vrot.lane.b32.xlu0 %v2009, 108
        %v2212 = vpop.permute.xlu0 %2211
        %2213 = vrot.lane.b32.xlu0 %v1991, 108
        %v2214 = vpop.permute.xlu0 %2213
        %2215 = vrot.lane.b32.xlu0 %v2013, 108
        %v2216 = vpop.permute.xlu0 %2215
        %2217 = vrot.lane.b32.xlu0 %v2010, 108
        %v2218 = vpop.permute.xlu0 %2217
        %2219 = vrot.lane.b32.xlu0 %v1993, 108
        %v2220 = vpop.permute.xlu0 %2219
        %2221 = vrot.lane.b32.xlu0 %v2014, 108
        %v2222 = vpop.permute.xlu0 %2221
        %v2223 = vsel %vm901, %v2200, %v2202
        %v2224 = vsel %vm901, %v2202, %v2204
        %v2225 = vsel %vm901, %v2206, %v2208
        %v2226 = vsel %vm901, %v2208, %v2210
        %v2227 = vsel %vm901, %v2212, %v2214
        %v2228 = vsel %vm901, %v2214, %v2216
        %v2229 = vsel %vm901, %v2218, %v2220
        %v2230 = vsel %vm901, %v2220, %v2222
        %2243 = vrot.lane.b32.xlu0 %v2007, 92
        %v2244 = vpop.permute.xlu0 %2243
        %2245 = vrot.lane.b32.xlu0 %v1987, 92
        %v2246 = vpop.permute.xlu0 %2245
        %2247 = vrot.lane.b32.xlu0 %v2011, 92
        %v2248 = vpop.permute.xlu0 %2247
        %2249 = vrot.lane.b32.xlu0 %v2008, 92
        %v2250 = vpop.permute.xlu0 %2249
        %2251 = vrot.lane.b32.xlu0 %v1989, 92
        %v2252 = vpop.permute.xlu0 %2251
        %2253 = vrot.lane.b32.xlu0 %v2012, 92
        %v2254 = vpop.permute.xlu0 %2253
        %2255 = vrot.lane.b32.xlu0 %v2009, 92
        %v2256 = vpop.permute.xlu0 %2255
        %2257 = vrot.lane.b32.xlu0 %v1991, 92
        %v2258 = vpop.permute.xlu0 %2257
        %2259 = vrot.lane.b32.xlu0 %v2013, 92
        %v2260 = vpop.permute.xlu0 %2259
        %2261 = vrot.lane.b32.xlu0 %v2010, 92
        %v2262 = vpop.permute.xlu0 %2261
        %2263 = vrot.lane.b32.xlu0 %v1993, 92
        %v2264 = vpop.permute.xlu0 %2263
        %2265 = vrot.lane.b32.xlu0 %v2014, 92
        %v2266 = vpop.permute.xlu0 %2265
        %v2267 = vsel %vm913, %v2244, %v2246
        %v2268 = vsel %vm913, %v2246, %v2248
        %v2269 = vsel %vm913, %v2250, %v2252
        %v2270 = vsel %vm913, %v2252, %v2254
        %v2271 = vsel %vm913, %v2256, %v2258
        %v2272 = vsel %vm913, %v2258, %v2260
        %v2273 = vsel %vm913, %v2262, %v2264
        %v2274 = vsel %vm913, %v2264, %v2266
        %2287 = vrot.lane.b32.xlu0 %v2007, 91
        %v2288 = vpop.permute.xlu0 %2287
        %2289 = vrot.lane.b32.xlu0 %v1987, 91
        %v2290 = vpop.permute.xlu0 %2289
        %2291 = vrot.lane.b32.xlu0 %v2011, 91
        %v2292 = vpop.permute.xlu0 %2291
        %2293 = vrot.lane.b32.xlu0 %v2008, 91
        %v2294 = vpop.permute.xlu0 %2293
        %2295 = vrot.lane.b32.xlu0 %v1989, 91
        %v2296 = vpop.permute.xlu0 %2295
        %2297 = vrot.lane.b32.xlu0 %v2012, 91
        %v2298 = vpop.permute.xlu0 %2297
        %2299 = vrot.lane.b32.xlu0 %v2009, 91
        %v2300 = vpop.permute.xlu0 %2299
        %2301 = vrot.lane.b32.xlu0 %v1991, 91
        %v2302 = vpop.permute.xlu0 %2301
        %2303 = vrot.lane.b32.xlu0 %v2013, 91
        %v2304 = vpop.permute.xlu0 %2303
        %2305 = vrot.lane.b32.xlu0 %v2010, 91
        %v2306 = vpop.permute.xlu0 %2305
        %2307 = vrot.lane.b32.xlu0 %v1993, 91
        %v2308 = vpop.permute.xlu0 %2307
        %2309 = vrot.lane.b32.xlu0 %v2014, 91
        %v2310 = vpop.permute.xlu0 %2309
        %v2311 = vsel %vm925, %v2288, %v2290
        %v2312 = vsel %vm925, %v2290, %v2292
        %v2313 = vsel %vm925, %v2294, %v2296
        %v2314 = vsel %vm925, %v2296, %v2298
        %v2315 = vsel %vm925, %v2300, %v2302
        %v2316 = vsel %vm925, %v2302, %v2304
        %v2317 = vsel %vm925, %v2306, %v2308
        %v2318 = vsel %vm925, %v2308, %v2310
        %2331 = vrot.lane.b32.xlu0 %v2007, 90
        %v2332 = vpop.permute.xlu0 %2331
        %2333 = vrot.lane.b32.xlu0 %v1987, 90
        %v2334 = vpop.permute.xlu0 %2333
        %2335 = vrot.lane.b32.xlu0 %v2011, 90
        %v2336 = vpop.permute.xlu0 %2335
        %2337 = vrot.lane.b32.xlu0 %v2008, 90
        %v2338 = vpop.permute.xlu0 %2337
        %2339 = vrot.lane.b32.xlu0 %v1989, 90
        %v2340 = vpop.permute.xlu0 %2339
        %2341 = vrot.lane.b32.xlu0 %v2012, 90
        %v2342 = vpop.permute.xlu0 %2341
        %2343 = vrot.lane.b32.xlu0 %v2009, 90
        %v2344 = vpop.permute.xlu0 %2343
        %2345 = vrot.lane.b32.xlu0 %v1991, 90
        %v2346 = vpop.permute.xlu0 %2345
        %2347 = vrot.lane.b32.xlu0 %v2013, 90
        %v2348 = vpop.permute.xlu0 %2347
        %2349 = vrot.lane.b32.xlu0 %v2010, 90
        %v2350 = vpop.permute.xlu0 %2349
        %2351 = vrot.lane.b32.xlu0 %v1993, 90
        %v2352 = vpop.permute.xlu0 %2351
        %2353 = vrot.lane.b32.xlu0 %v2014, 90
        %v2354 = vpop.permute.xlu0 %2353
        %v2355 = vsel %vm937, %v2332, %v2334
        %v2356 = vsel %vm937, %v2334, %v2336
        %v2357 = vsel %vm937, %v2338, %v2340
        %v2358 = vsel %vm937, %v2340, %v2342
        %v2359 = vsel %vm937, %v2344, %v2346
        %v2360 = vsel %vm937, %v2346, %v2348
        %v2361 = vsel %vm937, %v2350, %v2352
        %v2362 = vsel %vm937, %v2352, %v2354
        %2376 = vset.pattern.permute.xlu0 0
        %2377 = vperm.xlu0 %2376, %v1943
        %v2378 = vpop.permute.xlu0 %2377
        %2381 = vset.pattern.permute.xlu0 0
        %2382 = vperm.xlu0 %2381, %v1944
        %v2383 = vpop.permute.xlu0 %2382
        %2386 = vset.pattern.permute.xlu0 0
        %2387 = vperm.xlu0 %2386, %v1945
        %v2388 = vpop.permute.xlu0 %2387
        %2391 = vset.pattern.permute.xlu0 0
        %2392 = vperm.xlu0 %2391, %v1946
        %v2393 = vpop.permute.xlu0 %2392
        %2396 = vset.pattern.permute.xlu0 0
        %2397 = vperm.xlu0 %2396, %v1947
        %v2398 = vpop.permute.xlu0 %2397
        %2401 = vset.pattern.permute.xlu0 0
        %2402 = vperm.xlu0 %2401, %v1948
        %v2403 = vpop.permute.xlu0 %2402
        %2406 = vset.pattern.permute.xlu0 0
        %2407 = vperm.xlu0 %2406, %v1949
        %v2408 = vpop.permute.xlu0 %2407
        %2411 = vset.pattern.permute.xlu0 0
        %2412 = vperm.xlu0 %2411, %v1950
        %v2413 = vpop.permute.xlu0 %2412
        %vm2415 = vcmask 261120
        %v2417 = vsel %vm2415, %v1921, 0
        %v2420 = vsel %vm2415, %v1924, 0
        %v2423 = vsel %vm2415, %v1927, 0
        %v2426 = vsel %vm2415, %v1930, 0
        %v2429 = vsel %vm2415, %v1933, 0
        %v2432 = vsel %vm2415, %v1936, 0
        %v2435 = vsel %vm2415, %v1939, 0
        %v2438 = vsel %vm2415, %v1942, 0
        %2440 = vmatprep.subr.mxu0 %v2142
        %2441 = vmatpush1.msra.mxu0 %v2141
        %2442 = vmatprep.subr.mxu0 %v2140
        %2443 = vmatpush1.msra.mxu0 %v2139
        %2444 = vmatprep.subr.mxu0 %v2138
        %2445 = vmatpush1.msra.mxu0 %v2137
        %2446 = vmatprep.subr.mxu0 %v2136
        %2447 = vmatpush1.msra.mxu0 %v2135
        %2448 = vmatprep.subr.mxu0 %v2098
        %2449 = vmatpush1.msra.mxu0 %v2097
        %2450 = vmatprep.subr.mxu0 %v2096
        %2451 = vmatpush1.msra.mxu0 %v2095
        %2452 = vmatprep.subr.mxu0 %v2094
        %2453 = vmatpush1.msra.mxu0 %v2093
        %2454 = vmatprep.subr.mxu0 %v2092
        %2455 = vmatpush1.msra.mxu0 %v2091
        %2456 = vmatprep.subr.mxu0 %v2054
        %2457 = vmatpush1.msra.mxu0 %v2053
        %2458 = vmatprep.subr.mxu0 %v2052
        %2459 = vmatpush1.msra.mxu0 %v2051
        %2460 = vmatprep.subr.mxu0 %v2050
        %2461 = vmatpush1.msra.mxu0 %v2049
        %2462 = vmatprep.subr.mxu0 %v2048
        %2463 = vmatpush1.msra.mxu0 %v2047
        %2464 = vmatprep.subr.mxu0 %v1993
        %2465 = vmatpush1.msra.mxu0 %v2010
        %2466 = vmatprep.subr.mxu0 %v1991
        %2467 = vmatpush1.msra.mxu0 %v2009
        %2468 = vmatprep.subr.mxu0 %v1989
        %2469 = vmatpush1.msra.mxu0 %v2008
        %2470 = vmatprep.subr.mxu0 %v1987
        %2471 = vmatpush1.msra.mxu0 %v2007
        %2472 = vmatprep.subr.mxu0 %v2318
        %2473 = vmatpush2.msra.mxu0 %v2317
        %2474 = vmatprep.subr.mxu0 %v2316
        %2475 = vmatpush2.msra.mxu0 %v2315
        %2476 = vmatprep.subr.mxu0 %v2314
        %2477 = vmatpush2.msra.mxu0 %v2313
        %2478 = vmatprep.subr.mxu0 %v2312
        %2479 = vmatpush2.msra.mxu0 %v2311
        %2480 = vmatprep.subr.mxu0 %v2274
        %2481 = vmatpush2.msra.mxu0 %v2273
        %2482 = vmatprep.subr.mxu0 %v2272
        %2483 = vmatpush2.msra.mxu0 %v2271
        %2484 = vmatprep.subr.mxu0 %v2270
        %2485 = vmatpush2.msra.mxu0 %v2269
        %2486 = vmatprep.subr.mxu0 %v2268
        %2487 = vmatpush2.msra.mxu0 %v2267
        %2488 = vmatprep.subr.mxu0 %v2230
        %2489 = vmatpush2.msra.mxu0 %v2229
        %2490 = vmatprep.subr.mxu0 %v2228
        %2491 = vmatpush2.msra.mxu0 %v2227
        %2492 = vmatprep.subr.mxu0 %v2226
        %2493 = vmatpush2.msra.mxu0 %v2225
        %2494 = vmatprep.subr.mxu0 %v2224
        %2495 = vmatpush2.msra.mxu0 %v2223
        %2496 = vmatprep.subr.mxu0 %v2186
        %2497 = vmatpush2.msra.mxu0 %v2185
        %2498 = vmatprep.subr.mxu0 %v2184
        %2499 = vmatpush2.msra.mxu0 %v2183
        %2500 = vmatprep.subr.mxu0 %v2182
        %2501 = vmatpush2.msra.mxu0 %v2181
        %2502 = vmatprep.subr.mxu0 %v2180
        %2503 = vmatpush2.msra.mxu0 %v2179
        %2504 = vmatprep.mubr.f32.mxu0 %v1920
        %2505 = vmatmul.mubr.f32.gmra.mxu0 %v1919
        %v2506 = vpop.f32.mrf.mxu0
        %v2507 = vadd.f32 %v2378, %v2506
        %v2508 = vpop.f32.mrf.mxu0
        %v2509 = vadd.f32 %v2378, %v2508
        %2510 = vmatprep.mubr.f32.mxu0 %v1923
        %2511 = vmatmul.mubr.f32.gmra.mxu0 %v1922
        %v2512 = vpop.f32.mrf.mxu0
        %v2513 = vadd.f32 %v2383, %v2512
        %v2514 = vpop.f32.mrf.mxu0
        %v2515 = vadd.f32 %v2383, %v2514
        %2516 = vmatprep.mubr.f32.mxu0 %v1926
        %2517 = vmatmul.mubr.f32.gmra.mxu0 %v1925
        %v2518 = vpop.f32.mrf.mxu0
        %v2519 = vadd.f32 %v2388, %v2518
        %v2520 = vpop.f32.mrf.mxu0
        %v2521 = vadd.f32 %v2388, %v2520
        %2522 = vmatprep.mubr.f32.mxu0 %v1929
        %2523 = vmatmul.mubr.f32.gmra.mxu0 %v1928
        %v2524 = vpop.f32.mrf.mxu0
        %v2525 = vadd.f32 %v2393, %v2524
        %v2526 = vpop.f32.mrf.mxu0
        %v2527 = vadd.f32 %v2393, %v2526
        %2528 = vmatprep.mubr.f32.mxu0 %v1932
        %2529 = vmatmul.mubr.f32.gmra.mxu0 %v1931
        %v2530 = vpop.f32.mrf.mxu0
        %v2531 = vadd.f32 %v2398, %v2530
        %v2532 = vpop.f32.mrf.mxu0
        %v2533 = vadd.f32 %v2398, %v2532
        %2534 = vmatprep.mubr.f32.mxu0 %v1935
        %2535 = vmatmul.mubr.f32.gmra.mxu0 %v1934
        %v2536 = vpop.f32.mrf.mxu0
        %v2537 = vadd.f32 %v2403, %v2536
        %v2538 = vpop.f32.mrf.mxu0
        %v2539 = vadd.f32 %v2403, %v2538
        %2540 = vmatprep.mubr.f32.mxu0 %v1938
        %2541 = vmatmul.mubr.f32.gmra.mxu0 %v1937
        %v2542 = vpop.f32.mrf.mxu0
        %v2543 = vadd.f32 %v2408, %v2542
        %v2544 = vpop.f32.mrf.mxu0
        %v2545 = vadd.f32 %v2408, %v2544
        %2546 = vmatprep.mubr.f32.mxu0 %v1941
        %2547 = vmatmul.mubr.f32.gmra.mxu0 %v1940
        %v2548 = vpop.f32.mrf.mxu0
        %v2549 = vadd.f32 %v2413, %v2548
        %v2550 = vpop.f32.mrf.mxu0
        %v2551 = vadd.f32 %v2413, %v2550
        %2552 = vdwg.mxu0
        %2553 = vmatprep.subr.mxu0 0.0
        %2554 = vmatpush1.msra.mxu0 0.0
        %2555 = vmatprep.subr.mxu0 0.0
        %2556 = vmatpush1.msra.mxu0 0.0
        %2557 = vmatprep.subr.mxu0 0.0
        %2558 = vmatpush1.msra.mxu0 0.0
        %2559 = vmatprep.subr.mxu0 0.0
        %2560 = vmatpush1.msra.mxu0 0.0
        %2561 = vmatprep.subr.mxu0 0.0
        %2562 = vmatpush1.msra.mxu0 0.0
        %2563 = vmatprep.subr.mxu0 0.0
        %2564 = vmatpush1.msra.mxu0 0.0
        %2565 = vmatprep.subr.mxu0 0.0
        %2566 = vmatpush1.msra.mxu0 0.0
        %2567 = vmatprep.subr.mxu0 0.0
        %2568 = vmatpush1.msra.mxu0 0.0
        %2569 = vmatprep.subr.mxu0 0.0
        %2570 = vmatpush1.msra.mxu0 0.0
        %2571 = vmatprep.subr.mxu0 0.0
        %2572 = vmatpush1.msra.mxu0 0.0
        %2573 = vmatprep.subr.mxu0 0.0
        %2574 = vmatpush1.msra.mxu0 0.0
        %2575 = vmatprep.subr.mxu0 0.0
        %2576 = vmatpush1.msra.mxu0 0.0
        %2577 = vmatprep.subr.mxu0 %v2362
        %2578 = vmatpush1.msra.mxu0 %v2361
        %2579 = vmatprep.subr.mxu0 %v2360
        %2580 = vmatpush1.msra.mxu0 %v2359
        %2581 = vmatprep.subr.mxu0 %v2358
        %2582 = vmatpush1.msra.mxu0 %v2357
        %2583 = vmatprep.subr.mxu0 %v2356
        %2584 = vmatpush1.msra.mxu0 %v2355
        %2585 = vmatprep.subr.mxu0 0.0
        %2586 = vmatpush2.msra.mxu0 0.0
        %2587 = vmatprep.subr.mxu0 0.0
        %2588 = vmatpush2.msra.mxu0 0.0
        %2589 = vmatprep.subr.mxu0 0.0
        %2590 = vmatpush2.msra.mxu0 0.0
        %2591 = vmatprep.subr.mxu0 0.0
        %2592 = vmatpush2.msra.mxu0 0.0
        %2593 = vmatprep.subr.mxu0 0.0
        %2594 = vmatpush2.msra.mxu0 0.0
        %2595 = vmatprep.subr.mxu0 0.0
        %2596 = vmatpush2.msra.mxu0 0.0
        %2597 = vmatprep.subr.mxu0 0.0
        %2598 = vmatpush2.msra.mxu0 0.0
        %2599 = vmatprep.subr.mxu0 0.0
        %2600 = vmatpush2.msra.mxu0 0.0
        %2601 = vmatprep.subr.mxu0 0.0
        %2602 = vmatpush2.msra.mxu0 0.0
        %2603 = vmatprep.subr.mxu0 0.0
        %2604 = vmatpush2.msra.mxu0 0.0
        %2605 = vmatprep.subr.mxu0 0.0
        %2606 = vmatpush2.msra.mxu0 0.0
        %2607 = vmatprep.subr.mxu0 0.0
        %2608 = vmatpush2.msra.mxu0 0.0
        %2609 = vmatprep.subr.mxu0 0.0
        %2610 = vmatpush2.msra.mxu0 0.0
        %2611 = vmatprep.subr.mxu0 0.0
        %2612 = vmatpush2.msra.mxu0 0.0
        %2613 = vmatprep.subr.mxu0 0.0
        %2614 = vmatpush2.msra.mxu0 0.0
        %2615 = vmatprep.subr.mxu0 0.0
        %2616 = vmatpush2.msra.mxu0 0.0
        %2617 = vmatprep.mubr.f32.mxu0 0.0
        %2618 = vmatmul.mubr.f32.gmra.mxu0 %v2417
        %v2619 = vpop.f32.mrf.mxu0
        %v2620 = vadd.f32 %v2507, %v2619
        %v2621 = vpop.f32.mrf.mxu0
        %v2622 = vadd.f32 %v2509, %v2621
        %2623 = vmatprep.mubr.f32.mxu0 0.0
        %2624 = vmatmul.mubr.f32.gmra.mxu0 %v2420
        %v2625 = vpop.f32.mrf.mxu0
        %v2626 = vadd.f32 %v2513, %v2625
        %v2627 = vpop.f32.mrf.mxu0
        %v2628 = vadd.f32 %v2515, %v2627
        %2629 = vmatprep.mubr.f32.mxu0 0.0
        %2630 = vmatmul.mubr.f32.gmra.mxu0 %v2423
        %v2631 = vpop.f32.mrf.mxu0
        %v2632 = vadd.f32 %v2519, %v2631
        %v2633 = vpop.f32.mrf.mxu0
        %v2634 = vadd.f32 %v2521, %v2633
        %2635 = vmatprep.mubr.f32.mxu0 0.0
        %2636 = vmatmul.mubr.f32.gmra.mxu0 %v2426
        %v2637 = vpop.f32.mrf.mxu0
        %v2638 = vadd.f32 %v2525, %v2637
        %v2639 = vpop.f32.mrf.mxu0
        %v2640 = vadd.f32 %v2527, %v2639
        %2641 = vmatprep.mubr.f32.mxu0 0.0
        %2642 = vmatmul.mubr.f32.gmra.mxu0 %v2429
        %v2643 = vpop.f32.mrf.mxu0
        %v2644 = vadd.f32 %v2531, %v2643
        %v2645 = vpop.f32.mrf.mxu0
        %v2646 = vadd.f32 %v2533, %v2645
        %2647 = vmatprep.mubr.f32.mxu0 0.0
        %2648 = vmatmul.mubr.f32.gmra.mxu0 %v2432
        %v2649 = vpop.f32.mrf.mxu0
        %v2650 = vadd.f32 %v2537, %v2649
        %v2651 = vpop.f32.mrf.mxu0
        %v2652 = vadd.f32 %v2539, %v2651
        %2653 = vmatprep.mubr.f32.mxu0 0.0
        %2654 = vmatmul.mubr.f32.gmra.mxu0 %v2435
        %v2655 = vpop.f32.mrf.mxu0
        %v2656 = vadd.f32 %v2543, %v2655
        %v2657 = vpop.f32.mrf.mxu0
        %v2658 = vadd.f32 %v2545, %v2657
        %2659 = vmatprep.mubr.f32.mxu0 0.0
        %2660 = vmatmul.mubr.f32.gmra.mxu0 %v2438
        %v2661 = vpop.f32.mrf.mxu0
        %v2662 = vadd.f32 %v2549, %v2661
        %v2663 = vpop.f32.mrf.mxu0
        %v2664 = vadd.f32 %v2551, %v2663
        %2665 = vdwg.mxu0
        %2666 = vmatprep.subr.mxu0 0.0
        %2667 = vmatpush1.msra.mxu0 %v2134
        %2668 = vmatprep.subr.mxu0 0.0
        %2669 = vmatpush1.msra.mxu0 %v2128
        %2670 = vmatprep.subr.mxu0 0.0
        %2671 = vmatpush1.msra.mxu0 %v2122
        %2672 = vmatprep.subr.mxu0 0.0
        %2673 = vmatpush1.msra.mxu0 %v2116
        %2674 = vmatprep.subr.mxu0 0.0
        %2675 = vmatpush1.msra.mxu0 %v2090
        %2676 = vmatprep.subr.mxu0 0.0
        %2677 = vmatpush1.msra.mxu0 %v2084
        %2678 = vmatprep.subr.mxu0 0.0
        %2679 = vmatpush1.msra.mxu0 %v2078
        %2680 = vmatprep.subr.mxu0 0.0
        %2681 = vmatpush1.msra.mxu0 %v2072
        %2682 = vmatprep.subr.mxu0 0.0
        %2683 = vmatpush1.msra.mxu0 %v2046
        %2684 = vmatprep.subr.mxu0 0.0
        %2685 = vmatpush1.msra.mxu0 %v2040
        %2686 = vmatprep.subr.mxu0 0.0
        %2687 = vmatpush1.msra.mxu0 %v2034
        %2688 = vmatprep.subr.mxu0 0.0
        %2689 = vmatpush1.msra.mxu0 %v2028
        %2690 = vmatprep.subr.mxu0 0.0
        %2691 = vmatpush1.msra.mxu0 %v2014
        %2692 = vmatprep.subr.mxu0 0.0
        %2693 = vmatpush1.msra.mxu0 %v2013
        %2694 = vmatprep.subr.mxu0 0.0
        %2695 = vmatpush1.msra.mxu0 %v2012
        %2696 = vmatprep.subr.mxu0 0.0
        %2697 = vmatpush1.msra.mxu0 %v2011
        %2698 = vmatprep.subr.mxu0 0.0
        %2699 = vmatpush2.msra.mxu0 %v2310
        %2700 = vmatprep.subr.mxu0 0.0
        %2701 = vmatpush2.msra.mxu0 %v2304
        %2702 = vmatprep.subr.mxu0 0.0
        %2703 = vmatpush2.msra.mxu0 %v2298
        %2704 = vmatprep.subr.mxu0 0.0
        %2705 = vmatpush2.msra.mxu0 %v2292
        %2706 = vmatprep.subr.mxu0 0.0
        %2707 = vmatpush2.msra.mxu0 %v2266
        %2708 = vmatprep.subr.mxu0 0.0
        %2709 = vmatpush2.msra.mxu0 %v2260
        %2710 = vmatprep.subr.mxu0 0.0
        %2711 = vmatpush2.msra.mxu0 %v2254
        %2712 = vmatprep.subr.mxu0 0.0
        %2713 = vmatpush2.msra.mxu0 %v2248
        %2714 = vmatprep.subr.mxu0 0.0
        %2715 = vmatpush2.msra.mxu0 %v2222
        %2716 = vmatprep.subr.mxu0 0.0
        %2717 = vmatpush2.msra.mxu0 %v2216
        %2718 = vmatprep.subr.mxu0 0.0
        %2719 = vmatpush2.msra.mxu0 %v2210
        %2720 = vmatprep.subr.mxu0 0.0
        %2721 = vmatpush2.msra.mxu0 %v2204
        %2722 = vmatprep.subr.mxu0 0.0
        %2723 = vmatpush2.msra.mxu0 %v2178
        %2724 = vmatprep.subr.mxu0 0.0
        %2725 = vmatpush2.msra.mxu0 %v2172
        %2726 = vmatprep.subr.mxu0 0.0
        %2727 = vmatpush2.msra.mxu0 %v2166
        %2728 = vmatprep.subr.mxu0 0.0
        %2729 = vmatpush2.msra.mxu0 %v2160
        %2730 = vmatprep.mubr.f32.mxu0 %v1920
        %2731 = vmatmul.mubr.f32.gmra.mxu0 %v1919
        %v2732 = vpop.f32.mrf.mxu0
        %v2733 = vadd.f32 %v2378, %v2732
        %v2734 = vpop.f32.mrf.mxu0
        %2735 = vmatprep.mubr.f32.mxu0 %v1923
        %2736 = vmatmul.mubr.f32.gmra.mxu0 %v1922
        %v2737 = vpop.f32.mrf.mxu0
        %v2738 = vadd.f32 %v2383, %v2737
        %v2739 = vpop.f32.mrf.mxu0
        %2740 = vmatprep.mubr.f32.mxu0 %v1926
        %2741 = vmatmul.mubr.f32.gmra.mxu0 %v1925
        %v2742 = vpop.f32.mrf.mxu0
        %v2743 = vadd.f32 %v2388, %v2742
        %v2744 = vpop.f32.mrf.mxu0
        %2745 = vmatprep.mubr.f32.mxu0 %v1929
        %2746 = vmatmul.mubr.f32.gmra.mxu0 %v1928
        %v2747 = vpop.f32.mrf.mxu0
        %v2748 = vadd.f32 %v2393, %v2747
        %v2749 = vpop.f32.mrf.mxu0
        %2750 = vmatprep.mubr.f32.mxu0 %v1932
        %2751 = vmatmul.mubr.f32.gmra.mxu0 %v1931
        %v2752 = vpop.f32.mrf.mxu0
        %v2753 = vadd.f32 %v2398, %v2752
        %v2754 = vpop.f32.mrf.mxu0
        %2755 = vmatprep.mubr.f32.mxu0 %v1935
        %2756 = vmatmul.mubr.f32.gmra.mxu0 %v1934
        %v2757 = vpop.f32.mrf.mxu0
        %v2758 = vadd.f32 %v2403, %v2757
        %v2759 = vpop.f32.mrf.mxu0
        %2760 = vmatprep.mubr.f32.mxu0 %v1938
        %2761 = vmatmul.mubr.f32.gmra.mxu0 %v1937
        %v2762 = vpop.f32.mrf.mxu0
        %v2763 = vadd.f32 %v2408, %v2762
        %v2764 = vpop.f32.mrf.mxu0
        %2765 = vmatprep.mubr.f32.mxu0 %v1941
        %2766 = vmatmul.mubr.f32.gmra.mxu0 %v1940
        %v2767 = vpop.f32.mrf.mxu0
        %v2768 = vadd.f32 %v2413, %v2767
        %v2769 = vpop.f32.mrf.mxu0
        %2770 = vdwg.mxu0
        %2771 = vmatprep.subr.mxu0 0.0
        %2772 = vmatpush1.msra.mxu0 0.0
        %2773 = vmatprep.subr.mxu0 0.0
        %2774 = vmatpush1.msra.mxu0 0.0
        %2775 = vmatprep.subr.mxu0 0.0
        %2776 = vmatpush1.msra.mxu0 0.0
        %2777 = vmatprep.subr.mxu0 0.0
        %2778 = vmatpush1.msra.mxu0 0.0
        %2779 = vmatprep.subr.mxu0 0.0
        %2780 = vmatpush1.msra.mxu0 0.0
        %2781 = vmatprep.subr.mxu0 0.0
        %2782 = vmatpush1.msra.mxu0 0.0
        %2783 = vmatprep.subr.mxu0 0.0
        %2784 = vmatpush1.msra.mxu0 0.0
        %2785 = vmatprep.subr.mxu0 0.0
        %2786 = vmatpush1.msra.mxu0 0.0
        %2787 = vmatprep.subr.mxu0 0.0
        %2788 = vmatpush1.msra.mxu0 0.0
        %2789 = vmatprep.subr.mxu0 0.0
        %2790 = vmatpush1.msra.mxu0 0.0
        %2791 = vmatprep.subr.mxu0 0.0
        %2792 = vmatpush1.msra.mxu0 0.0
        %2793 = vmatprep.subr.mxu0 0.0
        %2794 = vmatpush1.msra.mxu0 0.0
        %2795 = vmatprep.subr.mxu0 0.0
        %2796 = vmatpush1.msra.mxu0 %v2354
        %2797 = vmatprep.subr.mxu0 0.0
        %2798 = vmatpush1.msra.mxu0 %v2348
        %2799 = vmatprep.subr.mxu0 0.0
        %2800 = vmatpush1.msra.mxu0 %v2342
        %2801 = vmatprep.subr.mxu0 0.0
        %2802 = vmatpush1.msra.mxu0 %v2336
        %2803 = vmatprep.subr.mxu0 0.0
        %2804 = vmatpush2.msra.mxu0 0.0
        %2805 = vmatprep.subr.mxu0 0.0
        %2806 = vmatpush2.msra.mxu0 0.0
        %2807 = vmatprep.subr.mxu0 0.0
        %2808 = vmatpush2.msra.mxu0 0.0
        %2809 = vmatprep.subr.mxu0 0.0
        %2810 = vmatpush2.msra.mxu0 0.0
        %2811 = vmatprep.subr.mxu0 0.0
        %2812 = vmatpush2.msra.mxu0 0.0
        %2813 = vmatprep.subr.mxu0 0.0
        %2814 = vmatpush2.msra.mxu0 0.0
        %2815 = vmatprep.subr.mxu0 0.0
        %2816 = vmatpush2.msra.mxu0 0.0
        %2817 = vmatprep.subr.mxu0 0.0
        %2818 = vmatpush2.msra.mxu0 0.0
        %2819 = vmatprep.subr.mxu0 0.0
        %2820 = vmatpush2.msra.mxu0 0.0
        %2821 = vmatprep.subr.mxu0 0.0
        %2822 = vmatpush2.msra.mxu0 0.0
        %2823 = vmatprep.subr.mxu0 0.0
        %2824 = vmatpush2.msra.mxu0 0.0
        %2825 = vmatprep.subr.mxu0 0.0
        %2826 = vmatpush2.msra.mxu0 0.0
        %2827 = vmatprep.subr.mxu0 0.0
        %2828 = vmatpush2.msra.mxu0 0.0
        %2829 = vmatprep.subr.mxu0 0.0
        %2830 = vmatpush2.msra.mxu0 0.0
        %2831 = vmatprep.subr.mxu0 0.0
        %2832 = vmatpush2.msra.mxu0 0.0
        %2833 = vmatprep.subr.mxu0 0.0
        %2834 = vmatpush2.msra.mxu0 0.0
        %2835 = vmatprep.mubr.f32.mxu0 0.0
        %2836 = vmatmul.mubr.f32.gmra.mxu0 %v2417
        %v2837 = vpop.f32.mrf.mxu0
        %v2838 = vadd.f32 %v2733, %v2837
        %v2839 = vpop.f32.mrf.mxu0
        %2840 = vmatprep.mubr.f32.mxu0 0.0
        %2841 = vmatmul.mubr.f32.gmra.mxu0 %v2420
        %v2842 = vpop.f32.mrf.mxu0
        %v2843 = vadd.f32 %v2738, %v2842
        %v2844 = vpop.f32.mrf.mxu0
        %2845 = vmatprep.mubr.f32.mxu0 0.0
        %2846 = vmatmul.mubr.f32.gmra.mxu0 %v2423
        %v2847 = vpop.f32.mrf.mxu0
        %v2848 = vadd.f32 %v2743, %v2847
        %v2849 = vpop.f32.mrf.mxu0
        %2850 = vmatprep.mubr.f32.mxu0 0.0
        %2851 = vmatmul.mubr.f32.gmra.mxu0 %v2426
        %v2852 = vpop.f32.mrf.mxu0
        %v2853 = vadd.f32 %v2748, %v2852
        %v2854 = vpop.f32.mrf.mxu0
        %2855 = vmatprep.mubr.f32.mxu0 0.0
        %2856 = vmatmul.mubr.f32.gmra.mxu0 %v2429
        %v2857 = vpop.f32.mrf.mxu0
        %v2858 = vadd.f32 %v2753, %v2857
        %v2859 = vpop.f32.mrf.mxu0
        %2860 = vmatprep.mubr.f32.mxu0 0.0
        %2861 = vmatmul.mubr.f32.gmra.mxu0 %v2432
        %v2862 = vpop.f32.mrf.mxu0
        %v2863 = vadd.f32 %v2758, %v2862
        %v2864 = vpop.f32.mrf.mxu0
        %2865 = vmatprep.mubr.f32.mxu0 0.0
        %2866 = vmatmul.mubr.f32.gmra.mxu0 %v2435
        %v2867 = vpop.f32.mrf.mxu0
        %v2868 = vadd.f32 %v2763, %v2867
        %v2869 = vpop.f32.mrf.mxu0
        %2870 = vmatprep.mubr.f32.mxu0 0.0
        %2871 = vmatmul.mubr.f32.gmra.mxu0 %v2438
        %v2872 = vpop.f32.mrf.mxu0
        %v2873 = vadd.f32 %v2768, %v2872
        %v2874 = vpop.f32.mrf.mxu0
        %2875 = vdwg.mxu0
        %vm2876 = vcmp.gt.f32.partialorder %v2620, 0.0
        %vm2877 = vcmp.gt.f32.partialorder %v2622, 0.0
        %vm2878 = vcmp.gt.f32.partialorder %v2838, 0.0
        %vm2879 = vcmp.gt.f32.partialorder %v2626, 0.0
        %vm2880 = vcmp.gt.f32.partialorder %v2628, 0.0
        %vm2881 = vcmp.gt.f32.partialorder %v2843, 0.0
        %vm2882 = vcmp.gt.f32.partialorder %v2632, 0.0
        %vm2883 = vcmp.gt.f32.partialorder %v2634, 0.0
        %vm2884 = vcmp.gt.f32.partialorder %v2848, 0.0
        %vm2885 = vcmp.gt.f32.partialorder %v2638, 0.0
        %vm2886 = vcmp.gt.f32.partialorder %v2640, 0.0
        %vm2887 = vcmp.gt.f32.partialorder %v2853, 0.0
        %vm2888 = vcmp.gt.f32.partialorder %v2644, 0.0
        %vm2889 = vcmp.gt.f32.partialorder %v2646, 0.0
        %vm2890 = vcmp.gt.f32.partialorder %v2858, 0.0
        %vm2891 = vcmp.gt.f32.partialorder %v2650, 0.0
        %vm2892 = vcmp.gt.f32.partialorder %v2652, 0.0
        %vm2893 = vcmp.gt.f32.partialorder %v2863, 0.0
        %vm2894 = vcmp.gt.f32.partialorder %v2656, 0.0
        %vm2895 = vcmp.gt.f32.partialorder %v2658, 0.0
        %vm2896 = vcmp.gt.f32.partialorder %v2868, 0.0
        %vm2897 = vcmp.gt.f32.partialorder %v2662, 0.0
        %vm2898 = vcmp.gt.f32.partialorder %v2664, 0.0
        %vm2899 = vcmp.gt.f32.partialorder %v2873, 0.0
        %v2900 = vmul.f32 %v2620, 0.2
        %v2901 = vmul.f32 %v2622, 0.2
        %v2902 = vmul.f32 %v2838, 0.2
        %v2903 = vmul.f32 %v2626, 0.2
        %v2904 = vmul.f32 %v2628, 0.2
        %v2905 = vmul.f32 %v2843, 0.2
        %v2906 = vmul.f32 %v2632, 0.2
        %v2907 = vmul.f32 %v2634, 0.2
        %v2908 = vmul.f32 %v2848, 0.2
        %v2909 = vmul.f32 %v2638, 0.2
        %v2910 = vmul.f32 %v2640, 0.2
        %v2911 = vmul.f32 %v2853, 0.2
        %v2912 = vmul.f32 %v2644, 0.2
        %v2913 = vmul.f32 %v2646, 0.2
        %v2914 = vmul.f32 %v2858, 0.2
        %v2915 = vmul.f32 %v2650, 0.2
        %v2916 = vmul.f32 %v2652, 0.2
        %v2917 = vmul.f32 %v2863, 0.2
        %v2918 = vmul.f32 %v2656, 0.2
        %v2919 = vmul.f32 %v2658, 0.2
        %v2920 = vmul.f32 %v2868, 0.2
        %v2921 = vmul.f32 %v2662, 0.2
        %v2922 = vmul.f32 %v2664, 0.2
        %v2923 = vmul.f32 %v2873, 0.2
        %v2924 = vsel %vm2876, %v2620, %v2900
        %v2925 = vsel %vm2877, %v2622, %v2901
        %v2926 = vsel %vm2878, %v2838, %v2902
        %v2927 = vsel %vm2879, %v2626, %v2903
        %v2928 = vsel %vm2880, %v2628, %v2904
        %v2929 = vsel %vm2881, %v2843, %v2905
        %v2930 = vsel %vm2882, %v2632, %v2906
        %v2931 = vsel %vm2883, %v2634, %v2907
        %v2932 = vsel %vm2884, %v2848, %v2908
        %v2933 = vsel %vm2885, %v2638, %v2909
        %v2934 = vsel %vm2886, %v2640, %v2910
        %v2935 = vsel %vm2887, %v2853, %v2911
        %v2936 = vsel %vm2888, %v2644, %v2912
        %v2937 = vsel %vm2889, %v2646, %v2913
        %v2938 = vsel %vm2890, %v2858, %v2914
        %v2939 = vsel %vm2891, %v2650, %v2915
        %v2940 = vsel %vm2892, %v2652, %v2916
        %v2941 = vsel %vm2893, %v2863, %v2917
        %v2942 = vsel %vm2894, %v2656, %v2918
        %v2943 = vsel %vm2895, %v2658, %v2919
        %v2944 = vsel %vm2896, %v2868, %v2920
        %v2945 = vsel %vm2897, %v2662, %v2921
        %v2946 = vsel %vm2898, %v2664, %v2922
        %v2947 = vsel %vm2899, %v2873, %v2923
        %v2948 = vmul.f32 %v2924, %v1122
        %v2949 = vmul.f32 %v2925, %v1126
        %v2950 = vmul.f32 %v2926, %v1130
        %v2951 = vmul.f32 %v2927, %v1122
        %v2952 = vmul.f32 %v2928, %v1126
        %v2953 = vmul.f32 %v2929, %v1130
        %v2954 = vmul.f32 %v2930, %v1122
        %v2955 = vmul.f32 %v2931, %v1126
        %v2956 = vmul.f32 %v2932, %v1130
        %v2957 = vmul.f32 %v2933, %v1122
        %v2958 = vmul.f32 %v2934, %v1126
        %v2959 = vmul.f32 %v2935, %v1130
        %v2960 = vmul.f32 %v2936, %v1122
        %v2961 = vmul.f32 %v2937, %v1126
        %v2962 = vmul.f32 %v2938, %v1130
        %v2963 = vmul.f32 %v2939, %v1122
        %v2964 = vmul.f32 %v2940, %v1126
        %v2965 = vmul.f32 %v2941, %v1130
        %v2966 = vmul.f32 %v2942, %v1122
        %v2967 = vmul.f32 %v2943, %v1126
        %v2968 = vmul.f32 %v2944, %v1130
        %v2969 = vmul.f32 %v2945, %v1122
        %v2970 = vmul.f32 %v2946, %v1126
        %v2971 = vmul.f32 %v2947, %v1130
        %v2972 = vld [vmem:[%s10] sm:$0x1f]
        %v2973 = vld [vmem:[#allocation3] sm:$0x1]
        %2998 = vrot.lane.b32.xlu0 %v2948, 19
        %v2999 = vpop.permute.xlu0 %2998
        %3000 = vrot.lane.b32.xlu0 %v2949, 19
        %v3001 = vpop.permute.xlu0 %3000
        %3002 = vrot.lane.b32.xlu0 %v2950, 19
        %v3003 = vpop.permute.xlu0 %3002
        %3004 = vrot.lane.b32.xlu0 %v2951, 19
        %v3005 = vpop.permute.xlu0 %3004
        %3006 = vrot.lane.b32.xlu0 %v2952, 19
        %v3007 = vpop.permute.xlu0 %3006
        %3008 = vrot.lane.b32.xlu0 %v2953, 19
        %v3009 = vpop.permute.xlu0 %3008
        %3010 = vrot.lane.b32.xlu0 %v2954, 19
        %v3011 = vpop.permute.xlu0 %3010
        %3012 = vrot.lane.b32.xlu0 %v2955, 19
        %v3013 = vpop.permute.xlu0 %3012
        %3014 = vrot.lane.b32.xlu0 %v2956, 19
        %v3015 = vpop.permute.xlu0 %3014
        %3016 = vrot.lane.b32.xlu0 %v2957, 19
        %v3017 = vpop.permute.xlu0 %3016
        %3018 = vrot.lane.b32.xlu0 %v2958, 19
        %v3019 = vpop.permute.xlu0 %3018
        %3020 = vrot.lane.b32.xlu0 %v2959, 19
        %v3021 = vpop.permute.xlu0 %3020
        %3022 = vrot.lane.b32.xlu0 %v2960, 19
        %v3023 = vpop.permute.xlu0 %3022
        %3024 = vrot.lane.b32.xlu0 %v2961, 19
        %v3025 = vpop.permute.xlu0 %3024
        %3026 = vrot.lane.b32.xlu0 %v2962, 19
        %v3027 = vpop.permute.xlu0 %3026
        %3028 = vrot.lane.b32.xlu0 %v2963, 19
        %v3029 = vpop.permute.xlu0 %3028
        %3030 = vrot.lane.b32.xlu0 %v2964, 19
        %v3031 = vpop.permute.xlu0 %3030
        %3032 = vrot.lane.b32.xlu0 %v2965, 19
        %v3033 = vpop.permute.xlu0 %3032
        %3034 = vrot.lane.b32.xlu0 %v2966, 19
        %v3035 = vpop.permute.xlu0 %3034
        %3036 = vrot.lane.b32.xlu0 %v2967, 19
        %v3037 = vpop.permute.xlu0 %3036
        %3038 = vrot.lane.b32.xlu0 %v2968, 19
        %v3039 = vpop.permute.xlu0 %3038
        %3040 = vrot.lane.b32.xlu0 %v2969, 19
        %v3041 = vpop.permute.xlu0 %3040
        %3042 = vrot.lane.b32.xlu0 %v2970, 19
        %v3043 = vpop.permute.xlu0 %3042
        %3044 = vrot.lane.b32.xlu0 %v2971, 19
        %v3045 = vpop.permute.xlu0 %3044
        %v3046 = vsel %vm834, %v2999, %v3001
        %v3047 = vsel %vm834, %v3001, %v3003
        %v3048 = vsel %vm834, %v3005, %v3007
        %v3049 = vsel %vm834, %v3007, %v3009
        %v3050 = vsel %vm834, %v3011, %v3013
        %v3051 = vsel %vm834, %v3013, %v3015
        %v3052 = vsel %vm834, %v3017, %v3019
        %v3053 = vsel %vm834, %v3019, %v3021
        %v3054 = vsel %vm834, %v3023, %v3025
        %v3055 = vsel %vm834, %v3025, %v3027
        %v3056 = vsel %vm834, %v3029, %v3031
        %v3057 = vsel %vm834, %v3031, %v3033
        %v3058 = vsel %vm834, %v3035, %v3037
        %v3059 = vsel %vm834, %v3037, %v3039
        %v3060 = vsel %vm834, %v3041, %v3043
        %v3061 = vsel %vm834, %v3043, %v3045
        %v3086 = vsel %vm834, 0.0, %v2999
        %v3087 = vsel %vm834, 0.0, %v3005
        %v3088 = vsel %vm834, 0.0, %v3011
        %v3089 = vsel %vm834, 0.0, %v3017
        %v3090 = vsel %vm834, 0.0, %v3023
        %v3091 = vsel %vm834, 0.0, %v3029
        %v3092 = vsel %vm834, 0.0, %v3035
        %v3093 = vsel %vm834, 0.0, %v3041
        %v3094 = vsel %vm841, %v3047, 0.0
        %v3095 = vsel %vm841, %v3049, 0.0
        %v3096 = vsel %vm841, %v3051, 0.0
        %v3097 = vsel %vm841, %v3053, 0.0
        %v3098 = vsel %vm841, %v3055, 0.0
        %v3099 = vsel %vm841, %v3057, 0.0
        %v3100 = vsel %vm841, %v3059, 0.0
        %v3101 = vsel %vm841, %v3061, 0.0
        %3118 = vrot.lane.b32.xlu0 %v3086, 127
        %v3119 = vpop.permute.xlu0 %3118
        %3120 = vrot.lane.b32.xlu0 %v3046, 127
        %v3121 = vpop.permute.xlu0 %3120
        %3122 = vrot.lane.b32.xlu0 %v3094, 127
        %v3123 = vpop.permute.xlu0 %3122
        %3124 = vrot.lane.b32.xlu0 %v3087, 127
        %v3125 = vpop.permute.xlu0 %3124
        %3126 = vrot.lane.b32.xlu0 %v3048, 127
        %v3127 = vpop.permute.xlu0 %3126
        %3128 = vrot.lane.b32.xlu0 %v3095, 127
        %v3129 = vpop.permute.xlu0 %3128
        %3130 = vrot.lane.b32.xlu0 %v3088, 127
        %v3131 = vpop.permute.xlu0 %3130
        %3132 = vrot.lane.b32.xlu0 %v3050, 127
        %v3133 = vpop.permute.xlu0 %3132
        %3134 = vrot.lane.b32.xlu0 %v3096, 127
        %v3135 = vpop.permute.xlu0 %3134
        %3136 = vrot.lane.b32.xlu0 %v3089, 127
        %v3137 = vpop.permute.xlu0 %3136
        %3138 = vrot.lane.b32.xlu0 %v3052, 127
        %v3139 = vpop.permute.xlu0 %3138
        %3140 = vrot.lane.b32.xlu0 %v3097, 127
        %v3141 = vpop.permute.xlu0 %3140
        %3142 = vrot.lane.b32.xlu0 %v3090, 127
        %v3143 = vpop.permute.xlu0 %3142
        %3144 = vrot.lane.b32.xlu0 %v3054, 127
        %v3145 = vpop.permute.xlu0 %3144
        %3146 = vrot.lane.b32.xlu0 %v3098, 127
        %v3147 = vpop.permute.xlu0 %3146
        %3148 = vrot.lane.b32.xlu0 %v3091, 127
        %v3149 = vpop.permute.xlu0 %3148
        %3150 = vrot.lane.b32.xlu0 %v3056, 127
        %v3151 = vpop.permute.xlu0 %3150
        %3152 = vrot.lane.b32.xlu0 %v3099, 127
        %v3153 = vpop.permute.xlu0 %3152
        %3154 = vrot.lane.b32.xlu0 %v3092, 127
        %v3155 = vpop.permute.xlu0 %3154
        %3156 = vrot.lane.b32.xlu0 %v3058, 127
        %v3157 = vpop.permute.xlu0 %3156
        %3158 = vrot.lane.b32.xlu0 %v3100, 127
        %v3159 = vpop.permute.xlu0 %3158
        %3160 = vrot.lane.b32.xlu0 %v3093, 127
        %v3161 = vpop.permute.xlu0 %3160
        %3162 = vrot.lane.b32.xlu0 %v3060, 127
        %v3163 = vpop.permute.xlu0 %3162
        %3164 = vrot.lane.b32.xlu0 %v3101, 127
        %v3165 = vpop.permute.xlu0 %3164
        %v3166 = vsel %vm610, %v3119, %v3121
        %v3167 = vsel %vm610, %v3121, %v3123
        %v3168 = vsel %vm610, %v3125, %v3127
        %v3169 = vsel %vm610, %v3127, %v3129
        %v3170 = vsel %vm610, %v3131, %v3133
        %v3171 = vsel %vm610, %v3133, %v3135
        %v3172 = vsel %vm610, %v3137, %v3139
        %v3173 = vsel %vm610, %v3139, %v3141
        %v3174 = vsel %vm610, %v3143, %v3145
        %v3175 = vsel %vm610, %v3145, %v3147
        %v3176 = vsel %vm610, %v3149, %v3151
        %v3177 = vsel %vm610, %v3151, %v3153
        %v3178 = vsel %vm610, %v3155, %v3157
        %v3179 = vsel %vm610, %v3157, %v3159
        %v3180 = vsel %vm610, %v3161, %v3163
        %v3181 = vsel %vm610, %v3163, %v3165
        %3206 = vrot.lane.b32.xlu0 %v3086, 126
        %v3207 = vpop.permute.xlu0 %3206
        %3208 = vrot.lane.b32.xlu0 %v3046, 126
        %v3209 = vpop.permute.xlu0 %3208
        %3210 = vrot.lane.b32.xlu0 %v3094, 126
        %v3211 = vpop.permute.xlu0 %3210
        %3212 = vrot.lane.b32.xlu0 %v3087, 126
        %v3213 = vpop.permute.xlu0 %3212
        %3214 = vrot.lane.b32.xlu0 %v3048, 126
        %v3215 = vpop.permute.xlu0 %3214
        %3216 = vrot.lane.b32.xlu0 %v3095, 126
        %v3217 = vpop.permute.xlu0 %3216
        %3218 = vrot.lane.b32.xlu0 %v3088, 126
        %v3219 = vpop.permute.xlu0 %3218
        %3220 = vrot.lane.b32.xlu0 %v3050, 126
        %v3221 = vpop.permute.xlu0 %3220
        %3222 = vrot.lane.b32.xlu0 %v3096, 126
        %v3223 = vpop.permute.xlu0 %3222
        %3224 = vrot.lane.b32.xlu0 %v3089, 126
        %v3225 = vpop.permute.xlu0 %3224
        %3226 = vrot.lane.b32.xlu0 %v3052, 126
        %v3227 = vpop.permute.xlu0 %3226
        %3228 = vrot.lane.b32.xlu0 %v3097, 126
        %v3229 = vpop.permute.xlu0 %3228
        %3230 = vrot.lane.b32.xlu0 %v3090, 126
        %v3231 = vpop.permute.xlu0 %3230
        %3232 = vrot.lane.b32.xlu0 %v3054, 126
        %v3233 = vpop.permute.xlu0 %3232
        %3234 = vrot.lane.b32.xlu0 %v3098, 126
        %v3235 = vpop.permute.xlu0 %3234
        %3236 = vrot.lane.b32.xlu0 %v3091, 126
        %v3237 = vpop.permute.xlu0 %3236
        %3238 = vrot.lane.b32.xlu0 %v3056, 126
        %v3239 = vpop.permute.xlu0 %3238
        %3240 = vrot.lane.b32.xlu0 %v3099, 126
        %v3241 = vpop.permute.xlu0 %3240
        %3242 = vrot.lane.b32.xlu0 %v3092, 126
        %v3243 = vpop.permute.xlu0 %3242
        %3244 = vrot.lane.b32.xlu0 %v3058, 126
        %v3245 = vpop.permute.xlu0 %3244
        %3246 = vrot.lane.b32.xlu0 %v3100, 126
        %v3247 = vpop.permute.xlu0 %3246
        %3248 = vrot.lane.b32.xlu0 %v3093, 126
        %v3249 = vpop.permute.xlu0 %3248
        %3250 = vrot.lane.b32.xlu0 %v3060, 126
        %v3251 = vpop.permute.xlu0 %3250
        %3252 = vrot.lane.b32.xlu0 %v3101, 126
        %v3253 = vpop.permute.xlu0 %3252
        %v3254 = vsel %vm865, %v3207, %v3209
        %v3255 = vsel %vm865, %v3209, %v3211
        %v3256 = vsel %vm865, %v3213, %v3215
        %v3257 = vsel %vm865, %v3215, %v3217
        %v3258 = vsel %vm865, %v3219, %v3221
        %v3259 = vsel %vm865, %v3221, %v3223
        %v3260 = vsel %vm865, %v3225, %v3227
        %v3261 = vsel %vm865, %v3227, %v3229
        %v3262 = vsel %vm865, %v3231, %v3233
        %v3263 = vsel %vm865, %v3233, %v3235
        %v3264 = vsel %vm865, %v3237, %v3239
        %v3265 = vsel %vm865, %v3239, %v3241
        %v3266 = vsel %vm865, %v3243, %v3245
        %v3267 = vsel %vm865, %v3245, %v3247
        %v3268 = vsel %vm865, %v3249, %v3251
        %v3269 = vsel %vm865, %v3251, %v3253
        %3294 = vrot.lane.b32.xlu0 %v3086, 110
        %v3295 = vpop.permute.xlu0 %3294
        %3296 = vrot.lane.b32.xlu0 %v3046, 110
        %v3297 = vpop.permute.xlu0 %3296
        %3298 = vrot.lane.b32.xlu0 %v3094, 110
        %v3299 = vpop.permute.xlu0 %3298
        %3300 = vrot.lane.b32.xlu0 %v3087, 110
        %v3301 = vpop.permute.xlu0 %3300
        %3302 = vrot.lane.b32.xlu0 %v3048, 110
        %v3303 = vpop.permute.xlu0 %3302
        %3304 = vrot.lane.b32.xlu0 %v3095, 110
        %v3305 = vpop.permute.xlu0 %3304
        %3306 = vrot.lane.b32.xlu0 %v3088, 110
        %v3307 = vpop.permute.xlu0 %3306
        %3308 = vrot.lane.b32.xlu0 %v3050, 110
        %v3309 = vpop.permute.xlu0 %3308
        %3310 = vrot.lane.b32.xlu0 %v3096, 110
        %v3311 = vpop.permute.xlu0 %3310
        %3312 = vrot.lane.b32.xlu0 %v3089, 110
        %v3313 = vpop.permute.xlu0 %3312
        %3314 = vrot.lane.b32.xlu0 %v3052, 110
        %v3315 = vpop.permute.xlu0 %3314
        %3316 = vrot.lane.b32.xlu0 %v3097, 110
        %v3317 = vpop.permute.xlu0 %3316
        %3318 = vrot.lane.b32.xlu0 %v3090, 110
        %v3319 = vpop.permute.xlu0 %3318
        %3320 = vrot.lane.b32.xlu0 %v3054, 110
        %v3321 = vpop.permute.xlu0 %3320
        %3322 = vrot.lane.b32.xlu0 %v3098, 110
        %v3323 = vpop.permute.xlu0 %3322
        %3324 = vrot.lane.b32.xlu0 %v3091, 110
        %v3325 = vpop.permute.xlu0 %3324
        %3326 = vrot.lane.b32.xlu0 %v3056, 110
        %v3327 = vpop.permute.xlu0 %3326
        %3328 = vrot.lane.b32.xlu0 %v3099, 110
        %v3329 = vpop.permute.xlu0 %3328
        %3330 = vrot.lane.b32.xlu0 %v3092, 110
        %v3331 = vpop.permute.xlu0 %3330
        %3332 = vrot.lane.b32.xlu0 %v3058, 110
        %v3333 = vpop.permute.xlu0 %3332
        %3334 = vrot.lane.b32.xlu0 %v3100, 110
        %v3335 = vpop.permute.xlu0 %3334
        %3336 = vrot.lane.b32.xlu0 %v3093, 110
        %v3337 = vpop.permute.xlu0 %3336
        %3338 = vrot.lane.b32.xlu0 %v3060, 110
        %v3339 = vpop.permute.xlu0 %3338
        %3340 = vrot.lane.b32.xlu0 %v3101, 110
        %v3341 = vpop.permute.xlu0 %3340
        %v3342 = vsel %vm877, %v3295, %v3297
        %v3343 = vsel %vm877, %v3297, %v3299
        %v3344 = vsel %vm877, %v3301, %v3303
        %v3345 = vsel %vm877, %v3303, %v3305
        %v3346 = vsel %vm877, %v3307, %v3309
        %v3347 = vsel %vm877, %v3309, %v3311
        %v3348 = vsel %vm877, %v3313, %v3315
        %v3349 = vsel %vm877, %v3315, %v3317
        %v3350 = vsel %vm877, %v3319, %v3321
        %v3351 = vsel %vm877, %v3321, %v3323
        %v3352 = vsel %vm877, %v3325, %v3327
        %v3353 = vsel %vm877, %v3327, %v3329
        %v3354 = vsel %vm877, %v3331, %v3333
        %v3355 = vsel %vm877, %v3333, %v3335
        %v3356 = vsel %vm877, %v3337, %v3339
        %v3357 = vsel %vm877, %v3339, %v3341
        %3382 = vrot.lane.b32.xlu0 %v3086, 109
        %v3383 = vpop.permute.xlu0 %3382
        %3384 = vrot.lane.b32.xlu0 %v3046, 109
        %v3385 = vpop.permute.xlu0 %3384
        %3386 = vrot.lane.b32.xlu0 %v3094, 109
        %v3387 = vpop.permute.xlu0 %3386
        %3388 = vrot.lane.b32.xlu0 %v3087, 109
        %v3389 = vpop.permute.xlu0 %3388
        %3390 = vrot.lane.b32.xlu0 %v3048, 109
        %v3391 = vpop.permute.xlu0 %3390
        %3392 = vrot.lane.b32.xlu0 %v3095, 109
        %v3393 = vpop.permute.xlu0 %3392
        %3394 = vrot.lane.b32.xlu0 %v3088, 109
        %v3395 = vpop.permute.xlu0 %3394
        %3396 = vrot.lane.b32.xlu0 %v3050, 109
        %v3397 = vpop.permute.xlu0 %3396
        %3398 = vrot.lane.b32.xlu0 %v3096, 109
        %v3399 = vpop.permute.xlu0 %3398
        %3400 = vrot.lane.b32.xlu0 %v3089, 109
        %v3401 = vpop.permute.xlu0 %3400
        %3402 = vrot.lane.b32.xlu0 %v3052, 109
        %v3403 = vpop.permute.xlu0 %3402
        %3404 = vrot.lane.b32.xlu0 %v3097, 109
        %v3405 = vpop.permute.xlu0 %3404
        %3406 = vrot.lane.b32.xlu0 %v3090, 109
        %v3407 = vpop.permute.xlu0 %3406
        %3408 = vrot.lane.b32.xlu0 %v3054, 109
        %v3409 = vpop.permute.xlu0 %3408
        %3410 = vrot.lane.b32.xlu0 %v3098, 109
        %v3411 = vpop.permute.xlu0 %3410
        %3412 = vrot.lane.b32.xlu0 %v3091, 109
        %v3413 = vpop.permute.xlu0 %3412
        %3414 = vrot.lane.b32.xlu0 %v3056, 109
        %v3415 = vpop.permute.xlu0 %3414
        %3416 = vrot.lane.b32.xlu0 %v3099, 109
        %v3417 = vpop.permute.xlu0 %3416
        %3418 = vrot.lane.b32.xlu0 %v3092, 109
        %v3419 = vpop.permute.xlu0 %3418
        %3420 = vrot.lane.b32.xlu0 %v3058, 109
        %v3421 = vpop.permute.xlu0 %3420
        %3422 = vrot.lane.b32.xlu0 %v3100, 109
        %v3423 = vpop.permute.xlu0 %3422
        %3424 = vrot.lane.b32.xlu0 %v3093, 109
        %v3425 = vpop.permute.xlu0 %3424
        %3426 = vrot.lane.b32.xlu0 %v3060, 109
        %v3427 = vpop.permute.xlu0 %3426
        %3428 = vrot.lane.b32.xlu0 %v3101, 109
        %v3429 = vpop.permute.xlu0 %3428
        %v3430 = vsel %vm889, %v3383, %v3385
        %v3431 = vsel %vm889, %v3385, %v3387
        %v3432 = vsel %vm889, %v3389, %v3391
        %v3433 = vsel %vm889, %v3391, %v3393
        %v3434 = vsel %vm889, %v3395, %v3397
        %v3435 = vsel %vm889, %v3397, %v3399
        %v3436 = vsel %vm889, %v3401, %v3403
        %v3437 = vsel %vm889, %v3403, %v3405
        %v3438 = vsel %vm889, %v3407, %v3409
        %v3439 = vsel %vm889, %v3409, %v3411
        %v3440 = vsel %vm889, %v3413, %v3415
        %v3441 = vsel %vm889, %v3415, %v3417
        %v3442 = vsel %vm889, %v3419, %v3421
        %v3443 = vsel %vm889, %v3421, %v3423
        %v3444 = vsel %vm889, %v3425, %v3427
        %v3445 = vsel %vm889, %v3427, %v3429
        %3470 = vrot.lane.b32.xlu0 %v3086, 108
        %v3471 = vpop.permute.xlu0 %3470
        %3472 = vrot.lane.b32.xlu0 %v3046, 108
        %v3473 = vpop.permute.xlu0 %3472
        %3474 = vrot.lane.b32.xlu0 %v3094, 108
        %v3475 = vpop.permute.xlu0 %3474
        %3476 = vrot.lane.b32.xlu0 %v3087, 108
        %v3477 = vpop.permute.xlu0 %3476
        %3478 = vrot.lane.b32.xlu0 %v3048, 108
        %v3479 = vpop.permute.xlu0 %3478
        %3480 = vrot.lane.b32.xlu0 %v3095, 108
        %v3481 = vpop.permute.xlu0 %3480
        %3482 = vrot.lane.b32.xlu0 %v3088, 108
        %v3483 = vpop.permute.xlu0 %3482
        %3484 = vrot.lane.b32.xlu0 %v3050, 108
        %v3485 = vpop.permute.xlu0 %3484
        %3486 = vrot.lane.b32.xlu0 %v3096, 108
        %v3487 = vpop.permute.xlu0 %3486
        %3488 = vrot.lane.b32.xlu0 %v3089, 108
        %v3489 = vpop.permute.xlu0 %3488
        %3490 = vrot.lane.b32.xlu0 %v3052, 108
        %v3491 = vpop.permute.xlu0 %3490
        %3492 = vrot.lane.b32.xlu0 %v3097, 108
        %v3493 = vpop.permute.xlu0 %3492
        %3494 = vrot.lane.b32.xlu0 %v3090, 108
        %v3495 = vpop.permute.xlu0 %3494
        %3496 = vrot.lane.b32.xlu0 %v3054, 108
        %v3497 = vpop.permute.xlu0 %3496
        %3498 = vrot.lane.b32.xlu0 %v3098, 108
        %v3499 = vpop.permute.xlu0 %3498
        %3500 = vrot.lane.b32.xlu0 %v3091, 108
        %v3501 = vpop.permute.xlu0 %3500
        %3502 = vrot.lane.b32.xlu0 %v3056, 108
        %v3503 = vpop.permute.xlu0 %3502
        %3504 = vrot.lane.b32.xlu0 %v3099, 108
        %v3505 = vpop.permute.xlu0 %3504
        %3506 = vrot.lane.b32.xlu0 %v3092, 108
        %v3507 = vpop.permute.xlu0 %3506
        %3508 = vrot.lane.b32.xlu0 %v3058, 108
        %v3509 = vpop.permute.xlu0 %3508
        %3510 = vrot.lane.b32.xlu0 %v3100, 108
        %v3511 = vpop.permute.xlu0 %3510
        %3512 = vrot.lane.b32.xlu0 %v3093, 108
        %v3513 = vpop.permute.xlu0 %3512
        %3514 = vrot.lane.b32.xlu0 %v3060, 108
        %v3515 = vpop.permute.xlu0 %3514
        %3516 = vrot.lane.b32.xlu0 %v3101, 108
        %v3517 = vpop.permute.xlu0 %3516
        %v3518 = vsel %vm901, %v3471, %v3473
        %v3519 = vsel %vm901, %v3473, %v3475
        %v3520 = vsel %vm901, %v3477, %v3479
        %v3521 = vsel %vm901, %v3479, %v3481
        %v3522 = vsel %vm901, %v3483, %v3485
        %v3523 = vsel %vm901, %v3485, %v3487
        %v3524 = vsel %vm901, %v3489, %v3491
        %v3525 = vsel %vm901, %v3491, %v3493
        %v3526 = vsel %vm901, %v3495, %v3497
        %v3527 = vsel %vm901, %v3497, %v3499
        %v3528 = vsel %vm901, %v3501, %v3503
        %v3529 = vsel %vm901, %v3503, %v3505
        %v3530 = vsel %vm901, %v3507, %v3509
        %v3531 = vsel %vm901, %v3509, %v3511
        %v3532 = vsel %vm901, %v3513, %v3515
        %v3533 = vsel %vm901, %v3515, %v3517
        %3558 = vrot.lane.b32.xlu0 %v3086, 92
        %v3559 = vpop.permute.xlu0 %3558
        %3560 = vrot.lane.b32.xlu0 %v3046, 92
        %v3561 = vpop.permute.xlu0 %3560
        %3562 = vrot.lane.b32.xlu0 %v3094, 92
        %v3563 = vpop.permute.xlu0 %3562
        %3564 = vrot.lane.b32.xlu0 %v3087, 92
        %v3565 = vpop.permute.xlu0 %3564
        %3566 = vrot.lane.b32.xlu0 %v3048, 92
        %v3567 = vpop.permute.xlu0 %3566
        %3568 = vrot.lane.b32.xlu0 %v3095, 92
        %v3569 = vpop.permute.xlu0 %3568
        %3570 = vrot.lane.b32.xlu0 %v3088, 92
        %v3571 = vpop.permute.xlu0 %3570
        %3572 = vrot.lane.b32.xlu0 %v3050, 92
        %v3573 = vpop.permute.xlu0 %3572
        %3574 = vrot.lane.b32.xlu0 %v3096, 92
        %v3575 = vpop.permute.xlu0 %3574
        %3576 = vrot.lane.b32.xlu0 %v3089, 92
        %v3577 = vpop.permute.xlu0 %3576
        %3578 = vrot.lane.b32.xlu0 %v3052, 92
        %v3579 = vpop.permute.xlu0 %3578
        %3580 = vrot.lane.b32.xlu0 %v3097, 92
        %v3581 = vpop.permute.xlu0 %3580
        %3582 = vrot.lane.b32.xlu0 %v3090, 92
        %v3583 = vpop.permute.xlu0 %3582
        %3584 = vrot.lane.b32.xlu0 %v3054, 92
        %v3585 = vpop.permute.xlu0 %3584
        %3586 = vrot.lane.b32.xlu0 %v3098, 92
        %v3587 = vpop.permute.xlu0 %3586
        %3588 = vrot.lane.b32.xlu0 %v3091, 92
        %v3589 = vpop.permute.xlu0 %3588
        %3590 = vrot.lane.b32.xlu0 %v3056, 92
        %v3591 = vpop.permute.xlu0 %3590
        %3592 = vrot.lane.b32.xlu0 %v3099, 92
        %v3593 = vpop.permute.xlu0 %3592
        %3594 = vrot.lane.b32.xlu0 %v3092, 92
        %v3595 = vpop.permute.xlu0 %3594
        %3596 = vrot.lane.b32.xlu0 %v3058, 92
        %v3597 = vpop.permute.xlu0 %3596
        %3598 = vrot.lane.b32.xlu0 %v3100, 92
        %v3599 = vpop.permute.xlu0 %3598
        %3600 = vrot.lane.b32.xlu0 %v3093, 92
        %v3601 = vpop.permute.xlu0 %3600
        %3602 = vrot.lane.b32.xlu0 %v3060, 92
        %v3603 = vpop.permute.xlu0 %3602
        %3604 = vrot.lane.b32.xlu0 %v3101, 92
        %v3605 = vpop.permute.xlu0 %3604
        %v3606 = vsel %vm913, %v3559, %v3561
        %v3607 = vsel %vm913, %v3561, %v3563
        %v3608 = vsel %vm913, %v3565, %v3567
        %v3609 = vsel %vm913, %v3567, %v3569
        %v3610 = vsel %vm913, %v3571, %v3573
        %v3611 = vsel %vm913, %v3573, %v3575
        %v3612 = vsel %vm913, %v3577, %v3579
        %v3613 = vsel %vm913, %v3579, %v3581
        %v3614 = vsel %vm913, %v3583, %v3585
        %v3615 = vsel %vm913, %v3585, %v3587
        %v3616 = vsel %vm913, %v3589, %v3591
        %v3617 = vsel %vm913, %v3591, %v3593
        %v3618 = vsel %vm913, %v3595, %v3597
        %v3619 = vsel %vm913, %v3597, %v3599
        %v3620 = vsel %vm913, %v3601, %v3603
        %v3621 = vsel %vm913, %v3603, %v3605
        %3646 = vrot.lane.b32.xlu0 %v3086, 91
        %v3647 = vpop.permute.xlu0 %3646
        %3648 = vrot.lane.b32.xlu0 %v3046, 91
        %v3649 = vpop.permute.xlu0 %3648
        %3650 = vrot.lane.b32.xlu0 %v3094, 91
        %v3651 = vpop.permute.xlu0 %3650
        %3652 = vrot.lane.b32.xlu0 %v3087, 91
        %v3653 = vpop.permute.xlu0 %3652
        %3654 = vrot.lane.b32.xlu0 %v3048, 91
        %v3655 = vpop.permute.xlu0 %3654
        %3656 = vrot.lane.b32.xlu0 %v3095, 91
        %v3657 = vpop.permute.xlu0 %3656
        %3658 = vrot.lane.b32.xlu0 %v3088, 91
        %v3659 = vpop.permute.xlu0 %3658
        %3660 = vrot.lane.b32.xlu0 %v3050, 91
        %v3661 = vpop.permute.xlu0 %3660
        %3662 = vrot.lane.b32.xlu0 %v3096, 91
        %v3663 = vpop.permute.xlu0 %3662
        %3664 = vrot.lane.b32.xlu0 %v3089, 91
        %v3665 = vpop.permute.xlu0 %3664
        %3666 = vrot.lane.b32.xlu0 %v3052, 91
        %v3667 = vpop.permute.xlu0 %3666
        %3668 = vrot.lane.b32.xlu0 %v3097, 91
        %v3669 = vpop.permute.xlu0 %3668
        %3670 = vrot.lane.b32.xlu0 %v3090, 91
        %v3671 = vpop.permute.xlu0 %3670
        %3672 = vrot.lane.b32.xlu0 %v3054, 91
        %v3673 = vpop.permute.xlu0 %3672
        %3674 = vrot.lane.b32.xlu0 %v3098, 91
        %v3675 = vpop.permute.xlu0 %3674
        %3676 = vrot.lane.b32.xlu0 %v3091, 91
        %v3677 = vpop.permute.xlu0 %3676
        %3678 = vrot.lane.b32.xlu0 %v3056, 91
        %v3679 = vpop.permute.xlu0 %3678
        %3680 = vrot.lane.b32.xlu0 %v3099, 91
        %v3681 = vpop.permute.xlu0 %3680
        %3682 = vrot.lane.b32.xlu0 %v3092, 91
        %v3683 = vpop.permute.xlu0 %3682
        %3684 = vrot.lane.b32.xlu0 %v3058, 91
        %v3685 = vpop.permute.xlu0 %3684
        %3686 = vrot.lane.b32.xlu0 %v3100, 91
        %v3687 = vpop.permute.xlu0 %3686
        %3688 = vrot.lane.b32.xlu0 %v3093, 91
        %v3689 = vpop.permute.xlu0 %3688
        %3690 = vrot.lane.b32.xlu0 %v3060, 91
        %v3691 = vpop.permute.xlu0 %3690
        %3692 = vrot.lane.b32.xlu0 %v3101, 91
        %v3693 = vpop.permute.xlu0 %3692
        %v3694 = vsel %vm925, %v3647, %v3649
        %v3695 = vsel %vm925, %v3649, %v3651
        %v3696 = vsel %vm925, %v3653, %v3655
        %v3697 = vsel %vm925, %v3655, %v3657
        %v3698 = vsel %vm925, %v3659, %v3661
        %v3699 = vsel %vm925, %v3661, %v3663
        %v3700 = vsel %vm925, %v3665, %v3667
        %v3701 = vsel %vm925, %v3667, %v3669
        %v3702 = vsel %vm925, %v3671, %v3673
        %v3703 = vsel %vm925, %v3673, %v3675
        %v3704 = vsel %vm925, %v3677, %v3679
        %v3705 = vsel %vm925, %v3679, %v3681
        %v3706 = vsel %vm925, %v3683, %v3685
        %v3707 = vsel %vm925, %v3685, %v3687
        %v3708 = vsel %vm925, %v3689, %v3691
        %v3709 = vsel %vm925, %v3691, %v3693
        %3734 = vrot.lane.b32.xlu0 %v3086, 90
        %v3735 = vpop.permute.xlu0 %3734
        %3736 = vrot.lane.b32.xlu0 %v3046, 90
        %v3737 = vpop.permute.xlu0 %3736
        %3738 = vrot.lane.b32.xlu0 %v3094, 90
        %v3739 = vpop.permute.xlu0 %3738
        %3740 = vrot.lane.b32.xlu0 %v3087, 90
        %v3741 = vpop.permute.xlu0 %3740
        %3742 = vrot.lane.b32.xlu0 %v3048, 90
        %v3743 = vpop.permute.xlu0 %3742
        %3744 = vrot.lane.b32.xlu0 %v3095, 90
        %v3745 = vpop.permute.xlu0 %3744
        %3746 = vrot.lane.b32.xlu0 %v3088, 90
        %v3747 = vpop.permute.xlu0 %3746
        %3748 = vrot.lane.b32.xlu0 %v3050, 90
        %v3749 = vpop.permute.xlu0 %3748
        %3750 = vrot.lane.b32.xlu0 %v3096, 90
        %v3751 = vpop.permute.xlu0 %3750
        %3752 = vrot.lane.b32.xlu0 %v3089, 90
        %v3753 = vpop.permute.xlu0 %3752
        %3754 = vrot.lane.b32.xlu0 %v3052, 90
        %v3755 = vpop.permute.xlu0 %3754
        %3756 = vrot.lane.b32.xlu0 %v3097, 90
        %v3757 = vpop.permute.xlu0 %3756
        %3758 = vrot.lane.b32.xlu0 %v3090, 90
        %v3759 = vpop.permute.xlu0 %3758
        %3760 = vrot.lane.b32.xlu0 %v3054, 90
        %v3761 = vpop.permute.xlu0 %3760
        %3762 = vrot.lane.b32.xlu0 %v3098, 90
        %v3763 = vpop.permute.xlu0 %3762
        %3764 = vrot.lane.b32.xlu0 %v3091, 90
        %v3765 = vpop.permute.xlu0 %3764
        %3766 = vrot.lane.b32.xlu0 %v3056, 90
        %v3767 = vpop.permute.xlu0 %3766
        %3768 = vrot.lane.b32.xlu0 %v3099, 90
        %v3769 = vpop.permute.xlu0 %3768
        %3770 = vrot.lane.b32.xlu0 %v3092, 90
        %v3771 = vpop.permute.xlu0 %3770
        %3772 = vrot.lane.b32.xlu0 %v3058, 90
        %v3773 = vpop.permute.xlu0 %3772
        %3774 = vrot.lane.b32.xlu0 %v3100, 90
        %v3775 = vpop.permute.xlu0 %3774
        %3776 = vrot.lane.b32.xlu0 %v3093, 90
        %v3777 = vpop.permute.xlu0 %3776
        %3778 = vrot.lane.b32.xlu0 %v3060, 90
        %v3779 = vpop.permute.xlu0 %3778
        %3780 = vrot.lane.b32.xlu0 %v3101, 90
        %v3781 = vpop.permute.xlu0 %3780
        %v3782 = vsel %vm937, %v3735, %v3737
        %v3783 = vsel %vm937, %v3737, %v3739
        %v3784 = vsel %vm937, %v3741, %v3743
        %v3785 = vsel %vm937, %v3743, %v3745
        %v3786 = vsel %vm937, %v3747, %v3749
        %v3787 = vsel %vm937, %v3749, %v3751
        %v3788 = vsel %vm937, %v3753, %v3755
        %v3789 = vsel %vm937, %v3755, %v3757
        %v3790 = vsel %vm937, %v3759, %v3761
        %v3791 = vsel %vm937, %v3761, %v3763
        %v3792 = vsel %vm937, %v3765, %v3767
        %v3793 = vsel %vm937, %v3767, %v3769
        %v3794 = vsel %vm937, %v3771, %v3773
        %v3795 = vsel %vm937, %v3773, %v3775
        %v3796 = vsel %vm937, %v3777, %v3779
        %v3797 = vsel %vm937, %v3779, %v3781
        %3823 = vset.pattern.permute.xlu0 0
        %3824 = vperm.xlu0 %3823, %v2973
        %v3825 = vpop.permute.xlu0 %3824
        %v3827 = vlaneseq
        %v3828 = vshrl.u32 %v3827, 7
        %v3829 = vsub.s32 0, %v3828
        %v3830 = vrot.slane %v3825, %v3829
        %v3832 = vlaneseq
        %v3833 = vshrl.u32 %v3832, 7
        %v3834 = vsub.s32 0, %v3833
        %v3835 = vrot.slane %v2972, %v3834
        %v3836 = vlaneseq
        %v3837 = vshrl.u32 %v3836, 7
        %v3838 = vsub.s32 1, %v3837
        %v3839 = vrot.slane %v2972, %v3838
        %v3840 = vlaneseq
        %v3841 = vshrl.u32 %v3840, 7
        %v3842 = vsub.s32 2, %v3841
        %v3843 = vrot.slane %v2972, %v3842
        %v3844 = vlaneseq
        %v3845 = vshrl.u32 %v3844, 7
        %v3846 = vsub.s32 3, %v3845
        %v3847 = vrot.slane %v2972, %v3846
        %v3848 = vlaneseq
        %v3849 = vshrl.u32 %v3848, 7
        %v3850 = vsub.s32 4, %v3849
        %v3851 = vrot.slane %v2972, %v3850
        %vm3856 = vcmask 523264
        %v3857 = vsel %vm3856, %v3851, 0
        %3859 = vmatprep.subr.mxu0 %v3181
        %3860 = vmatpush1.msra.mxu0 %v3180
        %3861 = vmatprep.subr.mxu0 %v3179
        %3862 = vmatpush1.msra.mxu0 %v3178
        %3863 = vmatprep.subr.mxu0 %v3177
        %3864 = vmatpush1.msra.mxu0 %v3176
        %3865 = vmatprep.subr.mxu0 %v3175
        %3866 = vmatpush1.msra.mxu0 %v3174
        %3867 = vmatprep.subr.mxu0 %v3173
        %3868 = vmatpush1.msra.mxu0 %v3172
        %3869 = vmatprep.subr.mxu0 %v3171
        %3870 = vmatpush1.msra.mxu0 %v3170
        %3871 = vmatprep.subr.mxu0 %v3169
        %3872 = vmatpush1.msra.mxu0 %v3168
        %3873 = vmatprep.subr.mxu0 %v3167
        %3874 = vmatpush1.msra.mxu0 %v3166
        %3875 = vmatprep.subr.mxu0 %v3060
        %3876 = vmatpush1.msra.mxu0 %v3093
        %3877 = vmatprep.subr.mxu0 %v3058
        %3878 = vmatpush1.msra.mxu0 %v3092
        %3879 = vmatprep.subr.mxu0 %v3056
        %3880 = vmatpush1.msra.mxu0 %v3091
        %3881 = vmatprep.subr.mxu0 %v3054
        %3882 = vmatpush1.msra.mxu0 %v3090
        %3883 = vmatprep.subr.mxu0 %v3052
        %3884 = vmatpush1.msra.mxu0 %v3089
        %3885 = vmatprep.subr.mxu0 %v3050
        %3886 = vmatpush1.msra.mxu0 %v3088
        %3887 = vmatprep.subr.mxu0 %v3048
        %3888 = vmatpush1.msra.mxu0 %v3087
        %3889 = vmatprep.subr.mxu0 %v3046
        %3890 = vmatpush1.msra.mxu0 %v3086
        %3891 = vmatprep.subr.mxu0 %v3357
        %3892 = vmatpush2.msra.mxu0 %v3356
        %3893 = vmatprep.subr.mxu0 %v3355
        %3894 = vmatpush2.msra.mxu0 %v3354
        %3895 = vmatprep.subr.mxu0 %v3353
        %3896 = vmatpush2.msra.mxu0 %v3352
        %3897 = vmatprep.subr.mxu0 %v3351
        %3898 = vmatpush2.msra.mxu0 %v3350
        %3899 = vmatprep.subr.mxu0 %v3349
        %3900 = vmatpush2.msra.mxu0 %v3348
        %3901 = vmatprep.subr.mxu0 %v3347
        %3902 = vmatpush2.msra.mxu0 %v3346
        %3903 = vmatprep.subr.mxu0 %v3345
        %3904 = vmatpush2.msra.mxu0 %v3344
        %3905 = vmatprep.subr.mxu0 %v3343
        %3906 = vmatpush2.msra.mxu0 %v3342
        %3907 = vmatprep.subr.mxu0 %v3269
        %3908 = vmatpush2.msra.mxu0 %v3268
        %3909 = vmatprep.subr.mxu0 %v3267
        %3910 = vmatpush2.msra.mxu0 %v3266
        %3911 = vmatprep.subr.mxu0 %v3265
        %3912 = vmatpush2.msra.mxu0 %v3264
        %3913 = vmatprep.subr.mxu0 %v3263
        %3914 = vmatpush2.msra.mxu0 %v3262
        %3915 = vmatprep.subr.mxu0 %v3261
        %3916 = vmatpush2.msra.mxu0 %v3260
        %3917 = vmatprep.subr.mxu0 %v3259
        %3918 = vmatpush2.msra.mxu0 %v3258
        %3919 = vmatprep.subr.mxu0 %v3257
        %3920 = vmatpush2.msra.mxu0 %v3256
        %3921 = vmatprep.subr.mxu0 %v3255
        %3922 = vmatpush2.msra.mxu0 %v3254
        %3923 = vmatprep.mubr.f32.mxu0 %v3839
        %3924 = vmatmul.mubr.f32.gmra.mxu0 %v3835
        %v3925 = vpop.f32.mrf.mxu0
        %v3926 = vadd.f32 %v3830, %v3925
        %v3927 = vpop.f32.mrf.mxu0
        %v3928 = vadd.f32 %v3830, %v3927
        %3929 = vdwg.mxu0
        %3930 = vmatprep.subr.mxu0 %v3533
        %3931 = vmatpush1.msra.mxu0 %v3532
        %3932 = vmatprep.subr.mxu0 %v3531
        %3933 = vmatpush1.msra.mxu0 %v3530
        %3934 = vmatprep.subr.mxu0 %v3529
        %3935 = vmatpush1.msra.mxu0 %v3528
        %3936 = vmatprep.subr.mxu0 %v3527
        %3937 = vmatpush1.msra.mxu0 %v3526
        %3938 = vmatprep.subr.mxu0 %v3525
        %3939 = vmatpush1.msra.mxu0 %v3524
        %3940 = vmatprep.subr.mxu0 %v3523
        %3941 = vmatpush1.msra.mxu0 %v3522
        %3942 = vmatprep.subr.mxu0 %v3521
        %3943 = vmatpush1.msra.mxu0 %v3520
        %3944 = vmatprep.subr.mxu0 %v3519
        %3945 = vmatpush1.msra.mxu0 %v3518
        %3946 = vmatprep.subr.mxu0 %v3445
        %3947 = vmatpush1.msra.mxu0 %v3444
        %3948 = vmatprep.subr.mxu0 %v3443
        %3949 = vmatpush1.msra.mxu0 %v3442
        %3950 = vmatprep.subr.mxu0 %v3441
        %3951 = vmatpush1.msra.mxu0 %v3440
        %3952 = vmatprep.subr.mxu0 %v3439
        %3953 = vmatpush1.msra.mxu0 %v3438
        %3954 = vmatprep.subr.mxu0 %v3437
        %3955 = vmatpush1.msra.mxu0 %v3436
        %3956 = vmatprep.subr.mxu0 %v3435
        %3957 = vmatpush1.msra.mxu0 %v3434
        %3958 = vmatprep.subr.mxu0 %v3433
        %3959 = vmatpush1.msra.mxu0 %v3432
        %3960 = vmatprep.subr.mxu0 %v3431
        %3961 = vmatpush1.msra.mxu0 %v3430
        %3962 = vmatprep.subr.mxu0 %v3709
        %3963 = vmatpush2.msra.mxu0 %v3708
        %3964 = vmatprep.subr.mxu0 %v3707
        %3965 = vmatpush2.msra.mxu0 %v3706
        %3966 = vmatprep.subr.mxu0 %v3705
        %3967 = vmatpush2.msra.mxu0 %v3704
        %3968 = vmatprep.subr.mxu0 %v3703
        %3969 = vmatpush2.msra.mxu0 %v3702
        %3970 = vmatprep.subr.mxu0 %v3701
        %3971 = vmatpush2.msra.mxu0 %v3700
        %3972 = vmatprep.subr.mxu0 %v3699
        %3973 = vmatpush2.msra.mxu0 %v3698
        %3974 = vmatprep.subr.mxu0 %v3697
        %3975 = vmatpush2.msra.mxu0 %v3696
        %3976 = vmatprep.subr.mxu0 %v3695
        %3977 = vmatpush2.msra.mxu0 %v3694
        %3978 = vmatprep.subr.mxu0 %v3621
        %3979 = vmatpush2.msra.mxu0 %v3620
        %3980 = vmatprep.subr.mxu0 %v3619
        %3981 = vmatpush2.msra.mxu0 %v3618
        %3982 = vmatprep.subr.mxu0 %v3617
        %3983 = vmatpush2.msra.mxu0 %v3616
        %3984 = vmatprep.subr.mxu0 %v3615
        %3985 = vmatpush2.msra.mxu0 %v3614
        %3986 = vmatprep.subr.mxu0 %v3613
        %3987 = vmatpush2.msra.mxu0 %v3612
        %3988 = vmatprep.subr.mxu0 %v3611
        %3989 = vmatpush2.msra.mxu0 %v3610
        %3990 = vmatprep.subr.mxu0 %v3609
        %3991 = vmatpush2.msra.mxu0 %v3608
        %3992 = vmatprep.subr.mxu0 %v3607
        %3993 = vmatpush2.msra.mxu0 %v3606
        %3994 = vmatprep.mubr.f32.mxu0 %v3847
        %3995 = vmatmul.mubr.f32.gmra.mxu0 %v3843
        %v3996 = vpop.f32.mrf.mxu0
        %v3997 = vadd.f32 %v3926, %v3996
        %v3998 = vpop.f32.mrf.mxu0
        %v3999 = vadd.f32 %v3928, %v3998
        %4000 = vdwg.mxu0
        %4001 = vmatprep.subr.mxu0 0.0
        %4002 = vmatpush1.msra.mxu0 0.0
        %4003 = vmatprep.subr.mxu0 0.0
        %4004 = vmatpush1.msra.mxu0 0.0
        %4005 = vmatprep.subr.mxu0 0.0
        %4006 = vmatpush1.msra.mxu0 0.0
        %4007 = vmatprep.subr.mxu0 0.0
        %4008 = vmatpush1.msra.mxu0 0.0
        %4009 = vmatprep.subr.mxu0 0.0
        %4010 = vmatpush1.msra.mxu0 0.0
        %4011 = vmatprep.subr.mxu0 0.0
        %4012 = vmatpush1.msra.mxu0 0.0
        %4013 = vmatprep.subr.mxu0 0.0
        %4014 = vmatpush1.msra.mxu0 0.0
        %4015 = vmatprep.subr.mxu0 0.0
        %4016 = vmatpush1.msra.mxu0 0.0
        %4017 = vmatprep.subr.mxu0 %v3797
        %4018 = vmatpush1.msra.mxu0 %v3796
        %4019 = vmatprep.subr.mxu0 %v3795
        %4020 = vmatpush1.msra.mxu0 %v3794
        %4021 = vmatprep.subr.mxu0 %v3793
        %4022 = vmatpush1.msra.mxu0 %v3792
        %4023 = vmatprep.subr.mxu0 %v3791
        %4024 = vmatpush1.msra.mxu0 %v3790
        %4025 = vmatprep.subr.mxu0 %v3789
        %4026 = vmatpush1.msra.mxu0 %v3788
        %4027 = vmatprep.subr.mxu0 %v3787
        %4028 = vmatpush1.msra.mxu0 %v3786
        %4029 = vmatprep.subr.mxu0 %v3785
        %4030 = vmatpush1.msra.mxu0 %v3784
        %4031 = vmatprep.subr.mxu0 %v3783
        %4032 = vmatpush1.msra.mxu0 %v3782
        %4033 = vmatprep.subr.mxu0 0.0
        %4034 = vmatpush2.msra.mxu0 0.0
        %4035 = vmatprep.subr.mxu0 0.0
        %4036 = vmatpush2.msra.mxu0 0.0
        %4037 = vmatprep.subr.mxu0 0.0
        %4038 = vmatpush2.msra.mxu0 0.0
        %4039 = vmatprep.subr.mxu0 0.0
        %4040 = vmatpush2.msra.mxu0 0.0
        %4041 = vmatprep.subr.mxu0 0.0
        %4042 = vmatpush2.msra.mxu0 0.0
        %4043 = vmatprep.subr.mxu0 0.0
        %4044 = vmatpush2.msra.mxu0 0.0
        %4045 = vmatprep.subr.mxu0 0.0
        %4046 = vmatpush2.msra.mxu0 0.0
        %4047 = vmatprep.subr.mxu0 0.0
        %4048 = vmatpush2.msra.mxu0 0.0
        %4049 = vmatprep.subr.mxu0 0.0
        %4050 = vmatpush2.msra.mxu0 0.0
        %4051 = vmatprep.subr.mxu0 0.0
        %4052 = vmatpush2.msra.mxu0 0.0
        %4053 = vmatprep.subr.mxu0 0.0
        %4054 = vmatpush2.msra.mxu0 0.0
        %4055 = vmatprep.subr.mxu0 0.0
        %4056 = vmatpush2.msra.mxu0 0.0
        %4057 = vmatprep.subr.mxu0 0.0
        %4058 = vmatpush2.msra.mxu0 0.0
        %4059 = vmatprep.subr.mxu0 0.0
        %4060 = vmatpush2.msra.mxu0 0.0
        %4061 = vmatprep.subr.mxu0 0.0
        %4062 = vmatpush2.msra.mxu0 0.0
        %4063 = vmatprep.subr.mxu0 0.0
        %4064 = vmatpush2.msra.mxu0 0.0
        %4065 = vmatprep.mubr.f32.mxu0 0.0
        %4066 = vmatmul.mubr.f32.gmra.mxu0 %v3857
        %v4067 = vpop.f32.mrf.mxu0
        %v4068 = vadd.f32 %v3997, %v4067
        %v4069 = vpop.f32.mrf.mxu0
        %v4070 = vadd.f32 %v3999, %v4069
        %4071 = vdwg.mxu0
        %4072 = vmatprep.subr.mxu0 0.0
        %4073 = vmatpush1.msra.mxu0 %v3165
        %4074 = vmatprep.subr.mxu0 0.0
        %4075 = vmatpush1.msra.mxu0 %v3159
        %4076 = vmatprep.subr.mxu0 0.0
        %4077 = vmatpush1.msra.mxu0 %v3153
        %4078 = vmatprep.subr.mxu0 0.0
        %4079 = vmatpush1.msra.mxu0 %v3147
        %4080 = vmatprep.subr.mxu0 0.0
        %4081 = vmatpush1.msra.mxu0 %v3141
        %4082 = vmatprep.subr.mxu0 0.0
        %4083 = vmatpush1.msra.mxu0 %v3135
        %4084 = vmatprep.subr.mxu0 0.0
        %4085 = vmatpush1.msra.mxu0 %v3129
        %4086 = vmatprep.subr.mxu0 0.0
        %4087 = vmatpush1.msra.mxu0 %v3123
        %4088 = vmatprep.subr.mxu0 0.0
        %4089 = vmatpush1.msra.mxu0 %v3101
        %4090 = vmatprep.subr.mxu0 0.0
        %4091 = vmatpush1.msra.mxu0 %v3100
        %4092 = vmatprep.subr.mxu0 0.0
        %4093 = vmatpush1.msra.mxu0 %v3099
        %4094 = vmatprep.subr.mxu0 0.0
        %4095 = vmatpush1.msra.mxu0 %v3098
        %4096 = vmatprep.subr.mxu0 0.0
        %4097 = vmatpush1.msra.mxu0 %v3097
        %4098 = vmatprep.subr.mxu0 0.0
        %4099 = vmatpush1.msra.mxu0 %v3096
        %4100 = vmatprep.subr.mxu0 0.0
        %4101 = vmatpush1.msra.mxu0 %v3095
        %4102 = vmatprep.subr.mxu0 0.0
        %4103 = vmatpush1.msra.mxu0 %v3094
        %4104 = vmatprep.subr.mxu0 0.0
        %4105 = vmatpush2.msra.mxu0 %v3341
        %4106 = vmatprep.subr.mxu0 0.0
        %4107 = vmatpush2.msra.mxu0 %v3335
        %4108 = vmatprep.subr.mxu0 0.0
        %4109 = vmatpush2.msra.mxu0 %v3329
        %4110 = vmatprep.subr.mxu0 0.0
        %4111 = vmatpush2.msra.mxu0 %v3323
        %4112 = vmatprep.subr.mxu0 0.0
        %4113 = vmatpush2.msra.mxu0 %v3317
        %4114 = vmatprep.subr.mxu0 0.0
        %4115 = vmatpush2.msra.mxu0 %v3311
        %4116 = vmatprep.subr.mxu0 0.0
        %4117 = vmatpush2.msra.mxu0 %v3305
        %4118 = vmatprep.subr.mxu0 0.0
        %4119 = vmatpush2.msra.mxu0 %v3299
        %4120 = vmatprep.subr.mxu0 0.0
        %4121 = vmatpush2.msra.mxu0 %v3253
        %4122 = vmatprep.subr.mxu0 0.0
        %4123 = vmatpush2.msra.mxu0 %v3247
        %4124 = vmatprep.subr.mxu0 0.0
        %4125 = vmatpush2.msra.mxu0 %v3241
        %4126 = vmatprep.subr.mxu0 0.0
        %4127 = vmatpush2.msra.mxu0 %v3235
        %4128 = vmatprep.subr.mxu0 0.0
        %4129 = vmatpush2.msra.mxu0 %v3229
        %4130 = vmatprep.subr.mxu0 0.0
        %4131 = vmatpush2.msra.mxu0 %v3223
        %4132 = vmatprep.subr.mxu0 0.0
        %4133 = vmatpush2.msra.mxu0 %v3217
        %4134 = vmatprep.subr.mxu0 0.0
        %4135 = vmatpush2.msra.mxu0 %v3211
        %4136 = vmatprep.mubr.f32.mxu0 %v3839
        %4137 = vmatmul.mubr.f32.gmra.mxu0 %v3835
        %v4138 = vpop.f32.mrf.mxu0
        %v4139 = vadd.f32 %v3830, %v4138
        %v4140 = vpop.f32.mrf.mxu0
        %4141 = vdwg.mxu0
        %4142 = vmatprep.subr.mxu0 0.0
        %4143 = vmatpush1.msra.mxu0 %v3517
        %4144 = vmatprep.subr.mxu0 0.0
        %4145 = vmatpush1.msra.mxu0 %v3511
        %4146 = vmatprep.subr.mxu0 0.0
        %4147 = vmatpush1.msra.mxu0 %v3505
        %4148 = vmatprep.subr.mxu0 0.0
        %4149 = vmatpush1.msra.mxu0 %v3499
        %4150 = vmatprep.subr.mxu0 0.0
        %4151 = vmatpush1.msra.mxu0 %v3493
        %4152 = vmatprep.subr.mxu0 0.0
        %4153 = vmatpush1.msra.mxu0 %v3487
        %4154 = vmatprep.subr.mxu0 0.0
        %4155 = vmatpush1.msra.mxu0 %v3481
        %4156 = vmatprep.subr.mxu0 0.0
        %4157 = vmatpush1.msra.mxu0 %v3475
        %4158 = vmatprep.subr.mxu0 0.0
        %4159 = vmatpush1.msra.mxu0 %v3429
        %4160 = vmatprep.subr.mxu0 0.0
        %4161 = vmatpush1.msra.mxu0 %v3423
        %4162 = vmatprep.subr.mxu0 0.0
        %4163 = vmatpush1.msra.mxu0 %v3417
        %4164 = vmatprep.subr.mxu0 0.0
        %4165 = vmatpush1.msra.mxu0 %v3411
        %4166 = vmatprep.subr.mxu0 0.0
        %4167 = vmatpush1.msra.mxu0 %v3405
        %4168 = vmatprep.subr.mxu0 0.0
        %4169 = vmatpush1.msra.mxu0 %v3399
        %4170 = vmatprep.subr.mxu0 0.0
        %4171 = vmatpush1.msra.mxu0 %v3393
        %4172 = vmatprep.subr.mxu0 0.0
        %4173 = vmatpush1.msra.mxu0 %v3387
        %4174 = vmatprep.subr.mxu0 0.0
        %4175 = vmatpush2.msra.mxu0 %v3693
        %4176 = vmatprep.subr.mxu0 0.0
        %4177 = vmatpush2.msra.mxu0 %v3687
        %4178 = vmatprep.subr.mxu0 0.0
        %4179 = vmatpush2.msra.mxu0 %v3681
        %4180 = vmatprep.subr.mxu0 0.0
        %4181 = vmatpush2.msra.mxu0 %v3675
        %4182 = vmatprep.subr.mxu0 0.0
        %4183 = vmatpush2.msra.mxu0 %v3669
        %4184 = vmatprep.subr.mxu0 0.0
        %4185 = vmatpush2.msra.mxu0 %v3663
        %4186 = vmatprep.subr.mxu0 0.0
        %4187 = vmatpush2.msra.mxu0 %v3657
        %4188 = vmatprep.subr.mxu0 0.0
        %4189 = vmatpush2.msra.mxu0 %v3651
        %4190 = vmatprep.subr.mxu0 0.0
        %4191 = vmatpush2.msra.mxu0 %v3605
        %4192 = vmatprep.subr.mxu0 0.0
        %4193 = vmatpush2.msra.mxu0 %v3599
        %4194 = vmatprep.subr.mxu0 0.0
        %4195 = vmatpush2.msra.mxu0 %v3593
        %4196 = vmatprep.subr.mxu0 0.0
        %4197 = vmatpush2.msra.mxu0 %v3587
        %4198 = vmatprep.subr.mxu0 0.0
        %4199 = vmatpush2.msra.mxu0 %v3581
        %4200 = vmatprep.subr.mxu0 0.0
        %4201 = vmatpush2.msra.mxu0 %v3575
        %4202 = vmatprep.subr.mxu0 0.0
        %4203 = vmatpush2.msra.mxu0 %v3569
        %4204 = vmatprep.subr.mxu0 0.0
        %4205 = vmatpush2.msra.mxu0 %v3563
        %4206 = vmatprep.mubr.f32.mxu0 %v3847
        %4207 = vmatmul.mubr.f32.gmra.mxu0 %v3843
        %v4208 = vpop.f32.mrf.mxu0
        %v4209 = vadd.f32 %v4139, %v4208
        %v4210 = vpop.f32.mrf.mxu0
        %4211 = vdwg.mxu0
        %4212 = vmatprep.subr.mxu0 0.0
        %4213 = vmatpush1.msra.mxu0 0.0
        %4214 = vmatprep.subr.mxu0 0.0
        %4215 = vmatpush1.msra.mxu0 0.0
        %4216 = vmatprep.subr.mxu0 0.0
        %4217 = vmatpush1.msra.mxu0 0.0
        %4218 = vmatprep.subr.mxu0 0.0
        %4219 = vmatpush1.msra.mxu0 0.0
        %4220 = vmatprep.subr.mxu0 0.0
        %4221 = vmatpush1.msra.mxu0 0.0
        %4222 = vmatprep.subr.mxu0 0.0
        %4223 = vmatpush1.msra.mxu0 0.0
        %4224 = vmatprep.subr.mxu0 0.0
        %4225 = vmatpush1.msra.mxu0 0.0
        %4226 = vmatprep.subr.mxu0 0.0
        %4227 = vmatpush1.msra.mxu0 0.0
        %4228 = vmatprep.subr.mxu0 0.0
        %4229 = vmatpush1.msra.mxu0 %v3781
        %4230 = vmatprep.subr.mxu0 0.0
        %4231 = vmatpush1.msra.mxu0 %v3775
        %4232 = vmatprep.subr.mxu0 0.0
        %4233 = vmatpush1.msra.mxu0 %v3769
        %4234 = vmatprep.subr.mxu0 0.0
        %4235 = vmatpush1.msra.mxu0 %v3763
        %4236 = vmatprep.subr.mxu0 0.0
        %4237 = vmatpush1.msra.mxu0 %v3757
        %4238 = vmatprep.subr.mxu0 0.0
        %4239 = vmatpush1.msra.mxu0 %v3751
        %4240 = vmatprep.subr.mxu0 0.0
        %4241 = vmatpush1.msra.mxu0 %v3745
        %4242 = vmatprep.subr.mxu0 0.0
        %4243 = vmatpush1.msra.mxu0 %v3739
        %4244 = vmatprep.subr.mxu0 0.0
        %4245 = vmatpush2.msra.mxu0 0.0
        %4246 = vmatprep.subr.mxu0 0.0
        %4247 = vmatpush2.msra.mxu0 0.0
        %4248 = vmatprep.subr.mxu0 0.0
        %4249 = vmatpush2.msra.mxu0 0.0
        %4250 = vmatprep.subr.mxu0 0.0
        %4251 = vmatpush2.msra.mxu0 0.0
        %4252 = vmatprep.subr.mxu0 0.0
        %4253 = vmatpush2.msra.mxu0 0.0
        %4254 = vmatprep.subr.mxu0 0.0
        %4255 = vmatpush2.msra.mxu0 0.0
        %4256 = vmatprep.subr.mxu0 0.0
        %4257 = vmatpush2.msra.mxu0 0.0
        %4258 = vmatprep.subr.mxu0 0.0
        %4259 = vmatpush2.msra.mxu0 0.0
        %4260 = vmatprep.subr.mxu0 0.0
        %4261 = vmatpush2.msra.mxu0 0.0
        %4262 = vmatprep.subr.mxu0 0.0
        %4263 = vmatpush2.msra.mxu0 0.0
        %4264 = vmatprep.subr.mxu0 0.0
        %4265 = vmatpush2.msra.mxu0 0.0
        %4266 = vmatprep.subr.mxu0 0.0
        %4267 = vmatpush2.msra.mxu0 0.0
        %4268 = vmatprep.subr.mxu0 0.0
        %4269 = vmatpush2.msra.mxu0 0.0
        %4270 = vmatprep.subr.mxu0 0.0
        %4271 = vmatpush2.msra.mxu0 0.0
        %4272 = vmatprep.subr.mxu0 0.0
        %4273 = vmatpush2.msra.mxu0 0.0
        %4274 = vmatprep.subr.mxu0 0.0
        %4275 = vmatpush2.msra.mxu0 0.0
        %4276 = vmatprep.mubr.f32.mxu0 0.0
        %4277 = vmatmul.mubr.f32.gmra.mxu0 %v3857
        %v4278 = vpop.f32.mrf.mxu0
        %v4279 = vadd.f32 %v4209, %v4278
        %v4280 = vpop.f32.mrf.mxu0
        %4281 = vdwg.mxu0
        %v4282 = vmul.f32 %v4068, %v1122
        %v4283 = vmul.f32 %v4070, %v1126
        %v4284 = vmul.f32 %v4279, %v1130
        %v4288 = vcombine.low %v4282, %v4283
        %v4290 = vunpack.c.l.s4 1966171168
        %v4291 = vunpack.c.0.s8 %v4290
        %v4292 = vlaneseq
        %v4293 = vshrl.u32 %v4292, 7
        %v4294 = vsub.s32 %v4291, %v4293
        %v4295 = vrot.slane %v4288, %v4294
        %v4297 = vunpack.c.l.s4 1966171168
        %v4298 = vunpack.c.0.s8 %v4297
        %v4299 = vlaneseq
        %v4300 = vshrl.u32 %v4299, 7
        %v4301 = vsub.s32 %v4298, %v4300
        %v4302 = vrot.slane %v4284, %v4301
        %v4303 = vcombine.low %v4295, %v4302
        %v4305 = vunpack.c.l.s4 1966171168
        %v4306 = vunpack.c.0.s8 %v4305
        %v4307 = vlaneseq
        %v4308 = vshrl.u32 %v4307, 7
        %v4309 = vsub.s32 %v4306, %v4308
        %v4310 = vrot.slane %v4303, %v4309
        %v4312 = vlaneseq
        %vm4313 = vcmp.ge.s32.totalorder %v4312, 0
        %vm4314 = vcmp.lt.s32.totalorder %v4312, 324
        %vm4315 = vmand %vm4313, %vm4314
        %4316 = vst.msk [vmem:[%s448] sm:$0x7] %vm4315, %v4310
        %s4317 = sand.u32 %s297, 1
        %s4318 = scalar_lea.sflag [#allocation6], %s4317
        %s4319 = sand.u32 %s297, 1
        %s4320 = smul.addr %s4319, 3
        %s4321 = scalar_lea.vmem [#allocation9], %s4320
        // Predicated region
        $region77: #{tpu_custom_call.1} parent=67 // pred_check
          %p4322 = pneg %p307
        $region78: #{tpu_custom_call.1} parent=67 // pred_check_branch
          %4324 = sbr.rel (%p4322) target = $region80
        $region79: #{tpu_custom_call.1} parent=67 // pred_region
          %s4326 = ssub.s32 48, 48
          %4327 = vsyncadd %s4318, %s4326
          %s4328 = smul.addr %s32, 3
          %s4329 = smul.addr %s4328, 16
          %s4330 = scalar_lea.hbm %s12, %s4329
          %s4332 = sshll.u32 %s4321, 4
          %s4333 = int_to_ptr.vmem [resolvable:$true] %s4332
          %4335 = dma.vmem_to_hbm [thread:$0]  %s4333, 48, %s4330, %s4318
        $region80: #{tpu_custom_call.1} parent=67 // pred_fallthru
          _
      $region68: #{tpu_custom_call.1} parent=5 // pred_fallthru
        _
      %p4336 = scmp.le.s32.totalorder 2, %s27
      // Predicated region
      $region81: #{tpu_custom_call.1} parent=5 // pred_check
        %p4337 = pneg %p4336
      $region82: #{tpu_custom_call.1} parent=5 // pred_check_branch
        %4339 = sbr.rel (%p4337) target = $region84
      $region83: #{tpu_custom_call.1} parent=5 // pred_region
        %s4340 = ssub.s32 %s27, 2
        // Predicated region
        $region85: #{tpu_custom_call.1} parent=83 // pred_check
          %p4341 = pneg %p313
        $region86: #{tpu_custom_call.1} parent=83 // pred_check_branch
          %4343 = sbr.rel (%p4341) target = $region88
        $region87: #{tpu_custom_call.1} parent=83 // pred_region
          %s4344 = sand.u32 %s298, 1
          %s4345 = scalar_lea.sflag [#allocation6], %s4344
          %s4346 = sand.u32 %s298, 1
          %s4347 = smul.addr %s4346, 3
          %s4348 = scalar_lea.vmem [#allocation9], %s4347
          %4349 = dma.done %s4345, 48
        $region88: #{tpu_custom_call.1} parent=83 // pred_fallthru
          _
      $region84: #{tpu_custom_call.1} parent=5 // pred_fallthru
        _
    $region6: #{tpu_custom_call.1} parent=1 // loop_footer
      %s31 = sadd.s32 1, %s27
    $region7: #{tpu_custom_call.1} parent=1 // loop_footer_branch
      %26 = sbr.rel target = $region3
    $region8: #{tpu_custom_call.1} parent=1 // loop_exit
      _
    %4350 = vsyncpa [#allocation5], 1
    %s4351 = scalar_lea.sflag [#allocation5], 1
    %4352 = vsyncpa %s4351, 1
    %4353 = vsyncpa [#allocation8], 1
    %4354 = vsyncpa [#allocation6], 1
    %s4355 = scalar_lea.sflag [#allocation6], 1
    %4356 = vsyncpa %s4355, 1

</llo_original>
